<compile_context>
chip_gen: v7x
topology: tpu7x:2x2x1
jax: 0.10.0
libtpu: 0.0.40
codegen_flags: <defaults>
</compile_context>

<pallas_src>
import jax
import jax.numpy as jnp
from jax.experimental import pallas as pl
from jax.experimental.pallas import tpu as pltpu

LANES = 128  # pad channel / class axes to a full lane tile


# ----------------------------------------------------------------------------
# Host-side packing / input transform (runs once / fused into the jit prologue)
# ----------------------------------------------------------------------------
def build_p1(x_nchw, k):
    """im2col for conv1: rows ordered (dh, dw, ph, pw, n), cols (kh, kw, cin),
    so the fused kernel can 2x2-max-pool by taking the max of 4 row slabs."""
    N, C, H, W = x_nchw.shape
    OH, OW = H - k + 1, W - k + 1
    PH, PW = OH // 2, OW // 2
    cols = [x_nchw[:, :, kh:kh + OH, kw:kw + OW]
            for kh in range(k) for kw in range(k)]
    p = jnp.stack(cols, axis=0)                      # (k*k, N, C, OH, OW)
    p = p.reshape(k * k, N, C, PH, 2, PW, 2)         # oh=(ph,dh), ow=(pw,dw)
    p = jnp.transpose(p, (4, 6, 3, 5, 1, 0, 2))      # (dh, dw, ph, pw, n, g, c)
    return p.reshape(4 * PH * PW * N, k * k * C)


def pack_params(w1, cb1, bn1, w2, cb2, bn2, wl, bl, *, N, OH2, eps=1e-5):
    """Fold BN(eval) scale/shift + conv bias into weights/bias; fold the torch
    view(1,-1) flatten permutation into the Linear weight; pad to 128 lanes."""
    g1, be1, m1, v1 = bn1
    g2, be2, m2, v2 = bn2
    C1, Cin, K, _ = w1.shape
    C2 = w2.shape[0]
    NCLS = wl.shape[0]

    s1 = g1 / jnp.sqrt(v1 + eps)
    s2 = g2 / jnp.sqrt(v2 + eps)
    b1 = (cb1 - m1) * s1 + be1
    b2 = (cb2 - m2) * s2 + be2

    # conv1: rows (kh,kw,cin), cols = output channels padded to 128
    w1m = jnp.transpose(w1, (2, 3, 1, 0)).reshape(K * K * Cin, C1) * s1[None, :]
    w1p = jnp.zeros((K * K * Cin, LANES), jnp.float32).at[:, :C1].set(w1m)
    b1p = jnp.zeros((1, LANES), jnp.float32).at[0, :C1].set(b1)

    # conv2: (offset g, cin, cout padded)
    w2m = jnp.transpose(w2, (2, 3, 1, 0)).reshape(K * K, C1, C2) * s2[None, None, :]
    w2p = jnp.zeros((K * K, C1, LANES), jnp.float32).at[:, :, :C2].set(w2m)
    b2p = jnp.zeros((1, LANES), jnp.float32).at[0, :C2].set(b2)

    # Linear: kernel row r = (oh2, ow2, n); torch flat index = (n, c, oh2, ow2)
    wl5 = wl.reshape(NCLS, N, C2, OH2, OH2)          # [j, n, c, oh2, ow2]
    wlr = jnp.transpose(wl5, (3, 4, 1, 2, 0))        # [oh2, ow2, n, c, j]
    wlr = wlr.reshape(OH2 * OH2 * N, C2, NCLS)
    wlp = jnp.zeros((OH2 * OH2 * N, C2, LANES), jnp.float32).at[:, :, :NCLS].set(wlr)
    blp = jnp.zeros((1, LANES), jnp.float32).at[0, :NCLS].set(bl)
    return {"w1": w1p, "b1": b1p, "w2": w2p, "b2": b2p, "wl": wlp, "bl": blp}


# ----------------------------------------------------------------------------
# Fused Pallas kernel
# ----------------------------------------------------------------------------
def make_cnn_forward(N, Cin, H, W, C1, C2, K, NCLS):
    assert H == W, "square inputs (matches the reference configuration)"
    OH1 = H - K + 1                 # conv1 spatial (12)
    assert OH1 % 2 == 0
    PH = OH1 // 2                   # pooled spatial (6)
    OH2 = PH - K + 1                # conv2 spatial (2)
    MP = PH * PH * N                # pooled rows          (72)
    M1 = 4 * MP                     # conv1 / im2col rows  (288)
    M2 = OH2 * OH2 * N              # conv2 rows           (8)
    RB = OH2 * N                    # conv2 rows per oh2 block (4)
    KK = K * K

    def kernel(p1_ref, w1_ref, b1_ref, w2_ref, b2_ref, wl_ref, bl_ref,
               out_ref, pooled_s, y2_s):
        # ---- conv1 + folded BN + ReLU : one lane-dense MXU matmul ----------
        y1 = jnp.dot(p1_ref[...], w1_ref[...],
                     preferred_element_type=jnp.float32)
        y1 = jnp.maximum(y1 + b1_ref[...], 0.0)                  # (M1, 128)

        # ---- MaxPool2d(2): elementwise max of the 4 (dh, dw) row slabs -----
        pooled_s[...] = jnp.maximum(
            jnp.maximum(y1[0 * MP:1 * MP, :], y1[1 * MP:2 * MP, :]),
            jnp.maximum(y1[2 * MP:3 * MP, :], y1[3 * MP:4 * MP, :]))

        # Dropout: eval-mode identity.

        # ---- conv2 + folded BN + ReLU: K*K per-offset matmuls --------------
        for oh2 in range(OH2):
            acc = jnp.zeros((RB, LANES), jnp.float32)
            for kh in range(K):
                for kw in range(K):
                    base = (oh2 + kh) * (PH * N) + kw * N
                    lhs = pooled_s[base:base + RB, 0:C1]         # (RB, C1)
                    acc = acc + jnp.dot(lhs, w2_ref[kh * K + kw],
                                        preferred_element_type=jnp.float32)
            y2_s[oh2 * RB:(oh2 + 1) * RB, :] = jnp.maximum(acc + b2_ref[...], 0.0)

        # ---- Linear on torch's view(1,-1) flatten (folded into wl) ---------
        acc = bl_ref[...]                                        # (1, 128)
        for r in range(M2):
            acc = acc + jnp.dot(y2_s[r:r + 1, 0:C2], wl_ref[r],
                                preferred_element_type=jnp.float32)
        out_ref[...] = acc[:, 0:NCLS]

    def _full(shape):
        nd = len(shape)
        return pl.BlockSpec(shape, lambda i, nd=nd: (0,) * nd)

    def forward(x_nchw, params):
        p1 = build_p1(x_nchw, K)                                 # (M1, KK*Cin)
        return pl.pallas_call(
            kernel,
            out_shape=jax.ShapeDtypeStruct((1, NCLS), jnp.float32),
            grid=(1,),
            in_specs=[_full((M1, KK * Cin)),
                      _full((KK * Cin, LANES)),
                      _full((1, LANES)),
                      _full((KK, C1, LANES)),
                      _full((1, LANES)),
                      _full((M2, C2, LANES)),
                      _full((1, LANES))],
            out_specs=_full((1, NCLS)),
            scratch_shapes=[pltpu.VMEM((MP, LANES), jnp.float32),
                            pltpu.VMEM((M2, LANES), jnp.float32)],
            compiler_params=pltpu.CompilerParams(
                dimension_semantics=("arbitrary",)),
        )(p1, params["w1"], params["b1"], params["w2"], params["b2"],
          params["wl"], params["bl"])

    return forward


# ----------------------------------------------------------------------------
# Pure-JAX reference (for in-script correctness check)
# ----------------------------------------------------------------------------
def reference_forward(x, w1, cb1, bn1, w2, cb2, bn2, wl, bl, eps=1e-5):
    g1, be1, m1, v1 = bn1
    g2, be2, m2, v2 = bn2
    dn = ("NCHW", "OIHW", "NCHW")

    def bn(z, g, be, m, v):
        return (z - m[None, :, None, None]) / jnp.sqrt(v[None, :, None, None] + eps) \
            * g[None, :, None, None] + be[None, :, None, None]

    z1 = jax.lax.conv_general_dilated(x, w1, (1, 1), "VALID",
                                      dimension_numbers=dn) + cb1[None, :, None, None]
    a1 = jnp.maximum(bn(z1, g1, be1, m1, v1), 0.0)
    p = jax.lax.reduce_window(a1, -jnp.inf, jax.lax.max,
                              (1, 1, 2, 2), (1, 1, 2, 2), "VALID")
    z2 = jax.lax.conv_general_dilated(p, w2, (1, 1), "VALID",
                                      dimension_numbers=dn) + cb2[None, :, None, None]
    a2 = jnp.maximum(bn(z2, g2, be2, m2, v2), 0.0)
    flat = a2.reshape(1, -1)            # torch x.view(1, -1): batch folded in
    return flat @ wl.T + bl[None, :]


# ----------------------------------------------------------------------------
# Main
# ----------------------------------------------------------------------------
if __name__ == "__main__":
    key = jax.random.PRNGKey(0)
    k = jax.random.split(key, 7)

    N, Cin, H, W = 2, 3, 16, 16
    C1, C2, K, NCLS = 10, 20, 5, 10
    EPS = 1e-5

    OH1 = H - K + 1                    # 12
    PH = OH1 // 2                      # 6
    OH2 = PH - K + 1                   # 2
    FLAT = N * C2 * OH2 * OH2          # 160 (view(1,-1) folds the batch in)

    x = jax.random.normal(k[0], (N, Cin, H, W), jnp.float32)
    w1 = jax.random.normal(k[1], (C1, Cin, K, K), jnp.float32) * 0.1
    cb1 = jax.random.normal(k[2], (C1,), jnp.float32) * 0.1
    w2 = jax.random.normal(k[3], (C2, C1, K, K), jnp.float32) * 0.1
    cb2 = jax.random.normal(k[4], (C2,), jnp.float32) * 0.1
    # BatchNorm (eval) with fresh-init affine / running stats.
    bn1 = (jnp.ones(C1), jnp.zeros(C1), jnp.zeros(C1), jnp.ones(C1))
    bn2 = (jnp.ones(C2), jnp.zeros(C2), jnp.zeros(C2), jnp.ones(C2))
    # Fixed deterministic Linear weights (see TODO at top).
    wl = jax.random.normal(k[5], (NCLS, FLAT), jnp.float32) * 0.05
    bl = jax.random.normal(k[6], (NCLS,), jnp.float32) * 0.05

    params = pack_params(w1, cb1, bn1, w2, cb2, bn2, wl, bl, N=N, OH2=OH2, eps=EPS)
    fwd = jax.jit(make_cnn_forward(N, Cin, H, W, C1, C2, K, NCLS))

    out = jax.block_until_ready(fwd(x, params))
    assert out.shape == (1, NCLS) and out.dtype == jnp.float32

    ref = reference_forward(x, w1, cb1, bn1, w2, cb2, bn2, wl, bl, eps=EPS)
    err = float(jnp.max(jnp.abs(out - ref)))
    assert err < 5e-2, f"mismatch vs pure-JAX reference: {err}"
    print("KERNEL_OK")
</pallas_src>

<mosaic_0001>
module attributes {stable_mosaic.version = 11 : i64} {
  func.func @kernel(%arg0: i32, %arg1: memref<288x75xf32, #tpu.memory_space<vmem>>, %arg2: memref<75x128xf32, #tpu.memory_space<vmem>>, %arg3: memref<1x128xf32, #tpu.memory_space<vmem>>, %arg4: memref<25x10x128xf32, #tpu.memory_space<vmem>>, %arg5: memref<1x128xf32, #tpu.memory_space<vmem>>, %arg6: memref<8x20x128xf32, #tpu.memory_space<vmem>>, %arg7: memref<1x128xf32, #tpu.memory_space<vmem>>, %arg8: memref<1x10xf32, #tpu.memory_space<vmem>>, %arg9: memref<72x128xf32, #tpu.memory_space<vmem>>, %arg10: memref<8x128xf32, #tpu.memory_space<vmem>>) attributes {dimension_semantics = [#tpu.dimension_semantics<arbitrary>], iteration_bounds = array<i64: 1>, scalar_prefetch = 0 : i64, scratch_operands = 2 : i64, tpu.core_type = #tpu.core_type<tc>, window_params = [{pipeline_mode = #tpu.pipeline_mode<synchronous>, transform_indices = @transform_0, window_bounds = array<i64: 288, 75>}, {pipeline_mode = #tpu.pipeline_mode<synchronous>, transform_indices = @transform_1, window_bounds = array<i64: 75, 128>}, {pipeline_mode = #tpu.pipeline_mode<synchronous>, transform_indices = @transform_2, window_bounds = array<i64: 1, 128>}, {pipeline_mode = #tpu.pipeline_mode<synchronous>, transform_indices = @transform_3, window_bounds = array<i64: 25, 10, 128>}, {pipeline_mode = #tpu.pipeline_mode<synchronous>, transform_indices = @transform_4, window_bounds = array<i64: 1, 128>}, {pipeline_mode = #tpu.pipeline_mode<synchronous>, transform_indices = @transform_5, window_bounds = array<i64: 8, 20, 128>}, {pipeline_mode = #tpu.pipeline_mode<synchronous>, transform_indices = @transform_6, window_bounds = array<i64: 1, 128>}, {pipeline_mode = #tpu.pipeline_mode<synchronous>, transform_indices = @transform_7, window_bounds = array<i64: 1, 10>}]} {
    %c0 = arith.constant 0 : index
    %c0_0 = arith.constant 0 : index
    %0 = vector.load %arg1[%c0, %c0_0] : memref<288x75xf32, #tpu.memory_space<vmem>>, vector<288x75xf32>
    %c0_1 = arith.constant 0 : index
    %c0_2 = arith.constant 0 : index
    %1 = vector.load %arg2[%c0_1, %c0_2] : memref<75x128xf32, #tpu.memory_space<vmem>>, vector<75x128xf32>
    %cst = arith.constant dense<0.000000e+00> : vector<288x128xf32>
    %2 = tpu.matmul %0, %1, %cst {dimension_numbers = #tpu.dot_dimension_numbers<[1], [0], [0], [1], [0, 0, 1, 1], [], []>} : vector<288x75xf32>, vector<75x128xf32>, vector<288x128xf32> -> vector<288x128xf32>
    %c0_3 = arith.constant 0 : index
    %c0_4 = arith.constant 0 : index
    %3 = vector.load %arg3[%c0_3, %c0_4] : memref<1x128xf32, #tpu.memory_space<vmem>>, vector<1x128xf32>
    %4 = vector.broadcast %3 : vector<1x128xf32> to vector<288x128xf32>
    %5 = arith.addf %2, %4 : vector<288x128xf32>
    %cst_5 = arith.constant 0.000000e+00 : f32
    %6 = vector.broadcast %cst_5 : f32 to vector<288x128xf32>
    %7 = arith.maximumf %5, %6 : vector<288x128xf32>
    %8 = vector.extract_strided_slice %7 {offsets = [0, 0], sizes = [72, 128], strides = [1, 1]} : vector<288x128xf32> to vector<72x128xf32>
    %9 = vector.extract_strided_slice %7 {offsets = [72, 0], sizes = [72, 128], strides = [1, 1]} : vector<288x128xf32> to vector<72x128xf32>
    %10 = arith.maximumf %8, %9 : vector<72x128xf32>
    %11 = vector.extract_strided_slice %7 {offsets = [144, 0], sizes = [72, 128], strides = [1, 1]} : vector<288x128xf32> to vector<72x128xf32>
    %12 = vector.extract_strided_slice %7 {offsets = [216, 0], sizes = [72, 128], strides = [1, 1]} : vector<288x128xf32> to vector<72x128xf32>
    %13 = arith.maximumf %11, %12 : vector<72x128xf32>
    %14 = arith.maximumf %10, %13 : vector<72x128xf32>
    %c0_6 = arith.constant 0 : index
    %c0_7 = arith.constant 0 : index
    %15 = vector.load %arg9[%c0_6, %c0_7] : memref<72x128xf32, #tpu.memory_space<vmem>>, vector<72x128xf32>
    tpu.vector_store %arg9[%c0_6, %c0_7], %14 {strides = array<i32>} : memref<72x128xf32, #tpu.memory_space<vmem>>, vector<72x128xf32>,
    %cst_8 = arith.constant 0.000000e+00 : f32
    %16 = vector.broadcast %cst_8 : f32 to vector<4x128xf32>
    %c0_9 = arith.constant 0 : index
    %c0_10 = arith.constant 0 : index
    %17 = vector.load %arg9[%c0_9, %c0_10] : memref<72x128xf32, #tpu.memory_space<vmem>>, vector<4x10xf32>
    %c0_11 = arith.constant 0 : index
    %c0_12 = arith.constant 0 : index
    %c0_13 = arith.constant 0 : index
    %18 = vector.load %arg4[%c0_11, %c0_12, %c0_13] : memref<25x10x128xf32, #tpu.memory_space<vmem>>, vector<1x10x128xf32>
    %19 = vector.shape_cast %18 : vector<1x10x128xf32> to vector<10x128xf32>
    %cst_14 = arith.constant dense<0.000000e+00> : vector<4x128xf32>
    %20 = tpu.matmul %17, %19, %cst_14 {dimension_numbers = #tpu.dot_dimension_numbers<[1], [0], [0], [1], [0, 0, 1, 1], [], []>} : vector<4x10xf32>, vector<10x128xf32>, vector<4x128xf32> -> vector<4x128xf32>
    %21 = arith.addf %16, %20 : vector<4x128xf32>
    %c2 = arith.constant 2 : index
    %c0_15 = arith.constant 0 : index
    %22 = vector.load %arg9[%c2, %c0_15] : memref<72x128xf32, #tpu.memory_space<vmem>>, vector<4x10xf32>
    %c1 = arith.constant 1 : index
    %c0_16 = arith.constant 0 : index
    %c0_17 = arith.constant 0 : index
    %23 = vector.load %arg4[%c1, %c0_16, %c0_17] : memref<25x10x128xf32, #tpu.memory_space<vmem>>, vector<1x10x128xf32>
    %24 = vector.shape_cast %23 : vector<1x10x128xf32> to vector<10x128xf32>
    %cst_18 = arith.constant dense<0.000000e+00> : vector<4x128xf32>
    %25 = tpu.matmul %22, %24, %cst_18 {dimension_numbers = #tpu.dot_dimension_numbers<[1], [0], [0], [1], [0, 0, 1, 1], [], []>} : vector<4x10xf32>, vector<10x128xf32>, vector<4x128xf32> -> vector<4x128xf32>
    %26 = arith.addf %21, %25 : vector<4x128xf32>
    %c4 = arith.constant 4 : index
    %c0_19 = arith.constant 0 : index
    %27 = vector.load %arg9[%c4, %c0_19] : memref<72x128xf32, #tpu.memory_space<vmem>>, vector<4x10xf32>
    %c2_20 = arith.constant 2 : index
    %c0_21 = arith.constant 0 : index
    %c0_22 = arith.constant 0 : index
    %28 = vector.load %arg4[%c2_20, %c0_21, %c0_22] : memref<25x10x128xf32, #tpu.memory_space<vmem>>, vector<1x10x128xf32>
    %29 = vector.shape_cast %28 : vector<1x10x128xf32> to vector<10x128xf32>
    %cst_23 = arith.constant dense<0.000000e+00> : vector<4x128xf32>
    %30 = tpu.matmul %27, %29, %cst_23 {dimension_numbers = #tpu.dot_dimension_numbers<[1], [0], [0], [1], [0, 0, 1, 1], [], []>} : vector<4x10xf32>, vector<10x128xf32>, vector<4x128xf32> -> vector<4x128xf32>
    %31 = arith.addf %26, %30 : vector<4x128xf32>
    %c6 = arith.constant 6 : index
    %c0_24 = arith.constant 0 : index
    %32 = vector.load %arg9[%c6, %c0_24] : memref<72x128xf32, #tpu.memory_space<vmem>>, vector<4x10xf32>
    %c3 = arith.constant 3 : index
    %c0_25 = arith.constant 0 : index
    %c0_26 = arith.constant 0 : index
    %33 = vector.load %arg4[%c3, %c0_25, %c0_26] : memref<25x10x128xf32, #tpu.memory_space<vmem>>, vector<1x10x128xf32>
    %34 = vector.shape_cast %33 : vector<1x10x128xf32> to vector<10x128xf32>
    %cst_27 = arith.constant dense<0.000000e+00> : vector<4x128xf32>
    %35 = tpu.matmul %32, %34, %cst_27 {dimension_numbers = #tpu.dot_dimension_numbers<[1], [0], [0], [1], [0, 0, 1, 1], [], []>} : vector<4x10xf32>, vector<10x128xf32>, vector<4x128xf32> -> vector<4x128xf32>
    %36 = arith.addf %31, %35 : vector<4x128xf32>
    %c8 = arith.constant 8 : index
    %c0_28 = arith.constant 0 : index
    %37 = vector.load %arg9[%c8, %c0_28] : memref<72x128xf32, #tpu.memory_space<vmem>>, vector<4x10xf32>
    %c4_29 = arith.constant 4 : index
    %c0_30 = arith.constant 0 : index
    %c0_31 = arith.constant 0 : index
    %38 = vector.load %arg4[%c4_29, %c0_30, %c0_31] : memref<25x10x128xf32, #tpu.memory_space<vmem>>, vector<1x10x128xf32>
    %39 = vector.shape_cast %38 : vector<1x10x128xf32> to vector<10x128xf32>
    %cst_32 = arith.constant dense<0.000000e+00> : vector<4x128xf32>
    %40 = tpu.matmul %37, %39, %cst_32 {dimension_numbers = #tpu.dot_dimension_numbers<[1], [0], [0], [1], [0, 0, 1, 1], [], []>} : vector<4x10xf32>, vector<10x128xf32>, vector<4x128xf32> -> vector<4x128xf32>
    %41 = arith.addf %36, %40 : vector<4x128xf32>
    %c12 = arith.constant 12 : index
    %c0_33 = arith.constant 0 : index
    %42 = vector.load %arg9[%c12, %c0_33] : memref<72x128xf32, #tpu.memory_space<vmem>>, vector<4x10xf32>
    %c5 = arith.constant 5 : index
    %c0_34 = arith.constant 0 : index
    %c0_35 = arith.constant 0 : index
    %43 = vector.load %arg4[%c5, %c0_34, %c0_35] : memref<25x10x128xf32, #tpu.memory_space<vmem>>, vector<1x10x128xf32>
    %44 = vector.shape_cast %43 : vector<1x10x128xf32> to vector<10x128xf32>
    %cst_36 = arith.constant dense<0.000000e+00> : vector<4x128xf32>
    %45 = tpu.matmul %42, %44, %cst_36 {dimension_numbers = #tpu.dot_dimension_numbers<[1], [0], [0], [1], [0, 0, 1, 1], [], []>} : vector<4x10xf32>, vector<10x128xf32>, vector<4x128xf32> -> vector<4x128xf32>
    %46 = arith.addf %41, %45 : vector<4x128xf32>
    %c14 = arith.constant 14 : index
    %c0_37 = arith.constant 0 : index
    %47 = vector.load %arg9[%c14, %c0_37] : memref<72x128xf32, #tpu.memory_space<vmem>>, vector<4x10xf32>
    %c6_38 = arith.constant 6 : index
    %c0_39 = arith.constant 0 : index
    %c0_40 = arith.constant 0 : index
    %48 = vector.load %arg4[%c6_38, %c0_39, %c0_40] : memref<25x10x128xf32, #tpu.memory_space<vmem>>, vector<1x10x128xf32>
    %49 = vector.shape_cast %48 : vector<1x10x128xf32> to vector<10x128xf32>
    %cst_41 = arith.constant dense<0.000000e+00> : vector<4x128xf32>
    %50 = tpu.matmul %47, %49, %cst_41 {dimension_numbers = #tpu.dot_dimension_numbers<[1], [0], [0], [1], [0, 0, 1, 1], [], []>} : vector<4x10xf32>, vector<10x128xf32>, vector<4x128xf32> -> vector<4x128xf32>
    %51 = arith.addf %46, %50 : vector<4x128xf32>
    %c16 = arith.constant 16 : index
    %c0_42 = arith.constant 0 : index
    %52 = vector.load %arg9[%c16, %c0_42] : memref<72x128xf32, #tpu.memory_space<vmem>>, vector<4x10xf32>
    %c7 = arith.constant 7 : index
    %c0_43 = arith.constant 0 : index
    %c0_44 = arith.constant 0 : index
    %53 = vector.load %arg4[%c7, %c0_43, %c0_44] : memref<25x10x128xf32, #tpu.memory_space<vmem>>, vector<1x10x128xf32>
    %54 = vector.shape_cast %53 : vector<1x10x128xf32> to vector<10x128xf32>
    %cst_45 = arith.constant dense<0.000000e+00> : vector<4x128xf32>
    %55 = tpu.matmul %52, %54, %cst_45 {dimension_numbers = #tpu.dot_dimension_numbers<[1], [0], [0], [1], [0, 0, 1, 1], [], []>} : vector<4x10xf32>, vector<10x128xf32>, vector<4x128xf32> -> vector<4x128xf32>
    %56 = arith.addf %51, %55 : vector<4x128xf32>
    %c18 = arith.constant 18 : index
    %c0_46 = arith.constant 0 : index
    %57 = vector.load %arg9[%c18, %c0_46] : memref<72x128xf32, #tpu.memory_space<vmem>>, vector<4x10xf32>
    %c8_47 = arith.constant 8 : index
    %c0_48 = arith.constant 0 : index
    %c0_49 = arith.constant 0 : index
    %58 = vector.load %arg4[%c8_47, %c0_48, %c0_49] : memref<25x10x128xf32, #tpu.memory_space<vmem>>, vector<1x10x128xf32>
    %59 = vector.shape_cast %58 : vector<1x10x128xf32> to vector<10x128xf32>
    %cst_50 = arith.constant dense<0.000000e+00> : vector<4x128xf32>
    %60 = tpu.matmul %57, %59, %cst_50 {dimension_numbers = #tpu.dot_dimension_numbers<[1], [0], [0], [1], [0, 0, 1, 1], [], []>} : vector<4x10xf32>, vector<10x128xf32>, vector<4x128xf32> -> vector<4x128xf32>
    %61 = arith.addf %56, %60 : vector<4x128xf32>
    %c20 = arith.constant 20 : index
    %c0_51 = arith.constant 0 : index
    %62 = vector.load %arg9[%c20, %c0_51] : memref<72x128xf32, #tpu.memory_space<vmem>>, vector<4x10xf32>
    %c9 = arith.constant 9 : index
    %c0_52 = arith.constant 0 : index
    %c0_53 = arith.constant 0 : index
    %63 = vector.load %arg4[%c9, %c0_52, %c0_53] : memref<25x10x128xf32, #tpu.memory_space<vmem>>, vector<1x10x128xf32>
    %64 = vector.shape_cast %63 : vector<1x10x128xf32> to vector<10x128xf32>
    %cst_54 = arith.constant dense<0.000000e+00> : vector<4x128xf32>
    %65 = tpu.matmul %62, %64, %cst_54 {dimension_numbers = #tpu.dot_dimension_numbers<[1], [0], [0], [1], [0, 0, 1, 1], [], []>} : vector<4x10xf32>, vector<10x128xf32>, vector<4x128xf32> -> vector<4x128xf32>
    %66 = arith.addf %61, %65 : vector<4x128xf32>
    %c24 = arith.constant 24 : index
    %c0_55 = arith.constant 0 : index
    %67 = vector.load %arg9[%c24, %c0_55] : memref<72x128xf32, #tpu.memory_space<vmem>>, vector<4x10xf32>
    %c10 = arith.constant 10 : index
    %c0_56 = arith.constant 0 : index
    %c0_57 = arith.constant 0 : index
    %68 = vector.load %arg4[%c10, %c0_56, %c0_57] : memref<25x10x128xf32, #tpu.memory_space<vmem>>, vector<1x10x128xf32>
    %69 = vector.shape_cast %68 : vector<1x10x128xf32> to vector<10x128xf32>
    %cst_58 = arith.constant dense<0.000000e+00> : vector<4x128xf32>
    %70 = tpu.matmul %67, %69, %cst_58 {dimension_numbers = #tpu.dot_dimension_numbers<[1], [0], [0], [1], [0, 0, 1, 1], [], []>} : vector<4x10xf32>, vector<10x128xf32>, vector<4x128xf32> -> vector<4x128xf32>
    %71 = arith.addf %66, %70 : vector<4x128xf32>
    %c26 = arith.constant 26 : index
    %c0_59 = arith.constant 0 : index
    %72 = vector.load %arg9[%c26, %c0_59] : memref<72x128xf32, #tpu.memory_space<vmem>>, vector<4x10xf32>
    %c11 = arith.constant 11 : index
    %c0_60 = arith.constant 0 : index
    %c0_61 = arith.constant 0 : index
    %73 = vector.load %arg4[%c11, %c0_60, %c0_61] : memref<25x10x128xf32, #tpu.memory_space<vmem>>, vector<1x10x128xf32>
    %74 = vector.shape_cast %73 : vector<1x10x128xf32> to vector<10x128xf32>
    %cst_62 = arith.constant dense<0.000000e+00> : vector<4x128xf32>
    %75 = tpu.matmul %72, %74, %cst_62 {dimension_numbers = #tpu.dot_dimension_numbers<[1], [0], [0], [1], [0, 0, 1, 1], [], []>} : vector<4x10xf32>, vector<10x128xf32>, vector<4x128xf32> -> vector<4x128xf32>
    %76 = arith.addf %71, %75 : vector<4x128xf32>
    %c28 = arith.constant 28 : index
    %c0_63 = arith.constant 0 : index
    %77 = vector.load %arg9[%c28, %c0_63] : memref<72x128xf32, #tpu.memory_space<vmem>>, vector<4x10xf32>
    %c12_64 = arith.constant 12 : index
    %c0_65 = arith.constant 0 : index
    %c0_66 = arith.constant 0 : index
    %78 = vector.load %arg4[%c12_64, %c0_65, %c0_66] : memref<25x10x128xf32, #tpu.memory_space<vmem>>, vector<1x10x128xf32>
    %79 = vector.shape_cast %78 : vector<1x10x128xf32> to vector<10x128xf32>
    %cst_67 = arith.constant dense<0.000000e+00> : vector<4x128xf32>
    %80 = tpu.matmul %77, %79, %cst_67 {dimension_numbers = #tpu.dot_dimension_numbers<[1], [0], [0], [1], [0, 0, 1, 1], [], []>} : vector<4x10xf32>, vector<10x128xf32>, vector<4x128xf32> -> vector<4x128xf32>
    %81 = arith.addf %76, %80 : vector<4x128xf32>
    %c30 = arith.constant 30 : index
    %c0_68 = arith.constant 0 : index
    %82 = vector.load %arg9[%c30, %c0_68] : memref<72x128xf32, #tpu.memory_space<vmem>>, vector<4x10xf32>
    %c13 = arith.constant 13 : index
    %c0_69 = arith.constant 0 : index
    %c0_70 = arith.constant 0 : index
    %83 = vector.load %arg4[%c13, %c0_69, %c0_70] : memref<25x10x128xf32, #tpu.memory_space<vmem>>, vector<1x10x128xf32>
    %84 = vector.shape_cast %83 : vector<1x10x128xf32> to vector<10x128xf32>
    %cst_71 = arith.constant dense<0.000000e+00> : vector<4x128xf32>
    %85 = tpu.matmul %82, %84, %cst_71 {dimension_numbers = #tpu.dot_dimension_numbers<[1], [0], [0], [1], [0, 0, 1, 1], [], []>} : vector<4x10xf32>, vector<10x128xf32>, vector<4x128xf32> -> vector<4x128xf32>
    %86 = arith.addf %81, %85 : vector<4x128xf32>
    %c32 = arith.constant 32 : index
    %c0_72 = arith.constant 0 : index
    %87 = vector.load %arg9[%c32, %c0_72] : memref<72x128xf32, #tpu.memory_space<vmem>>, vector<4x10xf32>
    %c14_73 = arith.constant 14 : index
    %c0_74 = arith.constant 0 : index
    %c0_75 = arith.constant 0 : index
    %88 = vector.load %arg4[%c14_73, %c0_74, %c0_75] : memref<25x10x128xf32, #tpu.memory_space<vmem>>, vector<1x10x128xf32>
    %89 = vector.shape_cast %88 : vector<1x10x128xf32> to vector<10x128xf32>
    %cst_76 = arith.constant dense<0.000000e+00> : vector<4x128xf32>
    %90 = tpu.matmul %87, %89, %cst_76 {dimension_numbers = #tpu.dot_dimension_numbers<[1], [0], [0], [1], [0, 0, 1, 1], [], []>} : vector<4x10xf32>, vector<10x128xf32>, vector<4x128xf32> -> vector<4x128xf32>
    %91 = arith.addf %86, %90 : vector<4x128xf32>
    %c36 = arith.constant 36 : index
    %c0_77 = arith.constant 0 : index
    %92 = vector.load %arg9[%c36, %c0_77] : memref<72x128xf32, #tpu.memory_space<vmem>>, vector<4x10xf32>
    %c15 = arith.constant 15 : index
    %c0_78 = arith.constant 0 : index
    %c0_79 = arith.constant 0 : index
    %93 = vector.load %arg4[%c15, %c0_78, %c0_79] : memref<25x10x128xf32, #tpu.memory_space<vmem>>, vector<1x10x128xf32>
    %94 = vector.shape_cast %93 : vector<1x10x128xf32> to vector<10x128xf32>
    %cst_80 = arith.constant dense<0.000000e+00> : vector<4x128xf32>
    %95 = tpu.matmul %92, %94, %cst_80 {dimension_numbers = #tpu.dot_dimension_numbers<[1], [0], [0], [1], [0, 0, 1, 1], [], []>} : vector<4x10xf32>, vector<10x128xf32>, vector<4x128xf32> -> vector<4x128xf32>
    %96 = arith.addf %91, %95 : vector<4x128xf32>
    %c38 = arith.constant 38 : index
    %c0_81 = arith.constant 0 : index
    %97 = vector.load %arg9[%c38, %c0_81] : memref<72x128xf32, #tpu.memory_space<vmem>>, vector<4x10xf32>
    %c16_82 = arith.constant 16 : index
    %c0_83 = arith.constant 0 : index
    %c0_84 = arith.constant 0 : index
    %98 = vector.load %arg4[%c16_82, %c0_83, %c0_84] : memref<25x10x128xf32, #tpu.memory_space<vmem>>, vector<1x10x128xf32>
    %99 = vector.shape_cast %98 : vector<1x10x128xf32> to vector<10x128xf32>
    %cst_85 = arith.constant dense<0.000000e+00> : vector<4x128xf32>
    %100 = tpu.matmul %97, %99, %cst_85 {dimension_numbers = #tpu.dot_dimension_numbers<[1], [0], [0], [1], [0, 0, 1, 1], [], []>} : vector<4x10xf32>, vector<10x128xf32>, vector<4x128xf32> -> vector<4x128xf32>
    %101 = arith.addf %96, %100 : vector<4x128xf32>
    %c40 = arith.constant 40 : index
    %c0_86 = arith.constant 0 : index
    %102 = vector.load %arg9[%c40, %c0_86] : memref<72x128xf32, #tpu.memory_space<vmem>>, vector<4x10xf32>
    %c17 = arith.constant 17 : index
    %c0_87 = arith.constant 0 : index
    %c0_88 = arith.constant 0 : index
    %103 = vector.load %arg4[%c17, %c0_87, %c0_88] : memref<25x10x128xf32, #tpu.memory_space<vmem>>, vector<1x10x128xf32>
    %104 = vector.shape_cast %103 : vector<1x10x128xf32> to vector<10x128xf32>
    %cst_89 = arith.constant dense<0.000000e+00> : vector<4x128xf32>
    %105 = tpu.matmul %102, %104, %cst_89 {dimension_numbers = #tpu.dot_dimension_numbers<[1], [0], [0], [1], [0, 0, 1, 1], [], []>} : vector<4x10xf32>, vector<10x128xf32>, vector<4x128xf32> -> vector<4x128xf32>
    %106 = arith.addf %101, %105 : vector<4x128xf32>
    %c42 = arith.constant 42 : index
    %c0_90 = arith.constant 0 : index
    %107 = vector.load %arg9[%c42, %c0_90] : memref<72x128xf32, #tpu.memory_space<vmem>>, vector<4x10xf32>
    %c18_91 = arith.constant 18 : index
    %c0_92 = arith.constant 0 : index
    %c0_93 = arith.constant 0 : index
    %108 = vector.load %arg4[%c18_91, %c0_92, %c0_93] : memref<25x10x128xf32, #tpu.memory_space<vmem>>, vector<1x10x128xf32>
    %109 = vector.shape_cast %108 : vector<1x10x128xf32> to vector<10x128xf32>
    %cst_94 = arith.constant dense<0.000000e+00> : vector<4x128xf32>
    %110 = tpu.matmul %107, %109, %cst_94 {dimension_numbers = #tpu.dot_dimension_numbers<[1], [0], [0], [1], [0, 0, 1, 1], [], []>} : vector<4x10xf32>, vector<10x128xf32>, vector<4x128xf32> -> vector<4x128xf32>
    %111 = arith.addf %106, %110 : vector<4x128xf32>
    %c44 = arith.constant 44 : index
    %c0_95 = arith.constant 0 : index
    %112 = vector.load %arg9[%c44, %c0_95] : memref<72x128xf32, #tpu.memory_space<vmem>>, vector<4x10xf32>
    %c19 = arith.constant 19 : index
    %c0_96 = arith.constant 0 : index
    %c0_97 = arith.constant 0 : index
    %113 = vector.load %arg4[%c19, %c0_96, %c0_97] : memref<25x10x128xf32, #tpu.memory_space<vmem>>, vector<1x10x128xf32>
    %114 = vector.shape_cast %113 : vector<1x10x128xf32> to vector<10x128xf32>
    %cst_98 = arith.constant dense<0.000000e+00> : vector<4x128xf32>
    %115 = tpu.matmul %112, %114, %cst_98 {dimension_numbers = #tpu.dot_dimension_numbers<[1], [0], [0], [1], [0, 0, 1, 1], [], []>} : vector<4x10xf32>, vector<10x128xf32>, vector<4x128xf32> -> vector<4x128xf32>
    %116 = arith.addf %111, %115 : vector<4x128xf32>
    %c48 = arith.constant 48 : index
    %c0_99 = arith.constant 0 : index
    %117 = vector.load %arg9[%c48, %c0_99] : memref<72x128xf32, #tpu.memory_space<vmem>>, vector<4x10xf32>
    %c20_100 = arith.constant 20 : index
    %c0_101 = arith.constant 0 : index
    %c0_102 = arith.constant 0 : index
    %118 = vector.load %arg4[%c20_100, %c0_101, %c0_102] : memref<25x10x128xf32, #tpu.memory_space<vmem>>, vector<1x10x128xf32>
    %119 = vector.shape_cast %118 : vector<1x10x128xf32> to vector<10x128xf32>
    %cst_103 = arith.constant dense<0.000000e+00> : vector<4x128xf32>
    %120 = tpu.matmul %117, %119, %cst_103 {dimension_numbers = #tpu.dot_dimension_numbers<[1], [0], [0], [1], [0, 0, 1, 1], [], []>} : vector<4x10xf32>, vector<10x128xf32>, vector<4x128xf32> -> vector<4x128xf32>
    %121 = arith.addf %116, %120 : vector<4x128xf32>
    %c50 = arith.constant 50 : index
    %c0_104 = arith.constant 0 : index
    %122 = vector.load %arg9[%c50, %c0_104] : memref<72x128xf32, #tpu.memory_space<vmem>>, vector<4x10xf32>
    %c21 = arith.constant 21 : index
    %c0_105 = arith.constant 0 : index
    %c0_106 = arith.constant 0 : index
    %123 = vector.load %arg4[%c21, %c0_105, %c0_106] : memref<25x10x128xf32, #tpu.memory_space<vmem>>, vector<1x10x128xf32>
    %124 = vector.shape_cast %123 : vector<1x10x128xf32> to vector<10x128xf32>
    %cst_107 = arith.constant dense<0.000000e+00> : vector<4x128xf32>
    %125 = tpu.matmul %122, %124, %cst_107 {dimension_numbers = #tpu.dot_dimension_numbers<[1], [0], [0], [1], [0, 0, 1, 1], [], []>} : vector<4x10xf32>, vector<10x128xf32>, vector<4x128xf32> -> vector<4x128xf32>
    %126 = arith.addf %121, %125 : vector<4x128xf32>
    %c52 = arith.constant 52 : index
    %c0_108 = arith.constant 0 : index
    %127 = vector.load %arg9[%c52, %c0_108] : memref<72x128xf32, #tpu.memory_space<vmem>>, vector<4x10xf32>
    %c22 = arith.constant 22 : index
    %c0_109 = arith.constant 0 : index
    %c0_110 = arith.constant 0 : index
    %128 = vector.load %arg4[%c22, %c0_109, %c0_110] : memref<25x10x128xf32, #tpu.memory_space<vmem>>, vector<1x10x128xf32>
    %129 = vector.shape_cast %128 : vector<1x10x128xf32> to vector<10x128xf32>
    %cst_111 = arith.constant dense<0.000000e+00> : vector<4x128xf32>
    %130 = tpu.matmul %127, %129, %cst_111 {dimension_numbers = #tpu.dot_dimension_numbers<[1], [0], [0], [1], [0, 0, 1, 1], [], []>} : vector<4x10xf32>, vector<10x128xf32>, vector<4x128xf32> -> vector<4x128xf32>
    %131 = arith.addf %126, %130 : vector<4x128xf32>
    %c54 = arith.constant 54 : index
    %c0_112 = arith.constant 0 : index
    %132 = vector.load %arg9[%c54, %c0_112] : memref<72x128xf32, #tpu.memory_space<vmem>>, vector<4x10xf32>
    %c23 = arith.constant 23 : index
    %c0_113 = arith.constant 0 : index
    %c0_114 = arith.constant 0 : index
    %133 = vector.load %arg4[%c23, %c0_113, %c0_114] : memref<25x10x128xf32, #tpu.memory_space<vmem>>, vector<1x10x128xf32>
    %134 = vector.shape_cast %133 : vector<1x10x128xf32> to vector<10x128xf32>
    %cst_115 = arith.constant dense<0.000000e+00> : vector<4x128xf32>
    %135 = tpu.matmul %132, %134, %cst_115 {dimension_numbers = #tpu.dot_dimension_numbers<[1], [0], [0], [1], [0, 0, 1, 1], [], []>} : vector<4x10xf32>, vector<10x128xf32>, vector<4x128xf32> -> vector<4x128xf32>
    %136 = arith.addf %131, %135 : vector<4x128xf32>
    %c56 = arith.constant 56 : index
    %c0_116 = arith.constant 0 : index
    %137 = vector.load %arg9[%c56, %c0_116] : memref<72x128xf32, #tpu.memory_space<vmem>>, vector<4x10xf32>
    %c24_117 = arith.constant 24 : index
    %c0_118 = arith.constant 0 : index
    %c0_119 = arith.constant 0 : index
    %138 = vector.load %arg4[%c24_117, %c0_118, %c0_119] : memref<25x10x128xf32, #tpu.memory_space<vmem>>, vector<1x10x128xf32>
    %139 = vector.shape_cast %138 : vector<1x10x128xf32> to vector<10x128xf32>
    %cst_120 = arith.constant dense<0.000000e+00> : vector<4x128xf32>
    %140 = tpu.matmul %137, %139, %cst_120 {dimension_numbers = #tpu.dot_dimension_numbers<[1], [0], [0], [1], [0, 0, 1, 1], [], []>} : vector<4x10xf32>, vector<10x128xf32>, vector<4x128xf32> -> vector<4x128xf32>
    %141 = arith.addf %136, %140 : vector<4x128xf32>
    %c0_121 = arith.constant 0 : index
    %c0_122 = arith.constant 0 : index
    %142 = vector.load %arg5[%c0_121, %c0_122] : memref<1x128xf32, #tpu.memory_space<vmem>>, vector<1x128xf32>
    %143 = vector.broadcast %142 : vector<1x128xf32> to vector<4x128xf32>
    %144 = arith.addf %141, %143 : vector<4x128xf32>
    %cst_123 = arith.constant 0.000000e+00 : f32
    %145 = vector.broadcast %cst_123 : f32 to vector<4x128xf32>
    %146 = arith.maximumf %144, %145 : vector<4x128xf32>
    %c0_124 = arith.constant 0 : index
    %c0_125 = arith.constant 0 : index
    %147 = vector.load %arg10[%c0_124, %c0_125] : memref<8x128xf32, #tpu.memory_space<vmem>>, vector<4x128xf32>
    tpu.vector_store %arg10[%c0_124, %c0_125], %146 {strides = array<i32>} : memref<8x128xf32, #tpu.memory_space<vmem>>, vector<4x128xf32>,
    %cst_126 = arith.constant 0.000000e+00 : f32
    %148 = vector.broadcast %cst_126 : f32 to vector<4x128xf32>
    %c12_127 = arith.constant 12 : index
    %c0_128 = arith.constant 0 : index
    %149 = vector.load %arg9[%c12_127, %c0_128] : memref<72x128xf32, #tpu.memory_space<vmem>>, vector<4x10xf32>
    %c0_129 = arith.constant 0 : index
    %c0_130 = arith.constant 0 : index
    %c0_131 = arith.constant 0 : index
    %150 = vector.load %arg4[%c0_129, %c0_130, %c0_131] : memref<25x10x128xf32, #tpu.memory_space<vmem>>, vector<1x10x128xf32>
    %151 = vector.shape_cast %150 : vector<1x10x128xf32> to vector<10x128xf32>
    %cst_132 = arith.constant dense<0.000000e+00> : vector<4x128xf32>
    %152 = tpu.matmul %149, %151, %cst_132 {dimension_numbers = #tpu.dot_dimension_numbers<[1], [0], [0], [1], [0, 0, 1, 1], [], []>} : vector<4x10xf32>, vector<10x128xf32>, vector<4x128xf32> -> vector<4x128xf32>
    %153 = arith.addf %148, %152 : vector<4x128xf32>
    %c14_133 = arith.constant 14 : index
    %c0_134 = arith.constant 0 : index
    %154 = vector.load %arg9[%c14_133, %c0_134] : memref<72x128xf32, #tpu.memory_space<vmem>>, vector<4x10xf32>
    %c1_135 = arith.constant 1 : index
    %c0_136 = arith.constant 0 : index
    %c0_137 = arith.constant 0 : index
    %155 = vector.load %arg4[%c1_135, %c0_136, %c0_137] : memref<25x10x128xf32, #tpu.memory_space<vmem>>, vector<1x10x128xf32>
    %156 = vector.shape_cast %155 : vector<1x10x128xf32> to vector<10x128xf32>
    %cst_138 = arith.constant dense<0.000000e+00> : vector<4x128xf32>
    %157 = tpu.matmul %154, %156, %cst_138 {dimension_numbers = #tpu.dot_dimension_numbers<[1], [0], [0], [1], [0, 0, 1, 1], [], []>} : vector<4x10xf32>, vector<10x128xf32>, vector<4x128xf32> -> vector<4x128xf32>
    %158 = arith.addf %153, %157 : vector<4x128xf32>
    %c16_139 = arith.constant 16 : index
    %c0_140 = arith.constant 0 : index
    %159 = vector.load %arg9[%c16_139, %c0_140] : memref<72x128xf32, #tpu.memory_space<vmem>>, vector<4x10xf32>
    %c2_141 = arith.constant 2 : index
    %c0_142 = arith.constant 0 : index
    %c0_143 = arith.constant 0 : index
    %160 = vector.load %arg4[%c2_141, %c0_142, %c0_143] : memref<25x10x128xf32, #tpu.memory_space<vmem>>, vector<1x10x128xf32>
    %161 = vector.shape_cast %160 : vector<1x10x128xf32> to vector<10x128xf32>
    %cst_144 = arith.constant dense<0.000000e+00> : vector<4x128xf32>
    %162 = tpu.matmul %159, %161, %cst_144 {dimension_numbers = #tpu.dot_dimension_numbers<[1], [0], [0], [1], [0, 0, 1, 1], [], []>} : vector<4x10xf32>, vector<10x128xf32>, vector<4x128xf32> -> vector<4x128xf32>
    %163 = arith.addf %158, %162 : vector<4x128xf32>
    %c18_145 = arith.constant 18 : index
    %c0_146 = arith.constant 0 : index
    %164 = vector.load %arg9[%c18_145, %c0_146] : memref<72x128xf32, #tpu.memory_space<vmem>>, vector<4x10xf32>
    %c3_147 = arith.constant 3 : index
    %c0_148 = arith.constant 0 : index
    %c0_149 = arith.constant 0 : index
    %165 = vector.load %arg4[%c3_147, %c0_148, %c0_149] : memref<25x10x128xf32, #tpu.memory_space<vmem>>, vector<1x10x128xf32>
    %166 = vector.shape_cast %165 : vector<1x10x128xf32> to vector<10x128xf32>
    %cst_150 = arith.constant dense<0.000000e+00> : vector<4x128xf32>
    %167 = tpu.matmul %164, %166, %cst_150 {dimension_numbers = #tpu.dot_dimension_numbers<[1], [0], [0], [1], [0, 0, 1, 1], [], []>} : vector<4x10xf32>, vector<10x128xf32>, vector<4x128xf32> -> vector<4x128xf32>
    %168 = arith.addf %163, %167 : vector<4x128xf32>
    %c20_151 = arith.constant 20 : index
    %c0_152 = arith.constant 0 : index
    %169 = vector.load %arg9[%c20_151, %c0_152] : memref<72x128xf32, #tpu.memory_space<vmem>>, vector<4x10xf32>
    %c4_153 = arith.constant 4 : index
    %c0_154 = arith.constant 0 : index
    %c0_155 = arith.constant 0 : index
    %170 = vector.load %arg4[%c4_153, %c0_154, %c0_155] : memref<25x10x128xf32, #tpu.memory_space<vmem>>, vector<1x10x128xf32>
    %171 = vector.shape_cast %170 : vector<1x10x128xf32> to vector<10x128xf32>
    %cst_156 = arith.constant dense<0.000000e+00> : vector<4x128xf32>
    %172 = tpu.matmul %169, %171, %cst_156 {dimension_numbers = #tpu.dot_dimension_numbers<[1], [0], [0], [1], [0, 0, 1, 1], [], []>} : vector<4x10xf32>, vector<10x128xf32>, vector<4x128xf32> -> vector<4x128xf32>
    %173 = arith.addf %168, %172 : vector<4x128xf32>
    %c24_157 = arith.constant 24 : index
    %c0_158 = arith.constant 0 : index
    %174 = vector.load %arg9[%c24_157, %c0_158] : memref<72x128xf32, #tpu.memory_space<vmem>>, vector<4x10xf32>
    %c5_159 = arith.constant 5 : index
    %c0_160 = arith.constant 0 : index
    %c0_161 = arith.constant 0 : index
    %175 = vector.load %arg4[%c5_159, %c0_160, %c0_161] : memref<25x10x128xf32, #tpu.memory_space<vmem>>, vector<1x10x128xf32>
    %176 = vector.shape_cast %175 : vector<1x10x128xf32> to vector<10x128xf32>
    %cst_162 = arith.constant dense<0.000000e+00> : vector<4x128xf32>
    %177 = tpu.matmul %174, %176, %cst_162 {dimension_numbers = #tpu.dot_dimension_numbers<[1], [0], [0], [1], [0, 0, 1, 1], [], []>} : vector<4x10xf32>, vector<10x128xf32>, vector<4x128xf32> -> vector<4x128xf32>
    %178 = arith.addf %173, %177 : vector<4x128xf32>
    %c26_163 = arith.constant 26 : index
    %c0_164 = arith.constant 0 : index
    %179 = vector.load %arg9[%c26_163, %c0_164] : memref<72x128xf32, #tpu.memory_space<vmem>>, vector<4x10xf32>
    %c6_165 = arith.constant 6 : index
    %c0_166 = arith.constant 0 : index
    %c0_167 = arith.constant 0 : index
    %180 = vector.load %arg4[%c6_165, %c0_166, %c0_167] : memref<25x10x128xf32, #tpu.memory_space<vmem>>, vector<1x10x128xf32>
    %181 = vector.shape_cast %180 : vector<1x10x128xf32> to vector<10x128xf32>
    %cst_168 = arith.constant dense<0.000000e+00> : vector<4x128xf32>
    %182 = tpu.matmul %179, %181, %cst_168 {dimension_numbers = #tpu.dot_dimension_numbers<[1], [0], [0], [1], [0, 0, 1, 1], [], []>} : vector<4x10xf32>, vector<10x128xf32>, vector<4x128xf32> -> vector<4x128xf32>
    %183 = arith.addf %178, %182 : vector<4x128xf32>
    %c28_169 = arith.constant 28 : index
    %c0_170 = arith.constant 0 : index
    %184 = vector.load %arg9[%c28_169, %c0_170] : memref<72x128xf32, #tpu.memory_space<vmem>>, vector<4x10xf32>
    %c7_171 = arith.constant 7 : index
    %c0_172 = arith.constant 0 : index
    %c0_173 = arith.constant 0 : index
    %185 = vector.load %arg4[%c7_171, %c0_172, %c0_173] : memref<25x10x128xf32, #tpu.memory_space<vmem>>, vector<1x10x128xf32>
    %186 = vector.shape_cast %185 : vector<1x10x128xf32> to vector<10x128xf32>
    %cst_174 = arith.constant dense<0.000000e+00> : vector<4x128xf32>
    %187 = tpu.matmul %184, %186, %cst_174 {dimension_numbers = #tpu.dot_dimension_numbers<[1], [0], [0], [1], [0, 0, 1, 1], [], []>} : vector<4x10xf32>, vector<10x128xf32>, vector<4x128xf32> -> vector<4x128xf32>
    %188 = arith.addf %183, %187 : vector<4x128xf32>
    %c30_175 = arith.constant 30 : index
    %c0_176 = arith.constant 0 : index
    %189 = vector.load %arg9[%c30_175, %c0_176] : memref<72x128xf32, #tpu.memory_space<vmem>>, vector<4x10xf32>
    %c8_177 = arith.constant 8 : index
    %c0_178 = arith.constant 0 : index
    %c0_179 = arith.constant 0 : index
    %190 = vector.load %arg4[%c8_177, %c0_178, %c0_179] : memref<25x10x128xf32, #tpu.memory_space<vmem>>, vector<1x10x128xf32>
    %191 = vector.shape_cast %190 : vector<1x10x128xf32> to vector<10x128xf32>
    %cst_180 = arith.constant dense<0.000000e+00> : vector<4x128xf32>
    %192 = tpu.matmul %189, %191, %cst_180 {dimension_numbers = #tpu.dot_dimension_numbers<[1], [0], [0], [1], [0, 0, 1, 1], [], []>} : vector<4x10xf32>, vector<10x128xf32>, vector<4x128xf32> -> vector<4x128xf32>
    %193 = arith.addf %188, %192 : vector<4x128xf32>
    %c32_181 = arith.constant 32 : index
    %c0_182 = arith.constant 0 : index
    %194 = vector.load %arg9[%c32_181, %c0_182] : memref<72x128xf32, #tpu.memory_space<vmem>>, vector<4x10xf32>
    %c9_183 = arith.constant 9 : index
    %c0_184 = arith.constant 0 : index
    %c0_185 = arith.constant 0 : index
    %195 = vector.load %arg4[%c9_183, %c0_184, %c0_185] : memref<25x10x128xf32, #tpu.memory_space<vmem>>, vector<1x10x128xf32>
    %196 = vector.shape_cast %195 : vector<1x10x128xf32> to vector<10x128xf32>
    %cst_186 = arith.constant dense<0.000000e+00> : vector<4x128xf32>
    %197 = tpu.matmul %194, %196, %cst_186 {dimension_numbers = #tpu.dot_dimension_numbers<[1], [0], [0], [1], [0, 0, 1, 1], [], []>} : vector<4x10xf32>, vector<10x128xf32>, vector<4x128xf32> -> vector<4x128xf32>
    %198 = arith.addf %193, %197 : vector<4x128xf32>
    %c36_187 = arith.constant 36 : index
    %c0_188 = arith.constant 0 : index
    %199 = vector.load %arg9[%c36_187, %c0_188] : memref<72x128xf32, #tpu.memory_space<vmem>>, vector<4x10xf32>
    %c10_189 = arith.constant 10 : index
    %c0_190 = arith.constant 0 : index
    %c0_191 = arith.constant 0 : index
    %200 = vector.load %arg4[%c10_189, %c0_190, %c0_191] : memref<25x10x128xf32, #tpu.memory_space<vmem>>, vector<1x10x128xf32>
    %201 = vector.shape_cast %200 : vector<1x10x128xf32> to vector<10x128xf32>
    %cst_192 = arith.constant dense<0.000000e+00> : vector<4x128xf32>
    %202 = tpu.matmul %199, %201, %cst_192 {dimension_numbers = #tpu.dot_dimension_numbers<[1], [0], [0], [1], [0, 0, 1, 1], [], []>} : vector<4x10xf32>, vector<10x128xf32>, vector<4x128xf32> -> vector<4x128xf32>
    %203 = arith.addf %198, %202 : vector<4x128xf32>
    %c38_193 = arith.constant 38 : index
    %c0_194 = arith.constant 0 : index
    %204 = vector.load %arg9[%c38_193, %c0_194] : memref<72x128xf32, #tpu.memory_space<vmem>>, vector<4x10xf32>
    %c11_195 = arith.constant 11 : index
    %c0_196 = arith.constant 0 : index
    %c0_197 = arith.constant 0 : index
    %205 = vector.load %arg4[%c11_195, %c0_196, %c0_197] : memref<25x10x128xf32, #tpu.memory_space<vmem>>, vector<1x10x128xf32>
    %206 = vector.shape_cast %205 : vector<1x10x128xf32> to vector<10x128xf32>
    %cst_198 = arith.constant dense<0.000000e+00> : vector<4x128xf32>
    %207 = tpu.matmul %204, %206, %cst_198 {dimension_numbers = #tpu.dot_dimension_numbers<[1], [0], [0], [1], [0, 0, 1, 1], [], []>} : vector<4x10xf32>, vector<10x128xf32>, vector<4x128xf32> -> vector<4x128xf32>
    %208 = arith.addf %203, %207 : vector<4x128xf32>
    %c40_199 = arith.constant 40 : index
    %c0_200 = arith.constant 0 : index
    %209 = vector.load %arg9[%c40_199, %c0_200] : memref<72x128xf32, #tpu.memory_space<vmem>>, vector<4x10xf32>
    %c12_201 = arith.constant 12 : index
    %c0_202 = arith.constant 0 : index
    %c0_203 = arith.constant 0 : index
    %210 = vector.load %arg4[%c12_201, %c0_202, %c0_203] : memref<25x10x128xf32, #tpu.memory_space<vmem>>, vector<1x10x128xf32>
    %211 = vector.shape_cast %210 : vector<1x10x128xf32> to vector<10x128xf32>
    %cst_204 = arith.constant dense<0.000000e+00> : vector<4x128xf32>
    %212 = tpu.matmul %209, %211, %cst_204 {dimension_numbers = #tpu.dot_dimension_numbers<[1], [0], [0], [1], [0, 0, 1, 1], [], []>} : vector<4x10xf32>, vector<10x128xf32>, vector<4x128xf32> -> vector<4x128xf32>
    %213 = arith.addf %208, %212 : vector<4x128xf32>
    %c42_205 = arith.constant 42 : index
    %c0_206 = arith.constant 0 : index
    %214 = vector.load %arg9[%c42_205, %c0_206] : memref<72x128xf32, #tpu.memory_space<vmem>>, vector<4x10xf32>
    %c13_207 = arith.constant 13 : index
    %c0_208 = arith.constant 0 : index
    %c0_209 = arith.constant 0 : index
    %215 = vector.load %arg4[%c13_207, %c0_208, %c0_209] : memref<25x10x128xf32, #tpu.memory_space<vmem>>, vector<1x10x128xf32>
    %216 = vector.shape_cast %215 : vector<1x10x128xf32> to vector<10x128xf32>
    %cst_210 = arith.constant dense<0.000000e+00> : vector<4x128xf32>
    %217 = tpu.matmul %214, %216, %cst_210 {dimension_numbers = #tpu.dot_dimension_numbers<[1], [0], [0], [1], [0, 0, 1, 1], [], []>} : vector<4x10xf32>, vector<10x128xf32>, vector<4x128xf32> -> vector<4x128xf32>
    %218 = arith.addf %213, %217 : vector<4x128xf32>
    %c44_211 = arith.constant 44 : index
    %c0_212 = arith.constant 0 : index
    %219 = vector.load %arg9[%c44_211, %c0_212] : memref<72x128xf32, #tpu.memory_space<vmem>>, vector<4x10xf32>
    %c14_213 = arith.constant 14 : index
    %c0_214 = arith.constant 0 : index
    %c0_215 = arith.constant 0 : index
    %220 = vector.load %arg4[%c14_213, %c0_214, %c0_215] : memref<25x10x128xf32, #tpu.memory_space<vmem>>, vector<1x10x128xf32>
    %221 = vector.shape_cast %220 : vector<1x10x128xf32> to vector<10x128xf32>
    %cst_216 = arith.constant dense<0.000000e+00> : vector<4x128xf32>
    %222 = tpu.matmul %219, %221, %cst_216 {dimension_numbers = #tpu.dot_dimension_numbers<[1], [0], [0], [1], [0, 0, 1, 1], [], []>} : vector<4x10xf32>, vector<10x128xf32>, vector<4x128xf32> -> vector<4x128xf32>
    %223 = arith.addf %218, %222 : vector<4x128xf32>
    %c48_217 = arith.constant 48 : index
    %c0_218 = arith.constant 0 : index
    %224 = vector.load %arg9[%c48_217, %c0_218] : memref<72x128xf32, #tpu.memory_space<vmem>>, vector<4x10xf32>
    %c15_219 = arith.constant 15 : index
    %c0_220 = arith.constant 0 : index
    %c0_221 = arith.constant 0 : index
    %225 = vector.load %arg4[%c15_219, %c0_220, %c0_221] : memref<25x10x128xf32, #tpu.memory_space<vmem>>, vector<1x10x128xf32>
    %226 = vector.shape_cast %225 : vector<1x10x128xf32> to vector<10x128xf32>
    %cst_222 = arith.constant dense<0.000000e+00> : vector<4x128xf32>
    %227 = tpu.matmul %224, %226, %cst_222 {dimension_numbers = #tpu.dot_dimension_numbers<[1], [0], [0], [1], [0, 0, 1, 1], [], []>} : vector<4x10xf32>, vector<10x128xf32>, vector<4x128xf32> -> vector<4x128xf32>
    %228 = arith.addf %223, %227 : vector<4x128xf32>
    %c50_223 = arith.constant 50 : index
    %c0_224 = arith.constant 0 : index
    %229 = vector.load %arg9[%c50_223, %c0_224] : memref<72x128xf32, #tpu.memory_space<vmem>>, vector<4x10xf32>
    %c16_225 = arith.constant 16 : index
    %c0_226 = arith.constant 0 : index
    %c0_227 = arith.constant 0 : index
    %230 = vector.load %arg4[%c16_225, %c0_226, %c0_227] : memref<25x10x128xf32, #tpu.memory_space<vmem>>, vector<1x10x128xf32>
    %231 = vector.shape_cast %230 : vector<1x10x128xf32> to vector<10x128xf32>
    %cst_228 = arith.constant dense<0.000000e+00> : vector<4x128xf32>
    %232 = tpu.matmul %229, %231, %cst_228 {dimension_numbers = #tpu.dot_dimension_numbers<[1], [0], [0], [1], [0, 0, 1, 1], [], []>} : vector<4x10xf32>, vector<10x128xf32>, vector<4x128xf32> -> vector<4x128xf32>
    %233 = arith.addf %228, %232 : vector<4x128xf32>
    %c52_229 = arith.constant 52 : index
    %c0_230 = arith.constant 0 : index
    %234 = vector.load %arg9[%c52_229, %c0_230] : memref<72x128xf32, #tpu.memory_space<vmem>>, vector<4x10xf32>
    %c17_231 = arith.constant 17 : index
    %c0_232 = arith.constant 0 : index
    %c0_233 = arith.constant 0 : index
    %235 = vector.load %arg4[%c17_231, %c0_232, %c0_233] : memref<25x10x128xf32, #tpu.memory_space<vmem>>, vector<1x10x128xf32>
    %236 = vector.shape_cast %235 : vector<1x10x128xf32> to vector<10x128xf32>
    %cst_234 = arith.constant dense<0.000000e+00> : vector<4x128xf32>
    %237 = tpu.matmul %234, %236, %cst_234 {dimension_numbers = #tpu.dot_dimension_numbers<[1], [0], [0], [1], [0, 0, 1, 1], [], []>} : vector<4x10xf32>, vector<10x128xf32>, vector<4x128xf32> -> vector<4x128xf32>
    %238 = arith.addf %233, %237 : vector<4x128xf32>
    %c54_235 = arith.constant 54 : index
    %c0_236 = arith.constant 0 : index
    %239 = vector.load %arg9[%c54_235, %c0_236] : memref<72x128xf32, #tpu.memory_space<vmem>>, vector<4x10xf32>
    %c18_237 = arith.constant 18 : index
    %c0_238 = arith.constant 0 : index
    %c0_239 = arith.constant 0 : index
    %240 = vector.load %arg4[%c18_237, %c0_238, %c0_239] : memref<25x10x128xf32, #tpu.memory_space<vmem>>, vector<1x10x128xf32>
    %241 = vector.shape_cast %240 : vector<1x10x128xf32> to vector<10x128xf32>
    %cst_240 = arith.constant dense<0.000000e+00> : vector<4x128xf32>
    %242 = tpu.matmul %239, %241, %cst_240 {dimension_numbers = #tpu.dot_dimension_numbers<[1], [0], [0], [1], [0, 0, 1, 1], [], []>} : vector<4x10xf32>, vector<10x128xf32>, vector<4x128xf32> -> vector<4x128xf32>
    %243 = arith.addf %238, %242 : vector<4x128xf32>
    %c56_241 = arith.constant 56 : index
    %c0_242 = arith.constant 0 : index
    %244 = vector.load %arg9[%c56_241, %c0_242] : memref<72x128xf32, #tpu.memory_space<vmem>>, vector<4x10xf32>
    %c19_243 = arith.constant 19 : index
    %c0_244 = arith.constant 0 : index
    %c0_245 = arith.constant 0 : index
    %245 = vector.load %arg4[%c19_243, %c0_244, %c0_245] : memref<25x10x128xf32, #tpu.memory_space<vmem>>, vector<1x10x128xf32>
    %246 = vector.shape_cast %245 : vector<1x10x128xf32> to vector<10x128xf32>
    %cst_246 = arith.constant dense<0.000000e+00> : vector<4x128xf32>
    %247 = tpu.matmul %244, %246, %cst_246 {dimension_numbers = #tpu.dot_dimension_numbers<[1], [0], [0], [1], [0, 0, 1, 1], [], []>} : vector<4x10xf32>, vector<10x128xf32>, vector<4x128xf32> -> vector<4x128xf32>
    %248 = arith.addf %243, %247 : vector<4x128xf32>
    %c60 = arith.constant 60 : index
    %c0_247 = arith.constant 0 : index
    %249 = vector.load %arg9[%c60, %c0_247] : memref<72x128xf32, #tpu.memory_space<vmem>>, vector<4x10xf32>
    %c20_248 = arith.constant 20 : index
    %c0_249 = arith.constant 0 : index
    %c0_250 = arith.constant 0 : index
    %250 = vector.load %arg4[%c20_248, %c0_249, %c0_250] : memref<25x10x128xf32, #tpu.memory_space<vmem>>, vector<1x10x128xf32>
    %251 = vector.shape_cast %250 : vector<1x10x128xf32> to vector<10x128xf32>
    %cst_251 = arith.constant dense<0.000000e+00> : vector<4x128xf32>
    %252 = tpu.matmul %249, %251, %cst_251 {dimension_numbers = #tpu.dot_dimension_numbers<[1], [0], [0], [1], [0, 0, 1, 1], [], []>} : vector<4x10xf32>, vector<10x128xf32>, vector<4x128xf32> -> vector<4x128xf32>
    %253 = arith.addf %248, %252 : vector<4x128xf32>
    %c62 = arith.constant 62 : index
    %c0_252 = arith.constant 0 : index
    %254 = vector.load %arg9[%c62, %c0_252] : memref<72x128xf32, #tpu.memory_space<vmem>>, vector<4x10xf32>
    %c21_253 = arith.constant 21 : index
    %c0_254 = arith.constant 0 : index
    %c0_255 = arith.constant 0 : index
    %255 = vector.load %arg4[%c21_253, %c0_254, %c0_255] : memref<25x10x128xf32, #tpu.memory_space<vmem>>, vector<1x10x128xf32>
    %256 = vector.shape_cast %255 : vector<1x10x128xf32> to vector<10x128xf32>
    %cst_256 = arith.constant dense<0.000000e+00> : vector<4x128xf32>
    %257 = tpu.matmul %254, %256, %cst_256 {dimension_numbers = #tpu.dot_dimension_numbers<[1], [0], [0], [1], [0, 0, 1, 1], [], []>} : vector<4x10xf32>, vector<10x128xf32>, vector<4x128xf32> -> vector<4x128xf32>
    %258 = arith.addf %253, %257 : vector<4x128xf32>
    %c64 = arith.constant 64 : index
    %c0_257 = arith.constant 0 : index
    %259 = vector.load %arg9[%c64, %c0_257] : memref<72x128xf32, #tpu.memory_space<vmem>>, vector<4x10xf32>
    %c22_258 = arith.constant 22 : index
    %c0_259 = arith.constant 0 : index
    %c0_260 = arith.constant 0 : index
    %260 = vector.load %arg4[%c22_258, %c0_259, %c0_260] : memref<25x10x128xf32, #tpu.memory_space<vmem>>, vector<1x10x128xf32>
    %261 = vector.shape_cast %260 : vector<1x10x128xf32> to vector<10x128xf32>
    %cst_261 = arith.constant dense<0.000000e+00> : vector<4x128xf32>
    %262 = tpu.matmul %259, %261, %cst_261 {dimension_numbers = #tpu.dot_dimension_numbers<[1], [0], [0], [1], [0, 0, 1, 1], [], []>} : vector<4x10xf32>, vector<10x128xf32>, vector<4x128xf32> -> vector<4x128xf32>
    %263 = arith.addf %258, %262 : vector<4x128xf32>
    %c66 = arith.constant 66 : index
    %c0_262 = arith.constant 0 : index
    %264 = vector.load %arg9[%c66, %c0_262] : memref<72x128xf32, #tpu.memory_space<vmem>>, vector<4x10xf32>
    %c23_263 = arith.constant 23 : index
    %c0_264 = arith.constant 0 : index
    %c0_265 = arith.constant 0 : index
    %265 = vector.load %arg4[%c23_263, %c0_264, %c0_265] : memref<25x10x128xf32, #tpu.memory_space<vmem>>, vector<1x10x128xf32>
    %266 = vector.shape_cast %265 : vector<1x10x128xf32> to vector<10x128xf32>
    %cst_266 = arith.constant dense<0.000000e+00> : vector<4x128xf32>
    %267 = tpu.matmul %264, %266, %cst_266 {dimension_numbers = #tpu.dot_dimension_numbers<[1], [0], [0], [1], [0, 0, 1, 1], [], []>} : vector<4x10xf32>, vector<10x128xf32>, vector<4x128xf32> -> vector<4x128xf32>
    %268 = arith.addf %263, %267 : vector<4x128xf32>
    %c68 = arith.constant 68 : index
    %c0_267 = arith.constant 0 : index
    %269 = vector.load %arg9[%c68, %c0_267] : memref<72x128xf32, #tpu.memory_space<vmem>>, vector<4x10xf32>
    %c24_268 = arith.constant 24 : index
    %c0_269 = arith.constant 0 : index
    %c0_270 = arith.constant 0 : index
    %270 = vector.load %arg4[%c24_268, %c0_269, %c0_270] : memref<25x10x128xf32, #tpu.memory_space<vmem>>, vector<1x10x128xf32>
    %271 = vector.shape_cast %270 : vector<1x10x128xf32> to vector<10x128xf32>
    %cst_271 = arith.constant dense<0.000000e+00> : vector<4x128xf32>
    %272 = tpu.matmul %269, %271, %cst_271 {dimension_numbers = #tpu.dot_dimension_numbers<[1], [0], [0], [1], [0, 0, 1, 1], [], []>} : vector<4x10xf32>, vector<10x128xf32>, vector<4x128xf32> -> vector<4x128xf32>
    %273 = arith.addf %268, %272 : vector<4x128xf32>
    %c0_272 = arith.constant 0 : index
    %c0_273 = arith.constant 0 : index
    %274 = vector.load %arg5[%c0_272, %c0_273] : memref<1x128xf32, #tpu.memory_space<vmem>>, vector<1x128xf32>
    %275 = vector.broadcast %274 : vector<1x128xf32> to vector<4x128xf32>
    %276 = arith.addf %273, %275 : vector<4x128xf32>
    %cst_274 = arith.constant 0.000000e+00 : f32
    %277 = vector.broadcast %cst_274 : f32 to vector<4x128xf32>
    %278 = arith.maximumf %276, %277 : vector<4x128xf32>
    %c4_275 = arith.constant 4 : index
    %c0_276 = arith.constant 0 : index
    %279 = vector.load %arg10[%c4_275, %c0_276] : memref<8x128xf32, #tpu.memory_space<vmem>>, vector<4x128xf32>
    tpu.vector_store %arg10[%c4_275, %c0_276], %278 {strides = array<i32>} : memref<8x128xf32, #tpu.memory_space<vmem>>, vector<4x128xf32>,
    %c0_277 = arith.constant 0 : index
    %c0_278 = arith.constant 0 : index
    %280 = vector.load %arg7[%c0_277, %c0_278] : memref<1x128xf32, #tpu.memory_space<vmem>>, vector<1x128xf32>
    %c0_279 = arith.constant 0 : index
    %c0_280 = arith.constant 0 : index
    %281 = vector.load %arg10[%c0_279, %c0_280] : memref<8x128xf32, #tpu.memory_space<vmem>>, vector<1x20xf32>
    %c0_281 = arith.constant 0 : index
    %c0_282 = arith.constant 0 : index
    %c0_283 = arith.constant 0 : index
    %282 = vector.load %arg6[%c0_281, %c0_282, %c0_283] : memref<8x20x128xf32, #tpu.memory_space<vmem>>, vector<1x20x128xf32>
    %283 = vector.shape_cast %282 : vector<1x20x128xf32> to vector<20x128xf32>
    %cst_284 = arith.constant dense<0.000000e+00> : vector<1x128xf32>
    %284 = tpu.matmul %281, %283, %cst_284 {dimension_numbers = #tpu.dot_dimension_numbers<[1], [0], [0], [1], [0, 0, 1, 1], [], []>} : vector<1x20xf32>, vector<20x128xf32>, vector<1x128xf32> -> vector<1x128xf32>
    %285 = arith.addf %280, %284 : vector<1x128xf32>
    %c1_285 = arith.constant 1 : index
    %c0_286 = arith.constant 0 : index
    %286 = vector.load %arg10[%c1_285, %c0_286] : memref<8x128xf32, #tpu.memory_space<vmem>>, vector<1x20xf32>
    %c1_287 = arith.constant 1 : index
    %c0_288 = arith.constant 0 : index
    %c0_289 = arith.constant 0 : index
    %287 = vector.load %arg6[%c1_287, %c0_288, %c0_289] : memref<8x20x128xf32, #tpu.memory_space<vmem>>, vector<1x20x128xf32>
    %288 = vector.shape_cast %287 : vector<1x20x128xf32> to vector<20x128xf32>
    %cst_290 = arith.constant dense<0.000000e+00> : vector<1x128xf32>
    %289 = tpu.matmul %286, %288, %cst_290 {dimension_numbers = #tpu.dot_dimension_numbers<[1], [0], [0], [1], [0, 0, 1, 1], [], []>} : vector<1x20xf32>, vector<20x128xf32>, vector<1x128xf32> -> vector<1x128xf32>
    %290 = arith.addf %285, %289 : vector<1x128xf32>
    %c2_291 = arith.constant 2 : index
    %c0_292 = arith.constant 0 : index
    %291 = vector.load %arg10[%c2_291, %c0_292] : memref<8x128xf32, #tpu.memory_space<vmem>>, vector<1x20xf32>
    %c2_293 = arith.constant 2 : index
    %c0_294 = arith.constant 0 : index
    %c0_295 = arith.constant 0 : index
    %292 = vector.load %arg6[%c2_293, %c0_294, %c0_295] : memref<8x20x128xf32, #tpu.memory_space<vmem>>, vector<1x20x128xf32>
    %293 = vector.shape_cast %292 : vector<1x20x128xf32> to vector<20x128xf32>
    %cst_296 = arith.constant dense<0.000000e+00> : vector<1x128xf32>
    %294 = tpu.matmul %291, %293, %cst_296 {dimension_numbers = #tpu.dot_dimension_numbers<[1], [0], [0], [1], [0, 0, 1, 1], [], []>} : vector<1x20xf32>, vector<20x128xf32>, vector<1x128xf32> -> vector<1x128xf32>
    %295 = arith.addf %290, %294 : vector<1x128xf32>
    %c3_297 = arith.constant 3 : index
    %c0_298 = arith.constant 0 : index
    %296 = vector.load %arg10[%c3_297, %c0_298] : memref<8x128xf32, #tpu.memory_space<vmem>>, vector<1x20xf32>
    %c3_299 = arith.constant 3 : index
    %c0_300 = arith.constant 0 : index
    %c0_301 = arith.constant 0 : index
    %297 = vector.load %arg6[%c3_299, %c0_300, %c0_301] : memref<8x20x128xf32, #tpu.memory_space<vmem>>, vector<1x20x128xf32>
    %298 = vector.shape_cast %297 : vector<1x20x128xf32> to vector<20x128xf32>
    %cst_302 = arith.constant dense<0.000000e+00> : vector<1x128xf32>
    %299 = tpu.matmul %296, %298, %cst_302 {dimension_numbers = #tpu.dot_dimension_numbers<[1], [0], [0], [1], [0, 0, 1, 1], [], []>} : vector<1x20xf32>, vector<20x128xf32>, vector<1x128xf32> -> vector<1x128xf32>
    %300 = arith.addf %295, %299 : vector<1x128xf32>
    %c4_303 = arith.constant 4 : index
    %c0_304 = arith.constant 0 : index
    %301 = vector.load %arg10[%c4_303, %c0_304] : memref<8x128xf32, #tpu.memory_space<vmem>>, vector<1x20xf32>
    %c4_305 = arith.constant 4 : index
    %c0_306 = arith.constant 0 : index
    %c0_307 = arith.constant 0 : index
    %302 = vector.load %arg6[%c4_305, %c0_306, %c0_307] : memref<8x20x128xf32, #tpu.memory_space<vmem>>, vector<1x20x128xf32>
    %303 = vector.shape_cast %302 : vector<1x20x128xf32> to vector<20x128xf32>
    %cst_308 = arith.constant dense<0.000000e+00> : vector<1x128xf32>
    %304 = tpu.matmul %301, %303, %cst_308 {dimension_numbers = #tpu.dot_dimension_numbers<[1], [0], [0], [1], [0, 0, 1, 1], [], []>} : vector<1x20xf32>, vector<20x128xf32>, vector<1x128xf32> -> vector<1x128xf32>
    %305 = arith.addf %300, %304 : vector<1x128xf32>
    %c5_309 = arith.constant 5 : index
    %c0_310 = arith.constant 0 : index
    %306 = vector.load %arg10[%c5_309, %c0_310] : memref<8x128xf32, #tpu.memory_space<vmem>>, vector<1x20xf32>
    %c5_311 = arith.constant 5 : index
    %c0_312 = arith.constant 0 : index
    %c0_313 = arith.constant 0 : index
    %307 = vector.load %arg6[%c5_311, %c0_312, %c0_313] : memref<8x20x128xf32, #tpu.memory_space<vmem>>, vector<1x20x128xf32>
    %308 = vector.shape_cast %307 : vector<1x20x128xf32> to vector<20x128xf32>
    %cst_314 = arith.constant dense<0.000000e+00> : vector<1x128xf32>
    %309 = tpu.matmul %306, %308, %cst_314 {dimension_numbers = #tpu.dot_dimension_numbers<[1], [0], [0], [1], [0, 0, 1, 1], [], []>} : vector<1x20xf32>, vector<20x128xf32>, vector<1x128xf32> -> vector<1x128xf32>
    %310 = arith.addf %305, %309 : vector<1x128xf32>
    %c6_315 = arith.constant 6 : index
    %c0_316 = arith.constant 0 : index
    %311 = vector.load %arg10[%c6_315, %c0_316] : memref<8x128xf32, #tpu.memory_space<vmem>>, vector<1x20xf32>
    %c6_317 = arith.constant 6 : index
    %c0_318 = arith.constant 0 : index
    %c0_319 = arith.constant 0 : index
    %312 = vector.load %arg6[%c6_317, %c0_318, %c0_319] : memref<8x20x128xf32, #tpu.memory_space<vmem>>, vector<1x20x128xf32>
    %313 = vector.shape_cast %312 : vector<1x20x128xf32> to vector<20x128xf32>
    %cst_320 = arith.constant dense<0.000000e+00> : vector<1x128xf32>
    %314 = tpu.matmul %311, %313, %cst_320 {dimension_numbers = #tpu.dot_dimension_numbers<[1], [0], [0], [1], [0, 0, 1, 1], [], []>} : vector<1x20xf32>, vector<20x128xf32>, vector<1x128xf32> -> vector<1x128xf32>
    %315 = arith.addf %310, %314 : vector<1x128xf32>
    %c7_321 = arith.constant 7 : index
    %c0_322 = arith.constant 0 : index
    %316 = vector.load %arg10[%c7_321, %c0_322] : memref<8x128xf32, #tpu.memory_space<vmem>>, vector<1x20xf32>
    %c7_323 = arith.constant 7 : index
    %c0_324 = arith.constant 0 : index
    %c0_325 = arith.constant 0 : index
    %317 = vector.load %arg6[%c7_323, %c0_324, %c0_325] : memref<8x20x128xf32, #tpu.memory_space<vmem>>, vector<1x20x128xf32>
    %318 = vector.shape_cast %317 : vector<1x20x128xf32> to vector<20x128xf32>
    %cst_326 = arith.constant dense<0.000000e+00> : vector<1x128xf32>
    %319 = tpu.matmul %316, %318, %cst_326 {dimension_numbers = #tpu.dot_dimension_numbers<[1], [0], [0], [1], [0, 0, 1, 1], [], []>} : vector<1x20xf32>, vector<20x128xf32>, vector<1x128xf32> -> vector<1x128xf32>
    %320 = arith.addf %315, %319 : vector<1x128xf32>
    %321 = vector.extract_strided_slice %320 {offsets = [0, 0], sizes = [1, 10], strides = [1, 1]} : vector<1x128xf32> to vector<1x10xf32>
    %c0_327 = arith.constant 0 : index
    %c0_328 = arith.constant 0 : index
    %322 = vector.load %arg8[%c0_327, %c0_328] : memref<1x10xf32, #tpu.memory_space<vmem>>, vector<1x10xf32>
    tpu.vector_store %arg8[%c0_327, %c0_328], %321 {strides = array<i32>} : memref<1x10xf32, #tpu.memory_space<vmem>>, vector<1x10xf32>,
    return
  }
  func.func @transform_0(%arg0: i32) -> (i32, i32) {
    %c0_i32 = arith.constant 0 : i32
    %c0_i32_0 = arith.constant 0 : i32
    %c0_i32_1 = arith.constant 0 : i32
    return %c0_i32, %c0_i32_0 : i32, i32
  }
  func.func @transform_1(%arg0: i32) -> (i32, i32) {
    %c0_i32 = arith.constant 0 : i32
    %c0_i32_0 = arith.constant 0 : i32
    %c0_i32_1 = arith.constant 0 : i32
    return %c0_i32, %c0_i32_0 : i32, i32
  }
  func.func @transform_2(%arg0: i32) -> (i32, i32) {
    %c0_i32 = arith.constant 0 : i32
    %c0_i32_0 = arith.constant 0 : i32
    %c0_i32_1 = arith.constant 0 : i32
    return %c0_i32, %c0_i32_0 : i32, i32
  }
  func.func @transform_3(%arg0: i32) -> (i32, i32, i32) {
    %c0_i32 = arith.constant 0 : i32
    %c0_i32_0 = arith.constant 0 : i32
    %c0_i32_1 = arith.constant 0 : i32
    %c0_i32_2 = arith.constant 0 : i32
    return %c0_i32, %c0_i32_0, %c0_i32_1 : i32, i32, i32
  }
  func.func @transform_4(%arg0: i32) -> (i32, i32) {
    %c0_i32 = arith.constant 0 : i32
    %c0_i32_0 = arith.constant 0 : i32
    %c0_i32_1 = arith.constant 0 : i32
    return %c0_i32, %c0_i32_0 : i32, i32
  }
  func.func @transform_5(%arg0: i32) -> (i32, i32, i32) {
    %c0_i32 = arith.constant 0 : i32
    %c0_i32_0 = arith.constant 0 : i32
    %c0_i32_1 = arith.constant 0 : i32
    %c0_i32_2 = arith.constant 0 : i32
    return %c0_i32, %c0_i32_0, %c0_i32_1 : i32, i32, i32
  }
  func.func @transform_6(%arg0: i32) -> (i32, i32) {
    %c0_i32 = arith.constant 0 : i32
    %c0_i32_0 = arith.constant 0 : i32
    %c0_i32_1 = arith.constant 0 : i32
    return %c0_i32, %c0_i32_0 : i32, i32
  }
  func.func @transform_7(%arg0: i32) -> (i32, i32) {
    %c0_i32 = arith.constant 0 : i32
    %c0_i32_0 = arith.constant 0 : i32
    %c0_i32_1 = arith.constant 0 : i32
    return %c0_i32, %c0_i32_0 : i32, i32
  }
}

</mosaic_0001>

<llo_original>
// kernel: forward.1
$region0: #{forward.1}
  #allocation0 [shape = 'u32[]', space=smem, size = 0x4, offset = 0x4, fixed_abs, tag = 'smem constant byte address 0x4 - core index']
  #allocation1 [shape = 'u32[144,128]{1,0:T(1,128)}', space=vmem, size = 0x12000, scoped, tag = 'internal scratch']
  #allocation2 [shape = 'f32[72,128]{1,0:T(8,128)}', space=vmem, size = 0x9000, scoped, tag = 'scratch operand']
  #allocation3 [shape = 'f32[8,128]{1,0:T(8,128)}', space=vmem, size = 0x1000, scoped, tag = 'scratch operand']
  %s0 = inlined_call_operand.vmem [shape: f32[288,75], index: 0, kind: input, shape index: {}]
  %s1 = inlined_call_operand.vmem [shape: f32[75,128], index: 1, kind: input, shape index: {}]
  %s2 = inlined_call_operand.vmem [shape: f32[1,128], index: 2, kind: input, shape index: {}]
  %s3 = inlined_call_operand.vmem [shape: f32[25,10,128], index: 3, kind: input, shape index: {}]
  %s4 = inlined_call_operand.vmem [shape: f32[1,128], index: 4, kind: input, shape index: {}]
  %s5 = inlined_call_operand.vmem [shape: f32[8,20,128], index: 5, kind: input, shape index: {}]
  %s6 = inlined_call_operand.vmem [shape: f32[1,128], index: 6, kind: input, shape index: {}]
  %s7 = inlined_call_operand.hbm [shape: f32[1,10], index: 7, kind: output, shape index: {}]
  %s8 = sld [smem:[#allocation0]]
  $region38: #{forward.1} parent=0
    _
  %s10 = ssub.s32 1, %s8
  %s11 = scalar_select 0, %s10, %s8
  $region1: #{forward.1} parent=0
    #allocation4 [shape = 'u8[512]{0}', space=vmem, size = 0x400, scoped, tag = 'output window, operand 0, single buffered']
    #allocation5 [shape = 's32[1]{0}', space=sflag, size = 0x4, scoped, tag = 'scoped memory for forward.1']
    %12 = vsyncpa [#allocation5], 0
    // Predicated region
    $region2: #{forward.1} parent=1 // pred_check
      _
    $region3: #{forward.1} parent=1 // pred_check_branch
      %14 = sbr.rel (0) target = $region5
    $region4: #{forward.1} parent=1 // pred_region
      _
    $region5: #{forward.1} parent=1 // pred_fallthru
      _
    // Predicated region
    $region6: #{forward.1} parent=1 // pred_check
      _
    $region7: #{forward.1} parent=1 // pred_check_branch
      %16 = sbr.rel (0) target = $region9
    $region8: #{forward.1} parent=1 // pred_region
      _
    $region9: #{forward.1} parent=1 // pred_fallthru
      _
    // Predicated region
    $region10: #{forward.1} parent=1 // pred_check
      _
    $region11: #{forward.1} parent=1 // pred_check_branch
      %18 = sbr.rel (0) target = $region13
    $region12: #{forward.1} parent=1 // pred_region
      _
    $region13: #{forward.1} parent=1 // pred_fallthru
      _
    // Predicated region
    $region14: #{forward.1} parent=1 // pred_check
      _
    $region15: #{forward.1} parent=1 // pred_check_branch
      %20 = sbr.rel (0) target = $region17
    $region16: #{forward.1} parent=1 // pred_region
      _
    $region17: #{forward.1} parent=1 // pred_fallthru
      _
    // Predicated region
    $region18: #{forward.1} parent=1 // pred_check
      _
    $region19: #{forward.1} parent=1 // pred_check_branch
      %22 = sbr.rel (0) target = $region21
    $region20: #{forward.1} parent=1 // pred_region
      _
    $region21: #{forward.1} parent=1 // pred_fallthru
      _
    // Predicated region
    $region22: #{forward.1} parent=1 // pred_check
      _
    $region23: #{forward.1} parent=1 // pred_check_branch
      %24 = sbr.rel (0) target = $region25
    $region24: #{forward.1} parent=1 // pred_region
      _
    $region25: #{forward.1} parent=1 // pred_fallthru
      _
    // Predicated region
    $region26: #{forward.1} parent=1 // pred_check
      _
    $region27: #{forward.1} parent=1 // pred_check_branch
      %26 = sbr.rel (0) target = $region29
    $region28: #{forward.1} parent=1 // pred_region
      _
    $region29: #{forward.1} parent=1 // pred_fallthru
      _
    %v27 = vld [vmem:[%s0] sm:$0xff]
    %v28 = vld [vmem:[%s0 + $0x8] sm:$0xff]
    %v29 = vld [vmem:[%s0 + $0x10] sm:$0xff]
    %v30 = vld [vmem:[%s0 + $0x18] sm:$0xff]
    %v31 = vld [vmem:[%s0 + $0x20] sm:$0xff]
    %v32 = vld [vmem:[%s0 + $0x28] sm:$0xff]
    %v33 = vld [vmem:[%s0 + $0x30] sm:$0xff]
    %v34 = vld [vmem:[%s0 + $0x38] sm:$0xff]
    %v35 = vld [vmem:[%s0 + $0x40] sm:$0xff]
    %v36 = vld [vmem:[%s0 + $0x48] sm:$0xff]
    %v37 = vld [vmem:[%s0 + $0x50] sm:$0xff]
    %v38 = vld [vmem:[%s0 + $0x58] sm:$0xff]
    %v39 = vld [vmem:[%s0 + $0x60] sm:$0xff]
    %v40 = vld [vmem:[%s0 + $0x68] sm:$0xff]
    %v41 = vld [vmem:[%s0 + $0x70] sm:$0xff]
    %v42 = vld [vmem:[%s0 + $0x78] sm:$0xff]
    %v43 = vld [vmem:[%s0 + $0x80] sm:$0xff]
    %v44 = vld [vmem:[%s0 + $0x88] sm:$0xff]
    %v45 = vld [vmem:[%s0 + $0x90] sm:$0xff]
    %v46 = vld [vmem:[%s0 + $0x98] sm:$0xff]
    %v47 = vld [vmem:[%s0 + $0xa0] sm:$0xff]
    %v48 = vld [vmem:[%s0 + $0xa8] sm:$0xff]
    %v49 = vld [vmem:[%s0 + $0xb0] sm:$0xff]
    %v50 = vld [vmem:[%s0 + $0xb8] sm:$0xff]
    %v51 = vld [vmem:[%s0 + $0xc0] sm:$0xff]
    %v52 = vld [vmem:[%s0 + $0xc8] sm:$0xff]
    %v53 = vld [vmem:[%s0 + $0xd0] sm:$0xff]
    %v54 = vld [vmem:[%s0 + $0xd8] sm:$0xff]
    %v55 = vld [vmem:[%s0 + $0xe0] sm:$0xff]
    %v56 = vld [vmem:[%s0 + $0xe8] sm:$0xff]
    %v57 = vld [vmem:[%s0 + $0xf0] sm:$0xff]
    %v58 = vld [vmem:[%s0 + $0xf8] sm:$0xff]
    %v59 = vld [vmem:[%s0 + $0x100] sm:$0xff]
    %v60 = vld [vmem:[%s0 + $0x108] sm:$0xff]
    %v61 = vld [vmem:[%s0 + $0x110] sm:$0xff]
    %v62 = vld [vmem:[%s0 + $0x118] sm:$0xff]
    %v63 = vld [vmem:[%s1] sm:$0xff]
    %v64 = vld [vmem:[%s1 + $0x8] sm:$0xff]
    %v65 = vld [vmem:[%s1 + $0x10] sm:$0xff]
    %v66 = vld [vmem:[%s1 + $0x18] sm:$0xff]
    %v67 = vld [vmem:[%s1 + $0x20] sm:$0xff]
    %v68 = vld [vmem:[%s1 + $0x28] sm:$0xff]
    %v69 = vld [vmem:[%s1 + $0x30] sm:$0xff]
    %v70 = vld [vmem:[%s1 + $0x38] sm:$0xff]
    %v71 = vld [vmem:[%s1 + $0x40] sm:$0xff]
    %v72 = vld [vmem:[%s1 + $0x48] sm:$0x7]
    %v73 = vld [vmem:[%s2] sm:$0x1]
    %v75 = vlaneseq
    %v76 = vshrl.u32 %v75, 7
    %v77 = vsub.s32 0, %v76
    %v78 = vrot.slane %v73, %v77
    %vm80 = vcmask 613376
    %v82 = vsel %vm80, %v27, 0
    %v85 = vsel %vm80, %v28, 0
    %v88 = vsel %vm80, %v29, 0
    %v91 = vsel %vm80, %v30, 0
    %v94 = vsel %vm80, %v31, 0
    %v97 = vsel %vm80, %v32, 0
    %v100 = vsel %vm80, %v33, 0
    %v103 = vsel %vm80, %v34, 0
    %v106 = vsel %vm80, %v35, 0
    %v109 = vsel %vm80, %v36, 0
    %v112 = vsel %vm80, %v37, 0
    %v115 = vsel %vm80, %v38, 0
    %v118 = vsel %vm80, %v39, 0
    %v121 = vsel %vm80, %v40, 0
    %v124 = vsel %vm80, %v41, 0
    %v127 = vsel %vm80, %v42, 0
    %v130 = vsel %vm80, %v43, 0
    %v133 = vsel %vm80, %v44, 0
    %v136 = vsel %vm80, %v45, 0
    %v139 = vsel %vm80, %v46, 0
    %v142 = vsel %vm80, %v47, 0
    %v145 = vsel %vm80, %v48, 0
    %v148 = vsel %vm80, %v49, 0
    %v151 = vsel %vm80, %v50, 0
    %v154 = vsel %vm80, %v51, 0
    %v157 = vsel %vm80, %v52, 0
    %v160 = vsel %vm80, %v53, 0
    %v163 = vsel %vm80, %v54, 0
    %v166 = vsel %vm80, %v55, 0
    %v169 = vsel %vm80, %v56, 0
    %v172 = vsel %vm80, %v57, 0
    %v175 = vsel %vm80, %v58, 0
    %v178 = vsel %vm80, %v59, 0
    %v181 = vsel %vm80, %v60, 0
    %v184 = vsel %vm80, %v61, 0
    %v187 = vsel %vm80, %v62, 0
    %vm189 = vcmask 1042432
    %v191 = vsel %vm189, %v72, 0
    %193 = vmatprep.subr.mxu0 0.0
    %194 = vmatpush1.msra.mxu0 %v63
    %195 = vmatprep.subr.mxu0 0.0
    %196 = vmatpush1.msra.mxu0 %v64
    %197 = vmatprep.subr.mxu0 0.0
    %198 = vmatpush1.msra.mxu0 %v65
    %199 = vmatprep.subr.mxu0 0.0
    %200 = vmatpush1.msra.mxu0 %v66
    %201 = vmatprep.subr.mxu0 0.0
    %202 = vmatpush1.msra.mxu0 %v67
    %203 = vmatprep.subr.mxu0 0.0
    %204 = vmatpush1.msra.mxu0 %v68
    %205 = vmatprep.subr.mxu0 0.0
    %206 = vmatpush1.msra.mxu0 %v69
    %207 = vmatprep.subr.mxu0 0.0
    %208 = vmatpush1.msra.mxu0 %v70
    %209 = vmatprep.subr.mxu0 0.0
    %210 = vmatpush1.msra.mxu0 %v71
    %211 = vmatprep.subr.mxu0 0.0
    %212 = vmatpush1.msra.mxu0 %v191
    %213 = vmatprep.subr.mxu0 0.0
    %214 = vmatpush1.msra.mxu0 0.0
    %215 = vmatprep.subr.mxu0 0.0
    %216 = vmatpush1.msra.mxu0 0.0
    %217 = vmatprep.subr.mxu0 0.0
    %218 = vmatpush1.msra.mxu0 0.0
    %219 = vmatprep.subr.mxu0 0.0
    %220 = vmatpush1.msra.mxu0 0.0
    %221 = vmatprep.subr.mxu0 0.0
    %222 = vmatpush1.msra.mxu0 0.0
    %223 = vmatprep.subr.mxu0 0.0
    %224 = vmatpush1.msra.mxu0 0.0
    %225 = vmatprep.subr.mxu0 0.0
    %226 = vmatpush1.msra.mxu0 0.0
    %227 = vmatprep.subr.mxu0 0.0
    %228 = vmatpush1.msra.mxu0 0.0
    %229 = vmatprep.subr.mxu0 0.0
    %230 = vmatpush1.msra.mxu0 0.0
    %231 = vmatprep.subr.mxu0 0.0
    %232 = vmatpush1.msra.mxu0 0.0
    %233 = vmatprep.subr.mxu0 0.0
    %234 = vmatpush1.msra.mxu0 0.0
    %235 = vmatprep.subr.mxu0 0.0
    %236 = vmatpush1.msra.mxu0 0.0
    %237 = vmatprep.subr.mxu0 0.0
    %238 = vmatpush1.msra.mxu0 0.0
    %239 = vmatprep.subr.mxu0 0.0
    %240 = vmatpush1.msra.mxu0 0.0
    %241 = vmatprep.subr.mxu0 0.0
    %242 = vmatpush1.msra.mxu0 0.0
    %243 = vmatprep.subr.mxu0 0.0
    %244 = vmatpush1.msra.mxu0 0.0
    %245 = vmatprep.subr.mxu0 0.0
    %246 = vmatpush1.msra.mxu0 0.0
    %247 = vmatprep.subr.mxu0 0.0
    %248 = vmatpush1.msra.mxu0 0.0
    %249 = vmatprep.subr.mxu0 0.0
    %250 = vmatpush1.msra.mxu0 0.0
    %251 = vmatprep.subr.mxu0 0.0
    %252 = vmatpush1.msra.mxu0 0.0
    %253 = vmatprep.subr.mxu0 0.0
    %254 = vmatpush1.msra.mxu0 0.0
    %255 = vmatprep.subr.mxu0 0.0
    %256 = vmatpush1.msra.mxu0 0.0
    %257 = vmatprep.mubr.f32.mxu0 0.0
    %258 = vmatmul.mubr.f32.gmra.mrb[0].mxu0 %v82
    %v259 = vpop.f32.mrb[0].mxu0
    %v260 = vadd.f32 %v78, %v259
    %v261 = vpop.f32.mrb[0].mxu0
    %262 = vmatprep.mubr.f32.mxu0 0.0
    %263 = vmatmul.mubr.f32.gmra.mrb[0].mxu0 %v85
    %v264 = vpop.f32.mrb[0].mxu0
    %v265 = vadd.f32 %v78, %v264
    %v266 = vpop.f32.mrb[0].mxu0
    %267 = vmatprep.mubr.f32.mxu0 0.0
    %268 = vmatmul.mubr.f32.gmra.mrb[0].mxu0 %v88
    %v269 = vpop.f32.mrb[0].mxu0
    %v270 = vadd.f32 %v78, %v269
    %v271 = vpop.f32.mrb[0].mxu0
    %272 = vmatprep.mubr.f32.mxu0 0.0
    %273 = vmatmul.mubr.f32.gmra.mrb[0].mxu0 %v91
    %v274 = vpop.f32.mrb[0].mxu0
    %v275 = vadd.f32 %v78, %v274
    %v276 = vpop.f32.mrb[0].mxu0
    %277 = vmatprep.mubr.f32.mxu0 0.0
    %278 = vmatmul.mubr.f32.gmra.mrb[0].mxu0 %v94
    %v279 = vpop.f32.mrb[0].mxu0
    %v280 = vadd.f32 %v78, %v279
    %v281 = vpop.f32.mrb[0].mxu0
    %282 = vmatprep.mubr.f32.mxu0 0.0
    %283 = vmatmul.mubr.f32.gmra.mrb[0].mxu0 %v97
    %v284 = vpop.f32.mrb[0].mxu0
    %v285 = vadd.f32 %v78, %v284
    %v286 = vpop.f32.mrb[0].mxu0
    %287 = vmatprep.mubr.f32.mxu0 0.0
    %288 = vmatmul.mubr.f32.gmra.mrb[0].mxu0 %v100
    %v289 = vpop.f32.mrb[0].mxu0
    %v290 = vadd.f32 %v78, %v289
    %v291 = vpop.f32.mrb[0].mxu0
    %292 = vmatprep.mubr.f32.mxu0 0.0
    %293 = vmatmul.mubr.f32.gmra.mrb[0].mxu0 %v103
    %v294 = vpop.f32.mrb[0].mxu0
    %v295 = vadd.f32 %v78, %v294
    %v296 = vpop.f32.mrb[0].mxu0
    %297 = vmatprep.mubr.f32.mxu0 0.0
    %298 = vmatmul.mubr.f32.gmra.mrb[0].mxu0 %v106
    %v299 = vpop.f32.mrb[0].mxu0
    %v300 = vadd.f32 %v78, %v299
    %v301 = vpop.f32.mrb[0].mxu0
    %302 = vmatprep.mubr.f32.mxu0 0.0
    %303 = vmatmul.mubr.f32.gmra.mrb[0].mxu0 %v109
    %v304 = vpop.f32.mrb[0].mxu0
    %v305 = vadd.f32 %v78, %v304
    %v306 = vpop.f32.mrb[0].mxu0
    %307 = vmatprep.mubr.f32.mxu0 0.0
    %308 = vmatmul.mubr.f32.gmra.mrb[0].mxu0 %v112
    %v309 = vpop.f32.mrb[0].mxu0
    %v310 = vadd.f32 %v78, %v309
    %v311 = vpop.f32.mrb[0].mxu0
    %312 = vmatprep.mubr.f32.mxu0 0.0
    %313 = vmatmul.mubr.f32.gmra.mrb[0].mxu0 %v115
    %v314 = vpop.f32.mrb[0].mxu0
    %v315 = vadd.f32 %v78, %v314
    %v316 = vpop.f32.mrb[0].mxu0
    %317 = vmatprep.mubr.f32.mxu0 0.0
    %318 = vmatmul.mubr.f32.gmra.mrb[0].mxu0 %v118
    %v319 = vpop.f32.mrb[0].mxu0
    %v320 = vadd.f32 %v78, %v319
    %v321 = vpop.f32.mrb[0].mxu0
    %322 = vmatprep.mubr.f32.mxu0 0.0
    %323 = vmatmul.mubr.f32.gmra.mrb[0].mxu0 %v121
    %v324 = vpop.f32.mrb[0].mxu0
    %v325 = vadd.f32 %v78, %v324
    %v326 = vpop.f32.mrb[0].mxu0
    %327 = vmatprep.mubr.f32.mxu0 0.0
    %328 = vmatmul.mubr.f32.gmra.mrb[0].mxu0 %v124
    %v329 = vpop.f32.mrb[0].mxu0
    %v330 = vadd.f32 %v78, %v329
    %v331 = vpop.f32.mrb[0].mxu0
    %332 = vmatprep.mubr.f32.mxu0 0.0
    %333 = vmatmul.mubr.f32.gmra.mrb[0].mxu0 %v127
    %v334 = vpop.f32.mrb[0].mxu0
    %v335 = vadd.f32 %v78, %v334
    %v336 = vpop.f32.mrb[0].mxu0
    %337 = vmatprep.mubr.f32.mxu0 0.0
    %338 = vmatmul.mubr.f32.gmra.mrb[0].mxu0 %v130
    %v339 = vpop.f32.mrb[0].mxu0
    %v340 = vadd.f32 %v78, %v339
    %v341 = vpop.f32.mrb[0].mxu0
    %342 = vmatprep.mubr.f32.mxu0 0.0
    %343 = vmatmul.mubr.f32.gmra.mrb[0].mxu0 %v133
    %v344 = vpop.f32.mrb[0].mxu0
    %v345 = vadd.f32 %v78, %v344
    %v346 = vpop.f32.mrb[0].mxu0
    %347 = vmatprep.mubr.f32.mxu0 0.0
    %348 = vmatmul.mubr.f32.gmra.mrb[0].mxu0 %v136
    %v349 = vpop.f32.mrb[0].mxu0
    %v350 = vadd.f32 %v78, %v349
    %v351 = vpop.f32.mrb[0].mxu0
    %352 = vmatprep.mubr.f32.mxu0 0.0
    %353 = vmatmul.mubr.f32.gmra.mrb[0].mxu0 %v139
    %v354 = vpop.f32.mrb[0].mxu0
    %v355 = vadd.f32 %v78, %v354
    %v356 = vpop.f32.mrb[0].mxu0
    %357 = vmatprep.mubr.f32.mxu0 0.0
    %358 = vmatmul.mubr.f32.gmra.mrb[0].mxu0 %v142
    %v359 = vpop.f32.mrb[0].mxu0
    %v360 = vadd.f32 %v78, %v359
    %v361 = vpop.f32.mrb[0].mxu0
    %362 = vmatprep.mubr.f32.mxu0 0.0
    %363 = vmatmul.mubr.f32.gmra.mrb[0].mxu0 %v145
    %v364 = vpop.f32.mrb[0].mxu0
    %v365 = vadd.f32 %v78, %v364
    %v366 = vpop.f32.mrb[0].mxu0
    %367 = vmatprep.mubr.f32.mxu0 0.0
    %368 = vmatmul.mubr.f32.gmra.mrb[0].mxu0 %v148
    %v369 = vpop.f32.mrb[0].mxu0
    %v370 = vadd.f32 %v78, %v369
    %v371 = vpop.f32.mrb[0].mxu0
    %372 = vmatprep.mubr.f32.mxu0 0.0
    %373 = vmatmul.mubr.f32.gmra.mrb[0].mxu0 %v151
    %v374 = vpop.f32.mrb[0].mxu0
    %v375 = vadd.f32 %v78, %v374
    %v376 = vpop.f32.mrb[0].mxu0
    %377 = vmatprep.mubr.f32.mxu0 0.0
    %378 = vmatmul.mubr.f32.gmra.mrb[0].mxu0 %v154
    %v379 = vpop.f32.mrb[0].mxu0
    %v380 = vadd.f32 %v78, %v379
    %v381 = vpop.f32.mrb[0].mxu0
    %382 = vmatprep.mubr.f32.mxu0 0.0
    %383 = vmatmul.mubr.f32.gmra.mrb[0].mxu0 %v157
    %v384 = vpop.f32.mrb[0].mxu0
    %v385 = vadd.f32 %v78, %v384
    %v386 = vpop.f32.mrb[0].mxu0
    %387 = vmatprep.mubr.f32.mxu0 0.0
    %388 = vmatmul.mubr.f32.gmra.mrb[0].mxu0 %v160
    %v389 = vpop.f32.mrb[0].mxu0
    %v390 = vadd.f32 %v78, %v389
    %v391 = vpop.f32.mrb[0].mxu0
    %392 = vmatprep.mubr.f32.mxu0 0.0
    %393 = vmatmul.mubr.f32.gmra.mrb[0].mxu0 %v163
    %v394 = vpop.f32.mrb[0].mxu0
    %v395 = vadd.f32 %v78, %v394
    %v396 = vpop.f32.mrb[0].mxu0
    %397 = vmatprep.mubr.f32.mxu0 0.0
    %398 = vmatmul.mubr.f32.gmra.mrb[0].mxu0 %v166
    %v399 = vpop.f32.mrb[0].mxu0
    %v400 = vadd.f32 %v78, %v399
    %v401 = vpop.f32.mrb[0].mxu0
    %402 = vmatprep.mubr.f32.mxu0 0.0
    %403 = vmatmul.mubr.f32.gmra.mrb[0].mxu0 %v169
    %v404 = vpop.f32.mrb[0].mxu0
    %v405 = vadd.f32 %v78, %v404
    %v406 = vpop.f32.mrb[0].mxu0
    %407 = vmatprep.mubr.f32.mxu0 0.0
    %408 = vmatmul.mubr.f32.gmra.mrb[0].mxu0 %v172
    %v409 = vpop.f32.mrb[0].mxu0
    %v410 = vadd.f32 %v78, %v409
    %v411 = vpop.f32.mrb[0].mxu0
    %412 = vmatprep.mubr.f32.mxu0 0.0
    %413 = vmatmul.mubr.f32.gmra.mrb[0].mxu0 %v175
    %v414 = vpop.f32.mrb[0].mxu0
    %v415 = vadd.f32 %v78, %v414
    %v416 = vpop.f32.mrb[0].mxu0
    %417 = vmatprep.mubr.f32.mxu0 0.0
    %418 = vmatmul.mubr.f32.gmra.mrb[0].mxu0 %v178
    %v419 = vpop.f32.mrb[0].mxu0
    %v420 = vadd.f32 %v78, %v419
    %v421 = vpop.f32.mrb[0].mxu0
    %422 = vmatprep.mubr.f32.mxu0 0.0
    %423 = vmatmul.mubr.f32.gmra.mrb[0].mxu0 %v181
    %v424 = vpop.f32.mrb[0].mxu0
    %v425 = vadd.f32 %v78, %v424
    %v426 = vpop.f32.mrb[0].mxu0
    %427 = vmatprep.mubr.f32.mxu0 0.0
    %428 = vmatmul.mubr.f32.gmra.mrb[0].mxu0 %v184
    %v429 = vpop.f32.mrb[0].mxu0
    %v430 = vadd.f32 %v78, %v429
    %v431 = vpop.f32.mrb[0].mxu0
    %432 = vmatprep.mubr.f32.mxu0 0.0
    %433 = vmatmul.mubr.f32.gmra.mrb[0].mxu0 %v187
    %v434 = vpop.f32.mrb[0].mxu0
    %v435 = vadd.f32 %v78, %v434
    %v436 = vpop.f32.mrb[0].mxu0
    %437 = vdwg.mxu0
    %v438 = vmax.f32 %v260, 0.0
    %v439 = vmax.f32 %v265, 0.0
    %v440 = vmax.f32 %v270, 0.0
    %v441 = vmax.f32 %v275, 0.0
    %v442 = vmax.f32 %v280, 0.0
    %v443 = vmax.f32 %v285, 0.0
    %v444 = vmax.f32 %v290, 0.0
    %v445 = vmax.f32 %v295, 0.0
    %v446 = vmax.f32 %v300, 0.0
    %v447 = vmax.f32 %v305, 0.0
    %v448 = vmax.f32 %v310, 0.0
    %v449 = vmax.f32 %v315, 0.0
    %v450 = vmax.f32 %v320, 0.0
    %v451 = vmax.f32 %v325, 0.0
    %v452 = vmax.f32 %v330, 0.0
    %v453 = vmax.f32 %v335, 0.0
    %v454 = vmax.f32 %v340, 0.0
    %v455 = vmax.f32 %v345, 0.0
    %v456 = vmax.f32 %v350, 0.0
    %v457 = vmax.f32 %v355, 0.0
    %v458 = vmax.f32 %v360, 0.0
    %v459 = vmax.f32 %v365, 0.0
    %v460 = vmax.f32 %v370, 0.0
    %v461 = vmax.f32 %v375, 0.0
    %v462 = vmax.f32 %v380, 0.0
    %v463 = vmax.f32 %v385, 0.0
    %v464 = vmax.f32 %v390, 0.0
    %v465 = vmax.f32 %v395, 0.0
    %v466 = vmax.f32 %v400, 0.0
    %v467 = vmax.f32 %v405, 0.0
    %v468 = vmax.f32 %v410, 0.0
    %v469 = vmax.f32 %v415, 0.0
    %v470 = vmax.f32 %v420, 0.0
    %v471 = vmax.f32 %v425, 0.0
    %v472 = vmax.f32 %v430, 0.0
    %v473 = vmax.f32 %v435, 0.0
    %v474 = vmax.f32 %v438, %v447
    %v475 = vmax.f32 %v439, %v448
    %v476 = vmax.f32 %v440, %v449
    %v477 = vmax.f32 %v441, %v450
    %v478 = vmax.f32 %v442, %v451
    %v479 = vmax.f32 %v443, %v452
    %v480 = vmax.f32 %v444, %v453
    %v481 = vmax.f32 %v445, %v454
    %v482 = vmax.f32 %v446, %v455
    %v483 = vmax.f32 %v456, %v465
    %v484 = vmax.f32 %v457, %v466
    %v485 = vmax.f32 %v458, %v467
    %v486 = vmax.f32 %v459, %v468
    %v487 = vmax.f32 %v460, %v469
    %v488 = vmax.f32 %v461, %v470
    %v489 = vmax.f32 %v462, %v471
    %v490 = vmax.f32 %v463, %v472
    %v491 = vmax.f32 %v464, %v473
    %v492 = vmax.f32 %v474, %v483
    %v493 = vmax.f32 %v475, %v484
    %v494 = vmax.f32 %v476, %v485
    %v495 = vmax.f32 %v477, %v486
    %v496 = vmax.f32 %v478, %v487
    %v497 = vmax.f32 %v479, %v488
    %v498 = vmax.f32 %v480, %v489
    %v499 = vmax.f32 %v481, %v490
    %v500 = vmax.f32 %v482, %v491
    %501 = vst [vmem:[#allocation2] sm:$0xff] %v492
    %502 = vst [vmem:[#allocation2 + $0x8] sm:$0xff] %v493
    %503 = vst [vmem:[#allocation2 + $0x10] sm:$0xff] %v494
    %504 = vst [vmem:[#allocation2 + $0x18] sm:$0xff] %v495
    %505 = vst [vmem:[#allocation2 + $0x20] sm:$0xff] %v496
    %506 = vst [vmem:[#allocation2 + $0x28] sm:$0xff] %v497
    %507 = vst [vmem:[#allocation2 + $0x30] sm:$0xff] %v498
    %508 = vst [vmem:[#allocation2 + $0x38] sm:$0xff] %v499
    %509 = vst [vmem:[#allocation2 + $0x40] sm:$0xff] %v500
    %v510 = vld [vmem:[#allocation2] sm:$0xf]
    %v511 = vld [vmem:[%s3] sm:$0xff]
    %v512 = vld [vmem:[%s3 + $0x8] sm:$0x3]
    %v513 = vld [vmem:[#allocation2 + $0x2] sm:$0xf]
    %s514 = scalar_lea.vmem %s3, 16
    %v515 = vld [vmem:[%s514] sm:$0xff]
    %v516 = vld [vmem:[%s514 + $0x8] sm:$0x3]
    %vm517 = vcmask 80896
    %v519 = vsel %vm517, %v513, 0
    %vm521 = vcmask 1041408
    %v523 = vsel %vm521, %v516, 0
    %525 = vmatprep.subr.mxu0 0.0
    %526 = vmatpush1.msra.mxu0 %v515
    %527 = vmatprep.subr.mxu0 0.0
    %528 = vmatpush1.msra.mxu0 %v523
    %529 = vmatprep.subr.mxu0 0.0
    %530 = vmatpush1.msra.mxu0 0.0
    %531 = vmatprep.subr.mxu0 0.0
    %532 = vmatpush1.msra.mxu0 0.0
    %533 = vmatprep.subr.mxu0 0.0
    %534 = vmatpush1.msra.mxu0 0.0
    %535 = vmatprep.subr.mxu0 0.0
    %536 = vmatpush1.msra.mxu0 0.0
    %537 = vmatprep.subr.mxu0 0.0
    %538 = vmatpush1.msra.mxu0 0.0
    %539 = vmatprep.subr.mxu0 0.0
    %540 = vmatpush1.msra.mxu0 0.0
    %541 = vmatprep.subr.mxu0 0.0
    %542 = vmatpush1.msra.mxu0 0.0
    %543 = vmatprep.subr.mxu0 0.0
    %544 = vmatpush1.msra.mxu0 0.0
    %545 = vmatprep.subr.mxu0 0.0
    %546 = vmatpush1.msra.mxu0 0.0
    %547 = vmatprep.subr.mxu0 0.0
    %548 = vmatpush1.msra.mxu0 0.0
    %549 = vmatprep.subr.mxu0 0.0
    %550 = vmatpush1.msra.mxu0 0.0
    %551 = vmatprep.subr.mxu0 0.0
    %552 = vmatpush1.msra.mxu0 0.0
    %553 = vmatprep.subr.mxu0 0.0
    %554 = vmatpush1.msra.mxu0 0.0
    %555 = vmatprep.subr.mxu0 0.0
    %556 = vmatpush1.msra.mxu0 0.0
    %557 = vmatprep.subr.mxu0 0.0
    %558 = vmatpush1.msra.mxu0 0.0
    %559 = vmatprep.subr.mxu0 0.0
    %560 = vmatpush1.msra.mxu0 0.0
    %561 = vmatprep.subr.mxu0 0.0
    %562 = vmatpush1.msra.mxu0 0.0
    %563 = vmatprep.subr.mxu0 0.0
    %564 = vmatpush1.msra.mxu0 0.0
    %565 = vmatprep.subr.mxu0 0.0
    %566 = vmatpush1.msra.mxu0 0.0
    %567 = vmatprep.subr.mxu0 0.0
    %568 = vmatpush1.msra.mxu0 0.0
    %569 = vmatprep.subr.mxu0 0.0
    %570 = vmatpush1.msra.mxu0 0.0
    %571 = vmatprep.subr.mxu0 0.0
    %572 = vmatpush1.msra.mxu0 0.0
    %573 = vmatprep.subr.mxu0 0.0
    %574 = vmatpush1.msra.mxu0 0.0
    %575 = vmatprep.subr.mxu0 0.0
    %576 = vmatpush1.msra.mxu0 0.0
    %577 = vmatprep.subr.mxu0 0.0
    %578 = vmatpush1.msra.mxu0 0.0
    %579 = vmatprep.subr.mxu0 0.0
    %580 = vmatpush1.msra.mxu0 0.0
    %581 = vmatprep.subr.mxu0 0.0
    %582 = vmatpush1.msra.mxu0 0.0
    %583 = vmatprep.subr.mxu0 0.0
    %584 = vmatpush1.msra.mxu0 0.0
    %585 = vmatprep.subr.mxu0 0.0
    %586 = vmatpush1.msra.mxu0 0.0
    %587 = vmatprep.subr.mxu0 0.0
    %588 = vmatpush1.msra.mxu0 0.0
    %589 = vmatprep.mubr.f32.mxu0 0.0
    %590 = vmatmul.mubr.f32.gmra.mrb[0].mxu0 %v519
    %v591 = vpop.f32.mrb[0].mxu0
    %v592 = vadd.f32 0.0, %v591
    %v593 = vpop.f32.mrb[0].mxu0
    %594 = vdwg.mxu0
    %v596 = vsel %vm517, %v510, 0
    %v599 = vsel %vm521, %v512, 0
    %601 = vmatprep.subr.mxu0 0.0
    %602 = vmatpush1.msra.mxu0 %v511
    %603 = vmatprep.subr.mxu0 0.0
    %604 = vmatpush1.msra.mxu0 %v599
    %605 = vmatprep.subr.mxu0 0.0
    %606 = vmatpush1.msra.mxu0 0.0
    %607 = vmatprep.subr.mxu0 0.0
    %608 = vmatpush1.msra.mxu0 0.0
    %609 = vmatprep.subr.mxu0 0.0
    %610 = vmatpush1.msra.mxu0 0.0
    %611 = vmatprep.subr.mxu0 0.0
    %612 = vmatpush1.msra.mxu0 0.0
    %613 = vmatprep.subr.mxu0 0.0
    %614 = vmatpush1.msra.mxu0 0.0
    %615 = vmatprep.subr.mxu0 0.0
    %616 = vmatpush1.msra.mxu0 0.0
    %617 = vmatprep.subr.mxu0 0.0
    %618 = vmatpush1.msra.mxu0 0.0
    %619 = vmatprep.subr.mxu0 0.0
    %620 = vmatpush1.msra.mxu0 0.0
    %621 = vmatprep.subr.mxu0 0.0
    %622 = vmatpush1.msra.mxu0 0.0
    %623 = vmatprep.subr.mxu0 0.0
    %624 = vmatpush1.msra.mxu0 0.0
    %625 = vmatprep.subr.mxu0 0.0
    %626 = vmatpush1.msra.mxu0 0.0
    %627 = vmatprep.subr.mxu0 0.0
    %628 = vmatpush1.msra.mxu0 0.0
    %629 = vmatprep.subr.mxu0 0.0
    %630 = vmatpush1.msra.mxu0 0.0
    %631 = vmatprep.subr.mxu0 0.0
    %632 = vmatpush1.msra.mxu0 0.0
    %633 = vmatprep.subr.mxu0 0.0
    %634 = vmatpush1.msra.mxu0 0.0
    %635 = vmatprep.subr.mxu0 0.0
    %636 = vmatpush1.msra.mxu0 0.0
    %637 = vmatprep.subr.mxu0 0.0
    %638 = vmatpush1.msra.mxu0 0.0
    %639 = vmatprep.subr.mxu0 0.0
    %640 = vmatpush1.msra.mxu0 0.0
    %641 = vmatprep.subr.mxu0 0.0
    %642 = vmatpush1.msra.mxu0 0.0
    %643 = vmatprep.subr.mxu0 0.0
    %644 = vmatpush1.msra.mxu0 0.0
    %645 = vmatprep.subr.mxu0 0.0
    %646 = vmatpush1.msra.mxu0 0.0
    %647 = vmatprep.subr.mxu0 0.0
    %648 = vmatpush1.msra.mxu0 0.0
    %649 = vmatprep.subr.mxu0 0.0
    %650 = vmatpush1.msra.mxu0 0.0
    %651 = vmatprep.subr.mxu0 0.0
    %652 = vmatpush1.msra.mxu0 0.0
    %653 = vmatprep.subr.mxu0 0.0
    %654 = vmatpush1.msra.mxu0 0.0
    %655 = vmatprep.subr.mxu0 0.0
    %656 = vmatpush1.msra.mxu0 0.0
    %657 = vmatprep.subr.mxu0 0.0
    %658 = vmatpush1.msra.mxu0 0.0
    %659 = vmatprep.subr.mxu0 0.0
    %660 = vmatpush1.msra.mxu0 0.0
    %661 = vmatprep.subr.mxu0 0.0
    %662 = vmatpush1.msra.mxu0 0.0
    %663 = vmatprep.subr.mxu0 0.0
    %664 = vmatpush1.msra.mxu0 0.0
    %665 = vmatprep.mubr.f32.mxu0 0.0
    %666 = vmatmul.mubr.f32.gmra.mrb[0].mxu0 %v596
    %v667 = vpop.f32.mrb[0].mxu0
    %v668 = vadd.f32 %v592, %v667
    %v669 = vpop.f32.mrb[0].mxu0
    %670 = vdwg.mxu0
    %v671 = vld [vmem:[#allocation2 + $0x4] sm:$0xf]
    %s672 = scalar_lea.vmem %s3, 32
    %v673 = vld [vmem:[%s672] sm:$0xff]
    %v674 = vld [vmem:[%s672 + $0x8] sm:$0x3]
    %v676 = vsel %vm517, %v671, 0
    %v679 = vsel %vm521, %v674, 0
    %681 = vmatprep.subr.mxu0 0.0
    %682 = vmatpush1.msra.mxu0 %v673
    %683 = vmatprep.subr.mxu0 0.0
    %684 = vmatpush1.msra.mxu0 %v679
    %685 = vmatprep.subr.mxu0 0.0
    %686 = vmatpush1.msra.mxu0 0.0
    %687 = vmatprep.subr.mxu0 0.0
    %688 = vmatpush1.msra.mxu0 0.0
    %689 = vmatprep.subr.mxu0 0.0
    %690 = vmatpush1.msra.mxu0 0.0
    %691 = vmatprep.subr.mxu0 0.0
    %692 = vmatpush1.msra.mxu0 0.0
    %693 = vmatprep.subr.mxu0 0.0
    %694 = vmatpush1.msra.mxu0 0.0
    %695 = vmatprep.subr.mxu0 0.0
    %696 = vmatpush1.msra.mxu0 0.0
    %697 = vmatprep.subr.mxu0 0.0
    %698 = vmatpush1.msra.mxu0 0.0
    %699 = vmatprep.subr.mxu0 0.0
    %700 = vmatpush1.msra.mxu0 0.0
    %701 = vmatprep.subr.mxu0 0.0
    %702 = vmatpush1.msra.mxu0 0.0
    %703 = vmatprep.subr.mxu0 0.0
    %704 = vmatpush1.msra.mxu0 0.0
    %705 = vmatprep.subr.mxu0 0.0
    %706 = vmatpush1.msra.mxu0 0.0
    %707 = vmatprep.subr.mxu0 0.0
    %708 = vmatpush1.msra.mxu0 0.0
    %709 = vmatprep.subr.mxu0 0.0
    %710 = vmatpush1.msra.mxu0 0.0
    %711 = vmatprep.subr.mxu0 0.0
    %712 = vmatpush1.msra.mxu0 0.0
    %713 = vmatprep.subr.mxu0 0.0
    %714 = vmatpush1.msra.mxu0 0.0
    %715 = vmatprep.subr.mxu0 0.0
    %716 = vmatpush1.msra.mxu0 0.0
    %717 = vmatprep.subr.mxu0 0.0
    %718 = vmatpush1.msra.mxu0 0.0
    %719 = vmatprep.subr.mxu0 0.0
    %720 = vmatpush1.msra.mxu0 0.0
    %721 = vmatprep.subr.mxu0 0.0
    %722 = vmatpush1.msra.mxu0 0.0
    %723 = vmatprep.subr.mxu0 0.0
    %724 = vmatpush1.msra.mxu0 0.0
    %725 = vmatprep.subr.mxu0 0.0
    %726 = vmatpush1.msra.mxu0 0.0
    %727 = vmatprep.subr.mxu0 0.0
    %728 = vmatpush1.msra.mxu0 0.0
    %729 = vmatprep.subr.mxu0 0.0
    %730 = vmatpush1.msra.mxu0 0.0
    %731 = vmatprep.subr.mxu0 0.0
    %732 = vmatpush1.msra.mxu0 0.0
    %733 = vmatprep.subr.mxu0 0.0
    %734 = vmatpush1.msra.mxu0 0.0
    %735 = vmatprep.subr.mxu0 0.0
    %736 = vmatpush1.msra.mxu0 0.0
    %737 = vmatprep.subr.mxu0 0.0
    %738 = vmatpush1.msra.mxu0 0.0
    %739 = vmatprep.subr.mxu0 0.0
    %740 = vmatpush1.msra.mxu0 0.0
    %741 = vmatprep.subr.mxu0 0.0
    %742 = vmatpush1.msra.mxu0 0.0
    %743 = vmatprep.subr.mxu0 0.0
    %744 = vmatpush1.msra.mxu0 0.0
    %745 = vmatprep.mubr.f32.mxu0 0.0
    %746 = vmatmul.mubr.f32.gmra.mrb[0].mxu0 %v676
    %v747 = vpop.f32.mrb[0].mxu0
    %v748 = vadd.f32 0.0, %v747
    %v749 = vpop.f32.mrb[0].mxu0
    %750 = vdwg.mxu0
    %v751 = vadd.f32 %v668, %v748
    %v752 = vld [vmem:[#allocation2 + $0x6] sm:$0xf]
    %s753 = scalar_lea.vmem %s3, 48
    %v754 = vld [vmem:[%s753] sm:$0xff]
    %v755 = vld [vmem:[%s753 + $0x8] sm:$0x3]
    %v757 = vsel %vm517, %v752, 0
    %v760 = vsel %vm521, %v755, 0
    %762 = vmatprep.subr.mxu0 0.0
    %763 = vmatpush1.msra.mxu0 %v754
    %764 = vmatprep.subr.mxu0 0.0
    %765 = vmatpush1.msra.mxu0 %v760
    %766 = vmatprep.subr.mxu0 0.0
    %767 = vmatpush1.msra.mxu0 0.0
    %768 = vmatprep.subr.mxu0 0.0
    %769 = vmatpush1.msra.mxu0 0.0
    %770 = vmatprep.subr.mxu0 0.0
    %771 = vmatpush1.msra.mxu0 0.0
    %772 = vmatprep.subr.mxu0 0.0
    %773 = vmatpush1.msra.mxu0 0.0
    %774 = vmatprep.subr.mxu0 0.0
    %775 = vmatpush1.msra.mxu0 0.0
    %776 = vmatprep.subr.mxu0 0.0
    %777 = vmatpush1.msra.mxu0 0.0
    %778 = vmatprep.subr.mxu0 0.0
    %779 = vmatpush1.msra.mxu0 0.0
    %780 = vmatprep.subr.mxu0 0.0
    %781 = vmatpush1.msra.mxu0 0.0
    %782 = vmatprep.subr.mxu0 0.0
    %783 = vmatpush1.msra.mxu0 0.0
    %784 = vmatprep.subr.mxu0 0.0
    %785 = vmatpush1.msra.mxu0 0.0
    %786 = vmatprep.subr.mxu0 0.0
    %787 = vmatpush1.msra.mxu0 0.0
    %788 = vmatprep.subr.mxu0 0.0
    %789 = vmatpush1.msra.mxu0 0.0
    %790 = vmatprep.subr.mxu0 0.0
    %791 = vmatpush1.msra.mxu0 0.0
    %792 = vmatprep.subr.mxu0 0.0
    %793 = vmatpush1.msra.mxu0 0.0
    %794 = vmatprep.subr.mxu0 0.0
    %795 = vmatpush1.msra.mxu0 0.0
    %796 = vmatprep.subr.mxu0 0.0
    %797 = vmatpush1.msra.mxu0 0.0
    %798 = vmatprep.subr.mxu0 0.0
    %799 = vmatpush1.msra.mxu0 0.0
    %800 = vmatprep.subr.mxu0 0.0
    %801 = vmatpush1.msra.mxu0 0.0
    %802 = vmatprep.subr.mxu0 0.0
    %803 = vmatpush1.msra.mxu0 0.0
    %804 = vmatprep.subr.mxu0 0.0
    %805 = vmatpush1.msra.mxu0 0.0
    %806 = vmatprep.subr.mxu0 0.0
    %807 = vmatpush1.msra.mxu0 0.0
    %808 = vmatprep.subr.mxu0 0.0
    %809 = vmatpush1.msra.mxu0 0.0
    %810 = vmatprep.subr.mxu0 0.0
    %811 = vmatpush1.msra.mxu0 0.0
    %812 = vmatprep.subr.mxu0 0.0
    %813 = vmatpush1.msra.mxu0 0.0
    %814 = vmatprep.subr.mxu0 0.0
    %815 = vmatpush1.msra.mxu0 0.0
    %816 = vmatprep.subr.mxu0 0.0
    %817 = vmatpush1.msra.mxu0 0.0
    %818 = vmatprep.subr.mxu0 0.0
    %819 = vmatpush1.msra.mxu0 0.0
    %820 = vmatprep.subr.mxu0 0.0
    %821 = vmatpush1.msra.mxu0 0.0
    %822 = vmatprep.subr.mxu0 0.0
    %823 = vmatpush1.msra.mxu0 0.0
    %824 = vmatprep.subr.mxu0 0.0
    %825 = vmatpush1.msra.mxu0 0.0
    %826 = vmatprep.mubr.f32.mxu0 0.0
    %827 = vmatmul.mubr.f32.gmra.mrb[0].mxu0 %v757
    %v828 = vpop.f32.mrb[0].mxu0
    %v829 = vadd.f32 0.0, %v828
    %v830 = vpop.f32.mrb[0].mxu0
    %831 = vdwg.mxu0
    %v832 = vadd.f32 %v751, %v829
    %v833 = vld [vmem:[#allocation2 + $0x8] sm:$0xf]
    %s834 = scalar_lea.vmem %s3, 64
    %v835 = vld [vmem:[%s834] sm:$0xff]
    %v836 = vld [vmem:[%s834 + $0x8] sm:$0x3]
    %v838 = vsel %vm517, %v833, 0
    %v841 = vsel %vm521, %v836, 0
    %843 = vmatprep.subr.mxu0 0.0
    %844 = vmatpush1.msra.mxu0 %v835
    %845 = vmatprep.subr.mxu0 0.0
    %846 = vmatpush1.msra.mxu0 %v841
    %847 = vmatprep.subr.mxu0 0.0
    %848 = vmatpush1.msra.mxu0 0.0
    %849 = vmatprep.subr.mxu0 0.0
    %850 = vmatpush1.msra.mxu0 0.0
    %851 = vmatprep.subr.mxu0 0.0
    %852 = vmatpush1.msra.mxu0 0.0
    %853 = vmatprep.subr.mxu0 0.0
    %854 = vmatpush1.msra.mxu0 0.0
    %855 = vmatprep.subr.mxu0 0.0
    %856 = vmatpush1.msra.mxu0 0.0
    %857 = vmatprep.subr.mxu0 0.0
    %858 = vmatpush1.msra.mxu0 0.0
    %859 = vmatprep.subr.mxu0 0.0
    %860 = vmatpush1.msra.mxu0 0.0
    %861 = vmatprep.subr.mxu0 0.0
    %862 = vmatpush1.msra.mxu0 0.0
    %863 = vmatprep.subr.mxu0 0.0
    %864 = vmatpush1.msra.mxu0 0.0
    %865 = vmatprep.subr.mxu0 0.0
    %866 = vmatpush1.msra.mxu0 0.0
    %867 = vmatprep.subr.mxu0 0.0
    %868 = vmatpush1.msra.mxu0 0.0
    %869 = vmatprep.subr.mxu0 0.0
    %870 = vmatpush1.msra.mxu0 0.0
    %871 = vmatprep.subr.mxu0 0.0
    %872 = vmatpush1.msra.mxu0 0.0
    %873 = vmatprep.subr.mxu0 0.0
    %874 = vmatpush1.msra.mxu0 0.0
    %875 = vmatprep.subr.mxu0 0.0
    %876 = vmatpush1.msra.mxu0 0.0
    %877 = vmatprep.subr.mxu0 0.0
    %878 = vmatpush1.msra.mxu0 0.0
    %879 = vmatprep.subr.mxu0 0.0
    %880 = vmatpush1.msra.mxu0 0.0
    %881 = vmatprep.subr.mxu0 0.0
    %882 = vmatpush1.msra.mxu0 0.0
    %883 = vmatprep.subr.mxu0 0.0
    %884 = vmatpush1.msra.mxu0 0.0
    %885 = vmatprep.subr.mxu0 0.0
    %886 = vmatpush1.msra.mxu0 0.0
    %887 = vmatprep.subr.mxu0 0.0
    %888 = vmatpush1.msra.mxu0 0.0
    %889 = vmatprep.subr.mxu0 0.0
    %890 = vmatpush1.msra.mxu0 0.0
    %891 = vmatprep.subr.mxu0 0.0
    %892 = vmatpush1.msra.mxu0 0.0
    %893 = vmatprep.subr.mxu0 0.0
    %894 = vmatpush1.msra.mxu0 0.0
    %895 = vmatprep.subr.mxu0 0.0
    %896 = vmatpush1.msra.mxu0 0.0
    %897 = vmatprep.subr.mxu0 0.0
    %898 = vmatpush1.msra.mxu0 0.0
    %899 = vmatprep.subr.mxu0 0.0
    %900 = vmatpush1.msra.mxu0 0.0
    %901 = vmatprep.subr.mxu0 0.0
    %902 = vmatpush1.msra.mxu0 0.0
    %903 = vmatprep.subr.mxu0 0.0
    %904 = vmatpush1.msra.mxu0 0.0
    %905 = vmatprep.subr.mxu0 0.0
    %906 = vmatpush1.msra.mxu0 0.0
    %907 = vmatprep.mubr.f32.mxu0 0.0
    %908 = vmatmul.mubr.f32.gmra.mrb[0].mxu0 %v838
    %v909 = vpop.f32.mrb[0].mxu0
    %v910 = vadd.f32 0.0, %v909
    %v911 = vpop.f32.mrb[0].mxu0
    %912 = vdwg.mxu0
    %v913 = vadd.f32 %v832, %v910
    %v914 = vld [vmem:[#allocation2 + $0xc] sm:$0xf]
    %s915 = scalar_lea.vmem %s3, 80
    %v916 = vld [vmem:[%s915] sm:$0xff]
    %v917 = vld [vmem:[%s915 + $0x8] sm:$0x3]
    %v919 = vsel %vm517, %v914, 0
    %v922 = vsel %vm521, %v917, 0
    %924 = vmatprep.subr.mxu0 0.0
    %925 = vmatpush1.msra.mxu0 %v916
    %926 = vmatprep.subr.mxu0 0.0
    %927 = vmatpush1.msra.mxu0 %v922
    %928 = vmatprep.subr.mxu0 0.0
    %929 = vmatpush1.msra.mxu0 0.0
    %930 = vmatprep.subr.mxu0 0.0
    %931 = vmatpush1.msra.mxu0 0.0
    %932 = vmatprep.subr.mxu0 0.0
    %933 = vmatpush1.msra.mxu0 0.0
    %934 = vmatprep.subr.mxu0 0.0
    %935 = vmatpush1.msra.mxu0 0.0
    %936 = vmatprep.subr.mxu0 0.0
    %937 = vmatpush1.msra.mxu0 0.0
    %938 = vmatprep.subr.mxu0 0.0
    %939 = vmatpush1.msra.mxu0 0.0
    %940 = vmatprep.subr.mxu0 0.0
    %941 = vmatpush1.msra.mxu0 0.0
    %942 = vmatprep.subr.mxu0 0.0
    %943 = vmatpush1.msra.mxu0 0.0
    %944 = vmatprep.subr.mxu0 0.0
    %945 = vmatpush1.msra.mxu0 0.0
    %946 = vmatprep.subr.mxu0 0.0
    %947 = vmatpush1.msra.mxu0 0.0
    %948 = vmatprep.subr.mxu0 0.0
    %949 = vmatpush1.msra.mxu0 0.0
    %950 = vmatprep.subr.mxu0 0.0
    %951 = vmatpush1.msra.mxu0 0.0
    %952 = vmatprep.subr.mxu0 0.0
    %953 = vmatpush1.msra.mxu0 0.0
    %954 = vmatprep.subr.mxu0 0.0
    %955 = vmatpush1.msra.mxu0 0.0
    %956 = vmatprep.subr.mxu0 0.0
    %957 = vmatpush1.msra.mxu0 0.0
    %958 = vmatprep.subr.mxu0 0.0
    %959 = vmatpush1.msra.mxu0 0.0
    %960 = vmatprep.subr.mxu0 0.0
    %961 = vmatpush1.msra.mxu0 0.0
    %962 = vmatprep.subr.mxu0 0.0
    %963 = vmatpush1.msra.mxu0 0.0
    %964 = vmatprep.subr.mxu0 0.0
    %965 = vmatpush1.msra.mxu0 0.0
    %966 = vmatprep.subr.mxu0 0.0
    %967 = vmatpush1.msra.mxu0 0.0
    %968 = vmatprep.subr.mxu0 0.0
    %969 = vmatpush1.msra.mxu0 0.0
    %970 = vmatprep.subr.mxu0 0.0
    %971 = vmatpush1.msra.mxu0 0.0
    %972 = vmatprep.subr.mxu0 0.0
    %973 = vmatpush1.msra.mxu0 0.0
    %974 = vmatprep.subr.mxu0 0.0
    %975 = vmatpush1.msra.mxu0 0.0
    %976 = vmatprep.subr.mxu0 0.0
    %977 = vmatpush1.msra.mxu0 0.0
    %978 = vmatprep.subr.mxu0 0.0
    %979 = vmatpush1.msra.mxu0 0.0
    %980 = vmatprep.subr.mxu0 0.0
    %981 = vmatpush1.msra.mxu0 0.0
    %982 = vmatprep.subr.mxu0 0.0
    %983 = vmatpush1.msra.mxu0 0.0
    %984 = vmatprep.subr.mxu0 0.0
    %985 = vmatpush1.msra.mxu0 0.0
    %986 = vmatprep.subr.mxu0 0.0
    %987 = vmatpush1.msra.mxu0 0.0
    %988 = vmatprep.mubr.f32.mxu0 0.0
    %989 = vmatmul.mubr.f32.gmra.mrb[0].mxu0 %v919
    %v990 = vpop.f32.mrb[0].mxu0
    %v991 = vadd.f32 0.0, %v990
    %v992 = vpop.f32.mrb[0].mxu0
    %993 = vdwg.mxu0
    %v994 = vadd.f32 %v913, %v991
    %v995 = vld [vmem:[#allocation2 + $0xe] sm:$0xf]
    %s996 = scalar_lea.vmem %s3, 96
    %v997 = vld [vmem:[%s996] sm:$0xff]
    %v998 = vld [vmem:[%s996 + $0x8] sm:$0x3]
    %v1000 = vsel %vm517, %v995, 0
    %v1003 = vsel %vm521, %v998, 0
    %1005 = vmatprep.subr.mxu0 0.0
    %1006 = vmatpush1.msra.mxu0 %v997
    %1007 = vmatprep.subr.mxu0 0.0
    %1008 = vmatpush1.msra.mxu0 %v1003
    %1009 = vmatprep.subr.mxu0 0.0
    %1010 = vmatpush1.msra.mxu0 0.0
    %1011 = vmatprep.subr.mxu0 0.0
    %1012 = vmatpush1.msra.mxu0 0.0
    %1013 = vmatprep.subr.mxu0 0.0
    %1014 = vmatpush1.msra.mxu0 0.0
    %1015 = vmatprep.subr.mxu0 0.0
    %1016 = vmatpush1.msra.mxu0 0.0
    %1017 = vmatprep.subr.mxu0 0.0
    %1018 = vmatpush1.msra.mxu0 0.0
    %1019 = vmatprep.subr.mxu0 0.0
    %1020 = vmatpush1.msra.mxu0 0.0
    %1021 = vmatprep.subr.mxu0 0.0
    %1022 = vmatpush1.msra.mxu0 0.0
    %1023 = vmatprep.subr.mxu0 0.0
    %1024 = vmatpush1.msra.mxu0 0.0
    %1025 = vmatprep.subr.mxu0 0.0
    %1026 = vmatpush1.msra.mxu0 0.0
    %1027 = vmatprep.subr.mxu0 0.0
    %1028 = vmatpush1.msra.mxu0 0.0
    %1029 = vmatprep.subr.mxu0 0.0
    %1030 = vmatpush1.msra.mxu0 0.0
    %1031 = vmatprep.subr.mxu0 0.0
    %1032 = vmatpush1.msra.mxu0 0.0
    %1033 = vmatprep.subr.mxu0 0.0
    %1034 = vmatpush1.msra.mxu0 0.0
    %1035 = vmatprep.subr.mxu0 0.0
    %1036 = vmatpush1.msra.mxu0 0.0
    %1037 = vmatprep.subr.mxu0 0.0
    %1038 = vmatpush1.msra.mxu0 0.0
    %1039 = vmatprep.subr.mxu0 0.0
    %1040 = vmatpush1.msra.mxu0 0.0
    %1041 = vmatprep.subr.mxu0 0.0
    %1042 = vmatpush1.msra.mxu0 0.0
    %1043 = vmatprep.subr.mxu0 0.0
    %1044 = vmatpush1.msra.mxu0 0.0
    %1045 = vmatprep.subr.mxu0 0.0
    %1046 = vmatpush1.msra.mxu0 0.0
    %1047 = vmatprep.subr.mxu0 0.0
    %1048 = vmatpush1.msra.mxu0 0.0
    %1049 = vmatprep.subr.mxu0 0.0
    %1050 = vmatpush1.msra.mxu0 0.0
    %1051 = vmatprep.subr.mxu0 0.0
    %1052 = vmatpush1.msra.mxu0 0.0
    %1053 = vmatprep.subr.mxu0 0.0
    %1054 = vmatpush1.msra.mxu0 0.0
    %1055 = vmatprep.subr.mxu0 0.0
    %1056 = vmatpush1.msra.mxu0 0.0
    %1057 = vmatprep.subr.mxu0 0.0
    %1058 = vmatpush1.msra.mxu0 0.0
    %1059 = vmatprep.subr.mxu0 0.0
    %1060 = vmatpush1.msra.mxu0 0.0
    %1061 = vmatprep.subr.mxu0 0.0
    %1062 = vmatpush1.msra.mxu0 0.0
    %1063 = vmatprep.subr.mxu0 0.0
    %1064 = vmatpush1.msra.mxu0 0.0
    %1065 = vmatprep.subr.mxu0 0.0
    %1066 = vmatpush1.msra.mxu0 0.0
    %1067 = vmatprep.subr.mxu0 0.0
    %1068 = vmatpush1.msra.mxu0 0.0
    %1069 = vmatprep.mubr.f32.mxu0 0.0
    %1070 = vmatmul.mubr.f32.gmra.mrb[0].mxu0 %v1000
    %v1071 = vpop.f32.mrb[0].mxu0
    %v1072 = vadd.f32 0.0, %v1071
    %v1073 = vpop.f32.mrb[0].mxu0
    %1074 = vdwg.mxu0
    %v1075 = vadd.f32 %v994, %v1072
    %v1076 = vld [vmem:[#allocation2 + $0x10] sm:$0xf]
    %s1077 = scalar_lea.vmem %s3, 112
    %v1078 = vld [vmem:[%s1077] sm:$0xff]
    %v1079 = vld [vmem:[%s1077 + $0x8] sm:$0x3]
    %v1081 = vsel %vm517, %v1076, 0
    %v1084 = vsel %vm521, %v1079, 0
    %1086 = vmatprep.subr.mxu0 0.0
    %1087 = vmatpush1.msra.mxu0 %v1078
    %1088 = vmatprep.subr.mxu0 0.0
    %1089 = vmatpush1.msra.mxu0 %v1084
    %1090 = vmatprep.subr.mxu0 0.0
    %1091 = vmatpush1.msra.mxu0 0.0
    %1092 = vmatprep.subr.mxu0 0.0
    %1093 = vmatpush1.msra.mxu0 0.0
    %1094 = vmatprep.subr.mxu0 0.0
    %1095 = vmatpush1.msra.mxu0 0.0
    %1096 = vmatprep.subr.mxu0 0.0
    %1097 = vmatpush1.msra.mxu0 0.0
    %1098 = vmatprep.subr.mxu0 0.0
    %1099 = vmatpush1.msra.mxu0 0.0
    %1100 = vmatprep.subr.mxu0 0.0
    %1101 = vmatpush1.msra.mxu0 0.0
    %1102 = vmatprep.subr.mxu0 0.0
    %1103 = vmatpush1.msra.mxu0 0.0
    %1104 = vmatprep.subr.mxu0 0.0
    %1105 = vmatpush1.msra.mxu0 0.0
    %1106 = vmatprep.subr.mxu0 0.0
    %1107 = vmatpush1.msra.mxu0 0.0
    %1108 = vmatprep.subr.mxu0 0.0
    %1109 = vmatpush1.msra.mxu0 0.0
    %1110 = vmatprep.subr.mxu0 0.0
    %1111 = vmatpush1.msra.mxu0 0.0
    %1112 = vmatprep.subr.mxu0 0.0
    %1113 = vmatpush1.msra.mxu0 0.0
    %1114 = vmatprep.subr.mxu0 0.0
    %1115 = vmatpush1.msra.mxu0 0.0
    %1116 = vmatprep.subr.mxu0 0.0
    %1117 = vmatpush1.msra.mxu0 0.0
    %1118 = vmatprep.subr.mxu0 0.0
    %1119 = vmatpush1.msra.mxu0 0.0
    %1120 = vmatprep.subr.mxu0 0.0
    %1121 = vmatpush1.msra.mxu0 0.0
    %1122 = vmatprep.subr.mxu0 0.0
    %1123 = vmatpush1.msra.mxu0 0.0
    %1124 = vmatprep.subr.mxu0 0.0
    %1125 = vmatpush1.msra.mxu0 0.0
    %1126 = vmatprep.subr.mxu0 0.0
    %1127 = vmatpush1.msra.mxu0 0.0
    %1128 = vmatprep.subr.mxu0 0.0
    %1129 = vmatpush1.msra.mxu0 0.0
    %1130 = vmatprep.subr.mxu0 0.0
    %1131 = vmatpush1.msra.mxu0 0.0
    %1132 = vmatprep.subr.mxu0 0.0
    %1133 = vmatpush1.msra.mxu0 0.0
    %1134 = vmatprep.subr.mxu0 0.0
    %1135 = vmatpush1.msra.mxu0 0.0
    %1136 = vmatprep.subr.mxu0 0.0
    %1137 = vmatpush1.msra.mxu0 0.0
    %1138 = vmatprep.subr.mxu0 0.0
    %1139 = vmatpush1.msra.mxu0 0.0
    %1140 = vmatprep.subr.mxu0 0.0
    %1141 = vmatpush1.msra.mxu0 0.0
    %1142 = vmatprep.subr.mxu0 0.0
    %1143 = vmatpush1.msra.mxu0 0.0
    %1144 = vmatprep.subr.mxu0 0.0
    %1145 = vmatpush1.msra.mxu0 0.0
    %1146 = vmatprep.subr.mxu0 0.0
    %1147 = vmatpush1.msra.mxu0 0.0
    %1148 = vmatprep.subr.mxu0 0.0
    %1149 = vmatpush1.msra.mxu0 0.0
    %1150 = vmatprep.mubr.f32.mxu0 0.0
    %1151 = vmatmul.mubr.f32.gmra.mrb[0].mxu0 %v1081
    %v1152 = vpop.f32.mrb[0].mxu0
    %v1153 = vadd.f32 0.0, %v1152
    %v1154 = vpop.f32.mrb[0].mxu0
    %1155 = vdwg.mxu0
    %v1156 = vadd.f32 %v1075, %v1153
    %v1157 = vld [vmem:[#allocation2 + $0x12] sm:$0xf]
    %s1158 = scalar_lea.vmem %s3, 128
    %v1159 = vld [vmem:[%s1158] sm:$0xff]
    %v1160 = vld [vmem:[%s1158 + $0x8] sm:$0x3]
    %v1162 = vsel %vm517, %v1157, 0
    %v1165 = vsel %vm521, %v1160, 0
    %1167 = vmatprep.subr.mxu0 0.0
    %1168 = vmatpush1.msra.mxu0 %v1159
    %1169 = vmatprep.subr.mxu0 0.0
    %1170 = vmatpush1.msra.mxu0 %v1165
    %1171 = vmatprep.subr.mxu0 0.0
    %1172 = vmatpush1.msra.mxu0 0.0
    %1173 = vmatprep.subr.mxu0 0.0
    %1174 = vmatpush1.msra.mxu0 0.0
    %1175 = vmatprep.subr.mxu0 0.0
    %1176 = vmatpush1.msra.mxu0 0.0
    %1177 = vmatprep.subr.mxu0 0.0
    %1178 = vmatpush1.msra.mxu0 0.0
    %1179 = vmatprep.subr.mxu0 0.0
    %1180 = vmatpush1.msra.mxu0 0.0
    %1181 = vmatprep.subr.mxu0 0.0
    %1182 = vmatpush1.msra.mxu0 0.0
    %1183 = vmatprep.subr.mxu0 0.0
    %1184 = vmatpush1.msra.mxu0 0.0
    %1185 = vmatprep.subr.mxu0 0.0
    %1186 = vmatpush1.msra.mxu0 0.0
    %1187 = vmatprep.subr.mxu0 0.0
    %1188 = vmatpush1.msra.mxu0 0.0
    %1189 = vmatprep.subr.mxu0 0.0
    %1190 = vmatpush1.msra.mxu0 0.0
    %1191 = vmatprep.subr.mxu0 0.0
    %1192 = vmatpush1.msra.mxu0 0.0
    %1193 = vmatprep.subr.mxu0 0.0
    %1194 = vmatpush1.msra.mxu0 0.0
    %1195 = vmatprep.subr.mxu0 0.0
    %1196 = vmatpush1.msra.mxu0 0.0
    %1197 = vmatprep.subr.mxu0 0.0
    %1198 = vmatpush1.msra.mxu0 0.0
    %1199 = vmatprep.subr.mxu0 0.0
    %1200 = vmatpush1.msra.mxu0 0.0
    %1201 = vmatprep.subr.mxu0 0.0
    %1202 = vmatpush1.msra.mxu0 0.0
    %1203 = vmatprep.subr.mxu0 0.0
    %1204 = vmatpush1.msra.mxu0 0.0
    %1205 = vmatprep.subr.mxu0 0.0
    %1206 = vmatpush1.msra.mxu0 0.0
    %1207 = vmatprep.subr.mxu0 0.0
    %1208 = vmatpush1.msra.mxu0 0.0
    %1209 = vmatprep.subr.mxu0 0.0
    %1210 = vmatpush1.msra.mxu0 0.0
    %1211 = vmatprep.subr.mxu0 0.0
    %1212 = vmatpush1.msra.mxu0 0.0
    %1213 = vmatprep.subr.mxu0 0.0
    %1214 = vmatpush1.msra.mxu0 0.0
    %1215 = vmatprep.subr.mxu0 0.0
    %1216 = vmatpush1.msra.mxu0 0.0
    %1217 = vmatprep.subr.mxu0 0.0
    %1218 = vmatpush1.msra.mxu0 0.0
    %1219 = vmatprep.subr.mxu0 0.0
    %1220 = vmatpush1.msra.mxu0 0.0
    %1221 = vmatprep.subr.mxu0 0.0
    %1222 = vmatpush1.msra.mxu0 0.0
    %1223 = vmatprep.subr.mxu0 0.0
    %1224 = vmatpush1.msra.mxu0 0.0
    %1225 = vmatprep.subr.mxu0 0.0
    %1226 = vmatpush1.msra.mxu0 0.0
    %1227 = vmatprep.subr.mxu0 0.0
    %1228 = vmatpush1.msra.mxu0 0.0
    %1229 = vmatprep.subr.mxu0 0.0
    %1230 = vmatpush1.msra.mxu0 0.0
    %1231 = vmatprep.mubr.f32.mxu0 0.0
    %1232 = vmatmul.mubr.f32.gmra.mrb[0].mxu0 %v1162
    %v1233 = vpop.f32.mrb[0].mxu0
    %v1234 = vadd.f32 0.0, %v1233
    %v1235 = vpop.f32.mrb[0].mxu0
    %1236 = vdwg.mxu0
    %v1237 = vadd.f32 %v1156, %v1234
    %v1238 = vld [vmem:[#allocation2 + $0x14] sm:$0xf]
    %s1239 = scalar_lea.vmem %s3, 144
    %v1240 = vld [vmem:[%s1239] sm:$0xff]
    %v1241 = vld [vmem:[%s1239 + $0x8] sm:$0x3]
    %v1243 = vsel %vm517, %v1238, 0
    %v1246 = vsel %vm521, %v1241, 0
    %1248 = vmatprep.subr.mxu0 0.0
    %1249 = vmatpush1.msra.mxu0 %v1240
    %1250 = vmatprep.subr.mxu0 0.0
    %1251 = vmatpush1.msra.mxu0 %v1246
    %1252 = vmatprep.subr.mxu0 0.0
    %1253 = vmatpush1.msra.mxu0 0.0
    %1254 = vmatprep.subr.mxu0 0.0
    %1255 = vmatpush1.msra.mxu0 0.0
    %1256 = vmatprep.subr.mxu0 0.0
    %1257 = vmatpush1.msra.mxu0 0.0
    %1258 = vmatprep.subr.mxu0 0.0
    %1259 = vmatpush1.msra.mxu0 0.0
    %1260 = vmatprep.subr.mxu0 0.0
    %1261 = vmatpush1.msra.mxu0 0.0
    %1262 = vmatprep.subr.mxu0 0.0
    %1263 = vmatpush1.msra.mxu0 0.0
    %1264 = vmatprep.subr.mxu0 0.0
    %1265 = vmatpush1.msra.mxu0 0.0
    %1266 = vmatprep.subr.mxu0 0.0
    %1267 = vmatpush1.msra.mxu0 0.0
    %1268 = vmatprep.subr.mxu0 0.0
    %1269 = vmatpush1.msra.mxu0 0.0
    %1270 = vmatprep.subr.mxu0 0.0
    %1271 = vmatpush1.msra.mxu0 0.0
    %1272 = vmatprep.subr.mxu0 0.0
    %1273 = vmatpush1.msra.mxu0 0.0
    %1274 = vmatprep.subr.mxu0 0.0
    %1275 = vmatpush1.msra.mxu0 0.0
    %1276 = vmatprep.subr.mxu0 0.0
    %1277 = vmatpush1.msra.mxu0 0.0
    %1278 = vmatprep.subr.mxu0 0.0
    %1279 = vmatpush1.msra.mxu0 0.0
    %1280 = vmatprep.subr.mxu0 0.0
    %1281 = vmatpush1.msra.mxu0 0.0
    %1282 = vmatprep.subr.mxu0 0.0
    %1283 = vmatpush1.msra.mxu0 0.0
    %1284 = vmatprep.subr.mxu0 0.0
    %1285 = vmatpush1.msra.mxu0 0.0
    %1286 = vmatprep.subr.mxu0 0.0
    %1287 = vmatpush1.msra.mxu0 0.0
    %1288 = vmatprep.subr.mxu0 0.0
    %1289 = vmatpush1.msra.mxu0 0.0
    %1290 = vmatprep.subr.mxu0 0.0
    %1291 = vmatpush1.msra.mxu0 0.0
    %1292 = vmatprep.subr.mxu0 0.0
    %1293 = vmatpush1.msra.mxu0 0.0
    %1294 = vmatprep.subr.mxu0 0.0
    %1295 = vmatpush1.msra.mxu0 0.0
    %1296 = vmatprep.subr.mxu0 0.0
    %1297 = vmatpush1.msra.mxu0 0.0
    %1298 = vmatprep.subr.mxu0 0.0
    %1299 = vmatpush1.msra.mxu0 0.0
    %1300 = vmatprep.subr.mxu0 0.0
    %1301 = vmatpush1.msra.mxu0 0.0
    %1302 = vmatprep.subr.mxu0 0.0
    %1303 = vmatpush1.msra.mxu0 0.0
    %1304 = vmatprep.subr.mxu0 0.0
    %1305 = vmatpush1.msra.mxu0 0.0
    %1306 = vmatprep.subr.mxu0 0.0
    %1307 = vmatpush1.msra.mxu0 0.0
    %1308 = vmatprep.subr.mxu0 0.0
    %1309 = vmatpush1.msra.mxu0 0.0
    %1310 = vmatprep.subr.mxu0 0.0
    %1311 = vmatpush1.msra.mxu0 0.0
    %1312 = vmatprep.mubr.f32.mxu0 0.0
    %1313 = vmatmul.mubr.f32.gmra.mrb[0].mxu0 %v1243
    %v1314 = vpop.f32.mrb[0].mxu0
    %v1315 = vadd.f32 0.0, %v1314
    %v1316 = vpop.f32.mrb[0].mxu0
    %1317 = vdwg.mxu0
    %v1318 = vadd.f32 %v1237, %v1315
    %v1319 = vld [vmem:[#allocation2 + $0x18] sm:$0xf]
    %s1320 = scalar_lea.vmem %s3, 160
    %v1321 = vld [vmem:[%s1320] sm:$0xff]
    %v1322 = vld [vmem:[%s1320 + $0x8] sm:$0x3]
    %v1324 = vsel %vm517, %v1319, 0
    %v1327 = vsel %vm521, %v1322, 0
    %1329 = vmatprep.subr.mxu0 0.0
    %1330 = vmatpush1.msra.mxu0 %v1321
    %1331 = vmatprep.subr.mxu0 0.0
    %1332 = vmatpush1.msra.mxu0 %v1327
    %1333 = vmatprep.subr.mxu0 0.0
    %1334 = vmatpush1.msra.mxu0 0.0
    %1335 = vmatprep.subr.mxu0 0.0
    %1336 = vmatpush1.msra.mxu0 0.0
    %1337 = vmatprep.subr.mxu0 0.0
    %1338 = vmatpush1.msra.mxu0 0.0
    %1339 = vmatprep.subr.mxu0 0.0
    %1340 = vmatpush1.msra.mxu0 0.0
    %1341 = vmatprep.subr.mxu0 0.0
    %1342 = vmatpush1.msra.mxu0 0.0
    %1343 = vmatprep.subr.mxu0 0.0
    %1344 = vmatpush1.msra.mxu0 0.0
    %1345 = vmatprep.subr.mxu0 0.0
    %1346 = vmatpush1.msra.mxu0 0.0
    %1347 = vmatprep.subr.mxu0 0.0
    %1348 = vmatpush1.msra.mxu0 0.0
    %1349 = vmatprep.subr.mxu0 0.0
    %1350 = vmatpush1.msra.mxu0 0.0
    %1351 = vmatprep.subr.mxu0 0.0
    %1352 = vmatpush1.msra.mxu0 0.0
    %1353 = vmatprep.subr.mxu0 0.0
    %1354 = vmatpush1.msra.mxu0 0.0
    %1355 = vmatprep.subr.mxu0 0.0
    %1356 = vmatpush1.msra.mxu0 0.0
    %1357 = vmatprep.subr.mxu0 0.0
    %1358 = vmatpush1.msra.mxu0 0.0
    %1359 = vmatprep.subr.mxu0 0.0
    %1360 = vmatpush1.msra.mxu0 0.0
    %1361 = vmatprep.subr.mxu0 0.0
    %1362 = vmatpush1.msra.mxu0 0.0
    %1363 = vmatprep.subr.mxu0 0.0
    %1364 = vmatpush1.msra.mxu0 0.0
    %1365 = vmatprep.subr.mxu0 0.0
    %1366 = vmatpush1.msra.mxu0 0.0
    %1367 = vmatprep.subr.mxu0 0.0
    %1368 = vmatpush1.msra.mxu0 0.0
    %1369 = vmatprep.subr.mxu0 0.0
    %1370 = vmatpush1.msra.mxu0 0.0
    %1371 = vmatprep.subr.mxu0 0.0
    %1372 = vmatpush1.msra.mxu0 0.0
    %1373 = vmatprep.subr.mxu0 0.0
    %1374 = vmatpush1.msra.mxu0 0.0
    %1375 = vmatprep.subr.mxu0 0.0
    %1376 = vmatpush1.msra.mxu0 0.0
    %1377 = vmatprep.subr.mxu0 0.0
    %1378 = vmatpush1.msra.mxu0 0.0
    %1379 = vmatprep.subr.mxu0 0.0
    %1380 = vmatpush1.msra.mxu0 0.0
    %1381 = vmatprep.subr.mxu0 0.0
    %1382 = vmatpush1.msra.mxu0 0.0
    %1383 = vmatprep.subr.mxu0 0.0
    %1384 = vmatpush1.msra.mxu0 0.0
    %1385 = vmatprep.subr.mxu0 0.0
    %1386 = vmatpush1.msra.mxu0 0.0
    %1387 = vmatprep.subr.mxu0 0.0
    %1388 = vmatpush1.msra.mxu0 0.0
    %1389 = vmatprep.subr.mxu0 0.0
    %1390 = vmatpush1.msra.mxu0 0.0
    %1391 = vmatprep.subr.mxu0 0.0
    %1392 = vmatpush1.msra.mxu0 0.0
    %1393 = vmatprep.mubr.f32.mxu0 0.0
    %1394 = vmatmul.mubr.f32.gmra.mrb[0].mxu0 %v1324
    %v1395 = vpop.f32.mrb[0].mxu0
    %v1396 = vadd.f32 0.0, %v1395
    %v1397 = vpop.f32.mrb[0].mxu0
    %1398 = vdwg.mxu0
    %v1399 = vadd.f32 %v1318, %v1396
    %v1400 = vld [vmem:[#allocation2 + $0x1a] sm:$0xf]
    %s1401 = scalar_lea.vmem %s3, 176
    %v1402 = vld [vmem:[%s1401] sm:$0xff]
    %v1403 = vld [vmem:[%s1401 + $0x8] sm:$0x3]
    %v1405 = vsel %vm517, %v1400, 0
    %v1408 = vsel %vm521, %v1403, 0
    %1410 = vmatprep.subr.mxu0 0.0
    %1411 = vmatpush1.msra.mxu0 %v1402
    %1412 = vmatprep.subr.mxu0 0.0
    %1413 = vmatpush1.msra.mxu0 %v1408
    %1414 = vmatprep.subr.mxu0 0.0
    %1415 = vmatpush1.msra.mxu0 0.0
    %1416 = vmatprep.subr.mxu0 0.0
    %1417 = vmatpush1.msra.mxu0 0.0
    %1418 = vmatprep.subr.mxu0 0.0
    %1419 = vmatpush1.msra.mxu0 0.0
    %1420 = vmatprep.subr.mxu0 0.0
    %1421 = vmatpush1.msra.mxu0 0.0
    %1422 = vmatprep.subr.mxu0 0.0
    %1423 = vmatpush1.msra.mxu0 0.0
    %1424 = vmatprep.subr.mxu0 0.0
    %1425 = vmatpush1.msra.mxu0 0.0
    %1426 = vmatprep.subr.mxu0 0.0
    %1427 = vmatpush1.msra.mxu0 0.0
    %1428 = vmatprep.subr.mxu0 0.0
    %1429 = vmatpush1.msra.mxu0 0.0
    %1430 = vmatprep.subr.mxu0 0.0
    %1431 = vmatpush1.msra.mxu0 0.0
    %1432 = vmatprep.subr.mxu0 0.0
    %1433 = vmatpush1.msra.mxu0 0.0
    %1434 = vmatprep.subr.mxu0 0.0
    %1435 = vmatpush1.msra.mxu0 0.0
    %1436 = vmatprep.subr.mxu0 0.0
    %1437 = vmatpush1.msra.mxu0 0.0
    %1438 = vmatprep.subr.mxu0 0.0
    %1439 = vmatpush1.msra.mxu0 0.0
    %1440 = vmatprep.subr.mxu0 0.0
    %1441 = vmatpush1.msra.mxu0 0.0
    %1442 = vmatprep.subr.mxu0 0.0
    %1443 = vmatpush1.msra.mxu0 0.0
    %1444 = vmatprep.subr.mxu0 0.0
    %1445 = vmatpush1.msra.mxu0 0.0
    %1446 = vmatprep.subr.mxu0 0.0
    %1447 = vmatpush1.msra.mxu0 0.0
    %1448 = vmatprep.subr.mxu0 0.0
    %1449 = vmatpush1.msra.mxu0 0.0
    %1450 = vmatprep.subr.mxu0 0.0
    %1451 = vmatpush1.msra.mxu0 0.0
    %1452 = vmatprep.subr.mxu0 0.0
    %1453 = vmatpush1.msra.mxu0 0.0
    %1454 = vmatprep.subr.mxu0 0.0
    %1455 = vmatpush1.msra.mxu0 0.0
    %1456 = vmatprep.subr.mxu0 0.0
    %1457 = vmatpush1.msra.mxu0 0.0
    %1458 = vmatprep.subr.mxu0 0.0
    %1459 = vmatpush1.msra.mxu0 0.0
    %1460 = vmatprep.subr.mxu0 0.0
    %1461 = vmatpush1.msra.mxu0 0.0
    %1462 = vmatprep.subr.mxu0 0.0
    %1463 = vmatpush1.msra.mxu0 0.0
    %1464 = vmatprep.subr.mxu0 0.0
    %1465 = vmatpush1.msra.mxu0 0.0
    %1466 = vmatprep.subr.mxu0 0.0
    %1467 = vmatpush1.msra.mxu0 0.0
    %1468 = vmatprep.subr.mxu0 0.0
    %1469 = vmatpush1.msra.mxu0 0.0
    %1470 = vmatprep.subr.mxu0 0.0
    %1471 = vmatpush1.msra.mxu0 0.0
    %1472 = vmatprep.subr.mxu0 0.0
    %1473 = vmatpush1.msra.mxu0 0.0
    %1474 = vmatprep.mubr.f32.mxu0 0.0
    %1475 = vmatmul.mubr.f32.gmra.mrb[0].mxu0 %v1405
    %v1476 = vpop.f32.mrb[0].mxu0
    %v1477 = vadd.f32 0.0, %v1476
    %v1478 = vpop.f32.mrb[0].mxu0
    %1479 = vdwg.mxu0
    %v1480 = vadd.f32 %v1399, %v1477
    %v1481 = vld [vmem:[#allocation2 + $0x1c] sm:$0xf]
    %s1482 = scalar_lea.vmem %s3, 192
    %v1483 = vld [vmem:[%s1482] sm:$0xff]
    %v1484 = vld [vmem:[%s1482 + $0x8] sm:$0x3]
    %v1486 = vsel %vm517, %v1481, 0
    %v1489 = vsel %vm521, %v1484, 0
    %1491 = vmatprep.subr.mxu0 0.0
    %1492 = vmatpush1.msra.mxu0 %v1483
    %1493 = vmatprep.subr.mxu0 0.0
    %1494 = vmatpush1.msra.mxu0 %v1489
    %1495 = vmatprep.subr.mxu0 0.0
    %1496 = vmatpush1.msra.mxu0 0.0
    %1497 = vmatprep.subr.mxu0 0.0
    %1498 = vmatpush1.msra.mxu0 0.0
    %1499 = vmatprep.subr.mxu0 0.0
    %1500 = vmatpush1.msra.mxu0 0.0
    %1501 = vmatprep.subr.mxu0 0.0
    %1502 = vmatpush1.msra.mxu0 0.0
    %1503 = vmatprep.subr.mxu0 0.0
    %1504 = vmatpush1.msra.mxu0 0.0
    %1505 = vmatprep.subr.mxu0 0.0
    %1506 = vmatpush1.msra.mxu0 0.0
    %1507 = vmatprep.subr.mxu0 0.0
    %1508 = vmatpush1.msra.mxu0 0.0
    %1509 = vmatprep.subr.mxu0 0.0
    %1510 = vmatpush1.msra.mxu0 0.0
    %1511 = vmatprep.subr.mxu0 0.0
    %1512 = vmatpush1.msra.mxu0 0.0
    %1513 = vmatprep.subr.mxu0 0.0
    %1514 = vmatpush1.msra.mxu0 0.0
    %1515 = vmatprep.subr.mxu0 0.0
    %1516 = vmatpush1.msra.mxu0 0.0
    %1517 = vmatprep.subr.mxu0 0.0
    %1518 = vmatpush1.msra.mxu0 0.0
    %1519 = vmatprep.subr.mxu0 0.0
    %1520 = vmatpush1.msra.mxu0 0.0
    %1521 = vmatprep.subr.mxu0 0.0
    %1522 = vmatpush1.msra.mxu0 0.0
    %1523 = vmatprep.subr.mxu0 0.0
    %1524 = vmatpush1.msra.mxu0 0.0
    %1525 = vmatprep.subr.mxu0 0.0
    %1526 = vmatpush1.msra.mxu0 0.0
    %1527 = vmatprep.subr.mxu0 0.0
    %1528 = vmatpush1.msra.mxu0 0.0
    %1529 = vmatprep.subr.mxu0 0.0
    %1530 = vmatpush1.msra.mxu0 0.0
    %1531 = vmatprep.subr.mxu0 0.0
    %1532 = vmatpush1.msra.mxu0 0.0
    %1533 = vmatprep.subr.mxu0 0.0
    %1534 = vmatpush1.msra.mxu0 0.0
    %1535 = vmatprep.subr.mxu0 0.0
    %1536 = vmatpush1.msra.mxu0 0.0
    %1537 = vmatprep.subr.mxu0 0.0
    %1538 = vmatpush1.msra.mxu0 0.0
    %1539 = vmatprep.subr.mxu0 0.0
    %1540 = vmatpush1.msra.mxu0 0.0
    %1541 = vmatprep.subr.mxu0 0.0
    %1542 = vmatpush1.msra.mxu0 0.0
    %1543 = vmatprep.subr.mxu0 0.0
    %1544 = vmatpush1.msra.mxu0 0.0
    %1545 = vmatprep.subr.mxu0 0.0
    %1546 = vmatpush1.msra.mxu0 0.0
    %1547 = vmatprep.subr.mxu0 0.0
    %1548 = vmatpush1.msra.mxu0 0.0
    %1549 = vmatprep.subr.mxu0 0.0
    %1550 = vmatpush1.msra.mxu0 0.0
    %1551 = vmatprep.subr.mxu0 0.0
    %1552 = vmatpush1.msra.mxu0 0.0
    %1553 = vmatprep.subr.mxu0 0.0
    %1554 = vmatpush1.msra.mxu0 0.0
    %1555 = vmatprep.mubr.f32.mxu0 0.0
    %1556 = vmatmul.mubr.f32.gmra.mrb[0].mxu0 %v1486
    %v1557 = vpop.f32.mrb[0].mxu0
    %v1558 = vadd.f32 0.0, %v1557
    %v1559 = vpop.f32.mrb[0].mxu0
    %1560 = vdwg.mxu0
    %v1561 = vadd.f32 %v1480, %v1558
    %v1562 = vld [vmem:[#allocation2 + $0x1e] sm:$0xf]
    %s1563 = scalar_lea.vmem %s3, 208
    %v1564 = vld [vmem:[%s1563] sm:$0xff]
    %v1565 = vld [vmem:[%s1563 + $0x8] sm:$0x3]
    %v1567 = vsel %vm517, %v1562, 0
    %v1570 = vsel %vm521, %v1565, 0
    %1572 = vmatprep.subr.mxu0 0.0
    %1573 = vmatpush1.msra.mxu0 %v1564
    %1574 = vmatprep.subr.mxu0 0.0
    %1575 = vmatpush1.msra.mxu0 %v1570
    %1576 = vmatprep.subr.mxu0 0.0
    %1577 = vmatpush1.msra.mxu0 0.0
    %1578 = vmatprep.subr.mxu0 0.0
    %1579 = vmatpush1.msra.mxu0 0.0
    %1580 = vmatprep.subr.mxu0 0.0
    %1581 = vmatpush1.msra.mxu0 0.0
    %1582 = vmatprep.subr.mxu0 0.0
    %1583 = vmatpush1.msra.mxu0 0.0
    %1584 = vmatprep.subr.mxu0 0.0
    %1585 = vmatpush1.msra.mxu0 0.0
    %1586 = vmatprep.subr.mxu0 0.0
    %1587 = vmatpush1.msra.mxu0 0.0
    %1588 = vmatprep.subr.mxu0 0.0
    %1589 = vmatpush1.msra.mxu0 0.0
    %1590 = vmatprep.subr.mxu0 0.0
    %1591 = vmatpush1.msra.mxu0 0.0
    %1592 = vmatprep.subr.mxu0 0.0
    %1593 = vmatpush1.msra.mxu0 0.0
    %1594 = vmatprep.subr.mxu0 0.0
    %1595 = vmatpush1.msra.mxu0 0.0
    %1596 = vmatprep.subr.mxu0 0.0
    %1597 = vmatpush1.msra.mxu0 0.0
    %1598 = vmatprep.subr.mxu0 0.0
    %1599 = vmatpush1.msra.mxu0 0.0
    %1600 = vmatprep.subr.mxu0 0.0
    %1601 = vmatpush1.msra.mxu0 0.0
    %1602 = vmatprep.subr.mxu0 0.0
    %1603 = vmatpush1.msra.mxu0 0.0
    %1604 = vmatprep.subr.mxu0 0.0
    %1605 = vmatpush1.msra.mxu0 0.0
    %1606 = vmatprep.subr.mxu0 0.0
    %1607 = vmatpush1.msra.mxu0 0.0
    %1608 = vmatprep.subr.mxu0 0.0
    %1609 = vmatpush1.msra.mxu0 0.0
    %1610 = vmatprep.subr.mxu0 0.0
    %1611 = vmatpush1.msra.mxu0 0.0
    %1612 = vmatprep.subr.mxu0 0.0
    %1613 = vmatpush1.msra.mxu0 0.0
    %1614 = vmatprep.subr.mxu0 0.0
    %1615 = vmatpush1.msra.mxu0 0.0
    %1616 = vmatprep.subr.mxu0 0.0
    %1617 = vmatpush1.msra.mxu0 0.0
    %1618 = vmatprep.subr.mxu0 0.0
    %1619 = vmatpush1.msra.mxu0 0.0
    %1620 = vmatprep.subr.mxu0 0.0
    %1621 = vmatpush1.msra.mxu0 0.0
    %1622 = vmatprep.subr.mxu0 0.0
    %1623 = vmatpush1.msra.mxu0 0.0
    %1624 = vmatprep.subr.mxu0 0.0
    %1625 = vmatpush1.msra.mxu0 0.0
    %1626 = vmatprep.subr.mxu0 0.0
    %1627 = vmatpush1.msra.mxu0 0.0
    %1628 = vmatprep.subr.mxu0 0.0
    %1629 = vmatpush1.msra.mxu0 0.0
    %1630 = vmatprep.subr.mxu0 0.0
    %1631 = vmatpush1.msra.mxu0 0.0
    %1632 = vmatprep.subr.mxu0 0.0
    %1633 = vmatpush1.msra.mxu0 0.0
    %1634 = vmatprep.subr.mxu0 0.0
    %1635 = vmatpush1.msra.mxu0 0.0
    %1636 = vmatprep.mubr.f32.mxu0 0.0
    %1637 = vmatmul.mubr.f32.gmra.mrb[0].mxu0 %v1567
    %v1638 = vpop.f32.mrb[0].mxu0
    %v1639 = vadd.f32 0.0, %v1638
    %v1640 = vpop.f32.mrb[0].mxu0
    %1641 = vdwg.mxu0
    %v1642 = vadd.f32 %v1561, %v1639
    %v1643 = vld [vmem:[#allocation2 + $0x20] sm:$0xf]
    %s1644 = scalar_lea.vmem %s3, 224
    %v1645 = vld [vmem:[%s1644] sm:$0xff]
    %v1646 = vld [vmem:[%s1644 + $0x8] sm:$0x3]
    %v1648 = vsel %vm517, %v1643, 0
    %v1651 = vsel %vm521, %v1646, 0
    %1653 = vmatprep.subr.mxu0 0.0
    %1654 = vmatpush1.msra.mxu0 %v1645
    %1655 = vmatprep.subr.mxu0 0.0
    %1656 = vmatpush1.msra.mxu0 %v1651
    %1657 = vmatprep.subr.mxu0 0.0
    %1658 = vmatpush1.msra.mxu0 0.0
    %1659 = vmatprep.subr.mxu0 0.0
    %1660 = vmatpush1.msra.mxu0 0.0
    %1661 = vmatprep.subr.mxu0 0.0
    %1662 = vmatpush1.msra.mxu0 0.0
    %1663 = vmatprep.subr.mxu0 0.0
    %1664 = vmatpush1.msra.mxu0 0.0
    %1665 = vmatprep.subr.mxu0 0.0
    %1666 = vmatpush1.msra.mxu0 0.0
    %1667 = vmatprep.subr.mxu0 0.0
    %1668 = vmatpush1.msra.mxu0 0.0
    %1669 = vmatprep.subr.mxu0 0.0
    %1670 = vmatpush1.msra.mxu0 0.0
    %1671 = vmatprep.subr.mxu0 0.0
    %1672 = vmatpush1.msra.mxu0 0.0
    %1673 = vmatprep.subr.mxu0 0.0
    %1674 = vmatpush1.msra.mxu0 0.0
    %1675 = vmatprep.subr.mxu0 0.0
    %1676 = vmatpush1.msra.mxu0 0.0
    %1677 = vmatprep.subr.mxu0 0.0
    %1678 = vmatpush1.msra.mxu0 0.0
    %1679 = vmatprep.subr.mxu0 0.0
    %1680 = vmatpush1.msra.mxu0 0.0
    %1681 = vmatprep.subr.mxu0 0.0
    %1682 = vmatpush1.msra.mxu0 0.0
    %1683 = vmatprep.subr.mxu0 0.0
    %1684 = vmatpush1.msra.mxu0 0.0
    %1685 = vmatprep.subr.mxu0 0.0
    %1686 = vmatpush1.msra.mxu0 0.0
    %1687 = vmatprep.subr.mxu0 0.0
    %1688 = vmatpush1.msra.mxu0 0.0
    %1689 = vmatprep.subr.mxu0 0.0
    %1690 = vmatpush1.msra.mxu0 0.0
    %1691 = vmatprep.subr.mxu0 0.0
    %1692 = vmatpush1.msra.mxu0 0.0
    %1693 = vmatprep.subr.mxu0 0.0
    %1694 = vmatpush1.msra.mxu0 0.0
    %1695 = vmatprep.subr.mxu0 0.0
    %1696 = vmatpush1.msra.mxu0 0.0
    %1697 = vmatprep.subr.mxu0 0.0
    %1698 = vmatpush1.msra.mxu0 0.0
    %1699 = vmatprep.subr.mxu0 0.0
    %1700 = vmatpush1.msra.mxu0 0.0
    %1701 = vmatprep.subr.mxu0 0.0
    %1702 = vmatpush1.msra.mxu0 0.0
    %1703 = vmatprep.subr.mxu0 0.0
    %1704 = vmatpush1.msra.mxu0 0.0
    %1705 = vmatprep.subr.mxu0 0.0
    %1706 = vmatpush1.msra.mxu0 0.0
    %1707 = vmatprep.subr.mxu0 0.0
    %1708 = vmatpush1.msra.mxu0 0.0
    %1709 = vmatprep.subr.mxu0 0.0
    %1710 = vmatpush1.msra.mxu0 0.0
    %1711 = vmatprep.subr.mxu0 0.0
    %1712 = vmatpush1.msra.mxu0 0.0
    %1713 = vmatprep.subr.mxu0 0.0
    %1714 = vmatpush1.msra.mxu0 0.0
    %1715 = vmatprep.subr.mxu0 0.0
    %1716 = vmatpush1.msra.mxu0 0.0
    %1717 = vmatprep.mubr.f32.mxu0 0.0
    %1718 = vmatmul.mubr.f32.gmra.mrb[0].mxu0 %v1648
    %v1719 = vpop.f32.mrb[0].mxu0
    %v1720 = vadd.f32 0.0, %v1719
    %v1721 = vpop.f32.mrb[0].mxu0
    %1722 = vdwg.mxu0
    %v1723 = vadd.f32 %v1642, %v1720
    %v1724 = vld [vmem:[#allocation2 + $0x24] sm:$0xf]
    %s1725 = scalar_lea.vmem %s3, 240
    %v1726 = vld [vmem:[%s1725] sm:$0xff]
    %v1727 = vld [vmem:[%s1725 + $0x8] sm:$0x3]
    %v1729 = vsel %vm517, %v1724, 0
    %v1732 = vsel %vm521, %v1727, 0
    %1734 = vmatprep.subr.mxu0 0.0
    %1735 = vmatpush1.msra.mxu0 %v1726
    %1736 = vmatprep.subr.mxu0 0.0
    %1737 = vmatpush1.msra.mxu0 %v1732
    %1738 = vmatprep.subr.mxu0 0.0
    %1739 = vmatpush1.msra.mxu0 0.0
    %1740 = vmatprep.subr.mxu0 0.0
    %1741 = vmatpush1.msra.mxu0 0.0
    %1742 = vmatprep.subr.mxu0 0.0
    %1743 = vmatpush1.msra.mxu0 0.0
    %1744 = vmatprep.subr.mxu0 0.0
    %1745 = vmatpush1.msra.mxu0 0.0
    %1746 = vmatprep.subr.mxu0 0.0
    %1747 = vmatpush1.msra.mxu0 0.0
    %1748 = vmatprep.subr.mxu0 0.0
    %1749 = vmatpush1.msra.mxu0 0.0
    %1750 = vmatprep.subr.mxu0 0.0
    %1751 = vmatpush1.msra.mxu0 0.0
    %1752 = vmatprep.subr.mxu0 0.0
    %1753 = vmatpush1.msra.mxu0 0.0
    %1754 = vmatprep.subr.mxu0 0.0
    %1755 = vmatpush1.msra.mxu0 0.0
    %1756 = vmatprep.subr.mxu0 0.0
    %1757 = vmatpush1.msra.mxu0 0.0
    %1758 = vmatprep.subr.mxu0 0.0
    %1759 = vmatpush1.msra.mxu0 0.0
    %1760 = vmatprep.subr.mxu0 0.0
    %1761 = vmatpush1.msra.mxu0 0.0
    %1762 = vmatprep.subr.mxu0 0.0
    %1763 = vmatpush1.msra.mxu0 0.0
    %1764 = vmatprep.subr.mxu0 0.0
    %1765 = vmatpush1.msra.mxu0 0.0
    %1766 = vmatprep.subr.mxu0 0.0
    %1767 = vmatpush1.msra.mxu0 0.0
    %1768 = vmatprep.subr.mxu0 0.0
    %1769 = vmatpush1.msra.mxu0 0.0
    %1770 = vmatprep.subr.mxu0 0.0
    %1771 = vmatpush1.msra.mxu0 0.0
    %1772 = vmatprep.subr.mxu0 0.0
    %1773 = vmatpush1.msra.mxu0 0.0
    %1774 = vmatprep.subr.mxu0 0.0
    %1775 = vmatpush1.msra.mxu0 0.0
    %1776 = vmatprep.subr.mxu0 0.0
    %1777 = vmatpush1.msra.mxu0 0.0
    %1778 = vmatprep.subr.mxu0 0.0
    %1779 = vmatpush1.msra.mxu0 0.0
    %1780 = vmatprep.subr.mxu0 0.0
    %1781 = vmatpush1.msra.mxu0 0.0
    %1782 = vmatprep.subr.mxu0 0.0
    %1783 = vmatpush1.msra.mxu0 0.0
    %1784 = vmatprep.subr.mxu0 0.0
    %1785 = vmatpush1.msra.mxu0 0.0
    %1786 = vmatprep.subr.mxu0 0.0
    %1787 = vmatpush1.msra.mxu0 0.0
    %1788 = vmatprep.subr.mxu0 0.0
    %1789 = vmatpush1.msra.mxu0 0.0
    %1790 = vmatprep.subr.mxu0 0.0
    %1791 = vmatpush1.msra.mxu0 0.0
    %1792 = vmatprep.subr.mxu0 0.0
    %1793 = vmatpush1.msra.mxu0 0.0
    %1794 = vmatprep.subr.mxu0 0.0
    %1795 = vmatpush1.msra.mxu0 0.0
    %1796 = vmatprep.subr.mxu0 0.0
    %1797 = vmatpush1.msra.mxu0 0.0
    %1798 = vmatprep.mubr.f32.mxu0 0.0
    %1799 = vmatmul.mubr.f32.gmra.mrb[0].mxu0 %v1729
    %v1800 = vpop.f32.mrb[0].mxu0
    %v1801 = vadd.f32 0.0, %v1800
    %v1802 = vpop.f32.mrb[0].mxu0
    %1803 = vdwg.mxu0
    %v1804 = vadd.f32 %v1723, %v1801
    %v1805 = vld [vmem:[#allocation2 + $0x26] sm:$0xf]
    %s1806 = scalar_lea.vmem %s3, 256
    %v1807 = vld [vmem:[%s1806] sm:$0xff]
    %v1808 = vld [vmem:[%s1806 + $0x8] sm:$0x3]
    %v1810 = vsel %vm517, %v1805, 0
    %v1813 = vsel %vm521, %v1808, 0
    %1815 = vmatprep.subr.mxu0 0.0
    %1816 = vmatpush1.msra.mxu0 %v1807
    %1817 = vmatprep.subr.mxu0 0.0
    %1818 = vmatpush1.msra.mxu0 %v1813
    %1819 = vmatprep.subr.mxu0 0.0
    %1820 = vmatpush1.msra.mxu0 0.0
    %1821 = vmatprep.subr.mxu0 0.0
    %1822 = vmatpush1.msra.mxu0 0.0
    %1823 = vmatprep.subr.mxu0 0.0
    %1824 = vmatpush1.msra.mxu0 0.0
    %1825 = vmatprep.subr.mxu0 0.0
    %1826 = vmatpush1.msra.mxu0 0.0
    %1827 = vmatprep.subr.mxu0 0.0
    %1828 = vmatpush1.msra.mxu0 0.0
    %1829 = vmatprep.subr.mxu0 0.0
    %1830 = vmatpush1.msra.mxu0 0.0
    %1831 = vmatprep.subr.mxu0 0.0
    %1832 = vmatpush1.msra.mxu0 0.0
    %1833 = vmatprep.subr.mxu0 0.0
    %1834 = vmatpush1.msra.mxu0 0.0
    %1835 = vmatprep.subr.mxu0 0.0
    %1836 = vmatpush1.msra.mxu0 0.0
    %1837 = vmatprep.subr.mxu0 0.0
    %1838 = vmatpush1.msra.mxu0 0.0
    %1839 = vmatprep.subr.mxu0 0.0
    %1840 = vmatpush1.msra.mxu0 0.0
    %1841 = vmatprep.subr.mxu0 0.0
    %1842 = vmatpush1.msra.mxu0 0.0
    %1843 = vmatprep.subr.mxu0 0.0
    %1844 = vmatpush1.msra.mxu0 0.0
    %1845 = vmatprep.subr.mxu0 0.0
    %1846 = vmatpush1.msra.mxu0 0.0
    %1847 = vmatprep.subr.mxu0 0.0
    %1848 = vmatpush1.msra.mxu0 0.0
    %1849 = vmatprep.subr.mxu0 0.0
    %1850 = vmatpush1.msra.mxu0 0.0
    %1851 = vmatprep.subr.mxu0 0.0
    %1852 = vmatpush1.msra.mxu0 0.0
    %1853 = vmatprep.subr.mxu0 0.0
    %1854 = vmatpush1.msra.mxu0 0.0
    %1855 = vmatprep.subr.mxu0 0.0
    %1856 = vmatpush1.msra.mxu0 0.0
    %1857 = vmatprep.subr.mxu0 0.0
    %1858 = vmatpush1.msra.mxu0 0.0
    %1859 = vmatprep.subr.mxu0 0.0
    %1860 = vmatpush1.msra.mxu0 0.0
    %1861 = vmatprep.subr.mxu0 0.0
    %1862 = vmatpush1.msra.mxu0 0.0
    %1863 = vmatprep.subr.mxu0 0.0
    %1864 = vmatpush1.msra.mxu0 0.0
    %1865 = vmatprep.subr.mxu0 0.0
    %1866 = vmatpush1.msra.mxu0 0.0
    %1867 = vmatprep.subr.mxu0 0.0
    %1868 = vmatpush1.msra.mxu0 0.0
    %1869 = vmatprep.subr.mxu0 0.0
    %1870 = vmatpush1.msra.mxu0 0.0
    %1871 = vmatprep.subr.mxu0 0.0
    %1872 = vmatpush1.msra.mxu0 0.0
    %1873 = vmatprep.subr.mxu0 0.0
    %1874 = vmatpush1.msra.mxu0 0.0
    %1875 = vmatprep.subr.mxu0 0.0
    %1876 = vmatpush1.msra.mxu0 0.0
    %1877 = vmatprep.subr.mxu0 0.0
    %1878 = vmatpush1.msra.mxu0 0.0
    %1879 = vmatprep.mubr.f32.mxu0 0.0
    %1880 = vmatmul.mubr.f32.gmra.mrb[0].mxu0 %v1810
    %v1881 = vpop.f32.mrb[0].mxu0
    %v1882 = vadd.f32 0.0, %v1881
    %v1883 = vpop.f32.mrb[0].mxu0
    %1884 = vdwg.mxu0
    %v1885 = vadd.f32 %v1804, %v1882
    %v1886 = vld [vmem:[#allocation2 + $0x28] sm:$0xf]
    %s1887 = scalar_lea.vmem %s3, 272
    %v1888 = vld [vmem:[%s1887] sm:$0xff]
    %v1889 = vld [vmem:[%s1887 + $0x8] sm:$0x3]
    %v1891 = vsel %vm517, %v1886, 0
    %v1894 = vsel %vm521, %v1889, 0
    %1896 = vmatprep.subr.mxu0 0.0
    %1897 = vmatpush1.msra.mxu0 %v1888
    %1898 = vmatprep.subr.mxu0 0.0
    %1899 = vmatpush1.msra.mxu0 %v1894
    %1900 = vmatprep.subr.mxu0 0.0
    %1901 = vmatpush1.msra.mxu0 0.0
    %1902 = vmatprep.subr.mxu0 0.0
    %1903 = vmatpush1.msra.mxu0 0.0
    %1904 = vmatprep.subr.mxu0 0.0
    %1905 = vmatpush1.msra.mxu0 0.0
    %1906 = vmatprep.subr.mxu0 0.0
    %1907 = vmatpush1.msra.mxu0 0.0
    %1908 = vmatprep.subr.mxu0 0.0
    %1909 = vmatpush1.msra.mxu0 0.0
    %1910 = vmatprep.subr.mxu0 0.0
    %1911 = vmatpush1.msra.mxu0 0.0
    %1912 = vmatprep.subr.mxu0 0.0
    %1913 = vmatpush1.msra.mxu0 0.0
    %1914 = vmatprep.subr.mxu0 0.0
    %1915 = vmatpush1.msra.mxu0 0.0
    %1916 = vmatprep.subr.mxu0 0.0
    %1917 = vmatpush1.msra.mxu0 0.0
    %1918 = vmatprep.subr.mxu0 0.0
    %1919 = vmatpush1.msra.mxu0 0.0
    %1920 = vmatprep.subr.mxu0 0.0
    %1921 = vmatpush1.msra.mxu0 0.0
    %1922 = vmatprep.subr.mxu0 0.0
    %1923 = vmatpush1.msra.mxu0 0.0
    %1924 = vmatprep.subr.mxu0 0.0
    %1925 = vmatpush1.msra.mxu0 0.0
    %1926 = vmatprep.subr.mxu0 0.0
    %1927 = vmatpush1.msra.mxu0 0.0
    %1928 = vmatprep.subr.mxu0 0.0
    %1929 = vmatpush1.msra.mxu0 0.0
    %1930 = vmatprep.subr.mxu0 0.0
    %1931 = vmatpush1.msra.mxu0 0.0
    %1932 = vmatprep.subr.mxu0 0.0
    %1933 = vmatpush1.msra.mxu0 0.0
    %1934 = vmatprep.subr.mxu0 0.0
    %1935 = vmatpush1.msra.mxu0 0.0
    %1936 = vmatprep.subr.mxu0 0.0
    %1937 = vmatpush1.msra.mxu0 0.0
    %1938 = vmatprep.subr.mxu0 0.0
    %1939 = vmatpush1.msra.mxu0 0.0
    %1940 = vmatprep.subr.mxu0 0.0
    %1941 = vmatpush1.msra.mxu0 0.0
    %1942 = vmatprep.subr.mxu0 0.0
    %1943 = vmatpush1.msra.mxu0 0.0
    %1944 = vmatprep.subr.mxu0 0.0
    %1945 = vmatpush1.msra.mxu0 0.0
    %1946 = vmatprep.subr.mxu0 0.0
    %1947 = vmatpush1.msra.mxu0 0.0
    %1948 = vmatprep.subr.mxu0 0.0
    %1949 = vmatpush1.msra.mxu0 0.0
    %1950 = vmatprep.subr.mxu0 0.0
    %1951 = vmatpush1.msra.mxu0 0.0
    %1952 = vmatprep.subr.mxu0 0.0
    %1953 = vmatpush1.msra.mxu0 0.0
    %1954 = vmatprep.subr.mxu0 0.0
    %1955 = vmatpush1.msra.mxu0 0.0
    %1956 = vmatprep.subr.mxu0 0.0
    %1957 = vmatpush1.msra.mxu0 0.0
    %1958 = vmatprep.subr.mxu0 0.0
    %1959 = vmatpush1.msra.mxu0 0.0
    %1960 = vmatprep.mubr.f32.mxu0 0.0
    %1961 = vmatmul.mubr.f32.gmra.mrb[0].mxu0 %v1891
    %v1962 = vpop.f32.mrb[0].mxu0
    %v1963 = vadd.f32 0.0, %v1962
    %v1964 = vpop.f32.mrb[0].mxu0
    %1965 = vdwg.mxu0
    %v1966 = vadd.f32 %v1885, %v1963
    %v1967 = vld [vmem:[#allocation2 + $0x2a] sm:$0xf]
    %s1968 = scalar_lea.vmem %s3, 288
    %v1969 = vld [vmem:[%s1968] sm:$0xff]
    %v1970 = vld [vmem:[%s1968 + $0x8] sm:$0x3]
    %v1972 = vsel %vm517, %v1967, 0
    %v1975 = vsel %vm521, %v1970, 0
    %1977 = vmatprep.subr.mxu0 0.0
    %1978 = vmatpush1.msra.mxu0 %v1969
    %1979 = vmatprep.subr.mxu0 0.0
    %1980 = vmatpush1.msra.mxu0 %v1975
    %1981 = vmatprep.subr.mxu0 0.0
    %1982 = vmatpush1.msra.mxu0 0.0
    %1983 = vmatprep.subr.mxu0 0.0
    %1984 = vmatpush1.msra.mxu0 0.0
    %1985 = vmatprep.subr.mxu0 0.0
    %1986 = vmatpush1.msra.mxu0 0.0
    %1987 = vmatprep.subr.mxu0 0.0
    %1988 = vmatpush1.msra.mxu0 0.0
    %1989 = vmatprep.subr.mxu0 0.0
    %1990 = vmatpush1.msra.mxu0 0.0
    %1991 = vmatprep.subr.mxu0 0.0
    %1992 = vmatpush1.msra.mxu0 0.0
    %1993 = vmatprep.subr.mxu0 0.0
    %1994 = vmatpush1.msra.mxu0 0.0
    %1995 = vmatprep.subr.mxu0 0.0
    %1996 = vmatpush1.msra.mxu0 0.0
    %1997 = vmatprep.subr.mxu0 0.0
    %1998 = vmatpush1.msra.mxu0 0.0
    %1999 = vmatprep.subr.mxu0 0.0
    %2000 = vmatpush1.msra.mxu0 0.0
    %2001 = vmatprep.subr.mxu0 0.0
    %2002 = vmatpush1.msra.mxu0 0.0
    %2003 = vmatprep.subr.mxu0 0.0
    %2004 = vmatpush1.msra.mxu0 0.0
    %2005 = vmatprep.subr.mxu0 0.0
    %2006 = vmatpush1.msra.mxu0 0.0
    %2007 = vmatprep.subr.mxu0 0.0
    %2008 = vmatpush1.msra.mxu0 0.0
    %2009 = vmatprep.subr.mxu0 0.0
    %2010 = vmatpush1.msra.mxu0 0.0
    %2011 = vmatprep.subr.mxu0 0.0
    %2012 = vmatpush1.msra.mxu0 0.0
    %2013 = vmatprep.subr.mxu0 0.0
    %2014 = vmatpush1.msra.mxu0 0.0
    %2015 = vmatprep.subr.mxu0 0.0
    %2016 = vmatpush1.msra.mxu0 0.0
    %2017 = vmatprep.subr.mxu0 0.0
    %2018 = vmatpush1.msra.mxu0 0.0
    %2019 = vmatprep.subr.mxu0 0.0
    %2020 = vmatpush1.msra.mxu0 0.0
    %2021 = vmatprep.subr.mxu0 0.0
    %2022 = vmatpush1.msra.mxu0 0.0
    %2023 = vmatprep.subr.mxu0 0.0
    %2024 = vmatpush1.msra.mxu0 0.0
    %2025 = vmatprep.subr.mxu0 0.0
    %2026 = vmatpush1.msra.mxu0 0.0
    %2027 = vmatprep.subr.mxu0 0.0
    %2028 = vmatpush1.msra.mxu0 0.0
    %2029 = vmatprep.subr.mxu0 0.0
    %2030 = vmatpush1.msra.mxu0 0.0
    %2031 = vmatprep.subr.mxu0 0.0
    %2032 = vmatpush1.msra.mxu0 0.0
    %2033 = vmatprep.subr.mxu0 0.0
    %2034 = vmatpush1.msra.mxu0 0.0
    %2035 = vmatprep.subr.mxu0 0.0
    %2036 = vmatpush1.msra.mxu0 0.0
    %2037 = vmatprep.subr.mxu0 0.0
    %2038 = vmatpush1.msra.mxu0 0.0
    %2039 = vmatprep.subr.mxu0 0.0
    %2040 = vmatpush1.msra.mxu0 0.0
    %2041 = vmatprep.mubr.f32.mxu0 0.0
    %2042 = vmatmul.mubr.f32.gmra.mrb[0].mxu0 %v1972
    %v2043 = vpop.f32.mrb[0].mxu0
    %v2044 = vadd.f32 0.0, %v2043
    %v2045 = vpop.f32.mrb[0].mxu0
    %2046 = vdwg.mxu0
    %v2047 = vadd.f32 %v1966, %v2044
    %v2048 = vld [vmem:[#allocation2 + $0x2c] sm:$0xf]
    %s2049 = scalar_lea.vmem %s3, 304
    %v2050 = vld [vmem:[%s2049] sm:$0xff]
    %v2051 = vld [vmem:[%s2049 + $0x8] sm:$0x3]
    %v2053 = vsel %vm517, %v2048, 0
    %v2056 = vsel %vm521, %v2051, 0
    %2058 = vmatprep.subr.mxu0 0.0
    %2059 = vmatpush1.msra.mxu0 %v2050
    %2060 = vmatprep.subr.mxu0 0.0
    %2061 = vmatpush1.msra.mxu0 %v2056
    %2062 = vmatprep.subr.mxu0 0.0
    %2063 = vmatpush1.msra.mxu0 0.0
    %2064 = vmatprep.subr.mxu0 0.0
    %2065 = vmatpush1.msra.mxu0 0.0
    %2066 = vmatprep.subr.mxu0 0.0
    %2067 = vmatpush1.msra.mxu0 0.0
    %2068 = vmatprep.subr.mxu0 0.0
    %2069 = vmatpush1.msra.mxu0 0.0
    %2070 = vmatprep.subr.mxu0 0.0
    %2071 = vmatpush1.msra.mxu0 0.0
    %2072 = vmatprep.subr.mxu0 0.0
    %2073 = vmatpush1.msra.mxu0 0.0
    %2074 = vmatprep.subr.mxu0 0.0
    %2075 = vmatpush1.msra.mxu0 0.0
    %2076 = vmatprep.subr.mxu0 0.0
    %2077 = vmatpush1.msra.mxu0 0.0
    %2078 = vmatprep.subr.mxu0 0.0
    %2079 = vmatpush1.msra.mxu0 0.0
    %2080 = vmatprep.subr.mxu0 0.0
    %2081 = vmatpush1.msra.mxu0 0.0
    %2082 = vmatprep.subr.mxu0 0.0
    %2083 = vmatpush1.msra.mxu0 0.0
    %2084 = vmatprep.subr.mxu0 0.0
    %2085 = vmatpush1.msra.mxu0 0.0
    %2086 = vmatprep.subr.mxu0 0.0
    %2087 = vmatpush1.msra.mxu0 0.0
    %2088 = vmatprep.subr.mxu0 0.0
    %2089 = vmatpush1.msra.mxu0 0.0
    %2090 = vmatprep.subr.mxu0 0.0
    %2091 = vmatpush1.msra.mxu0 0.0
    %2092 = vmatprep.subr.mxu0 0.0
    %2093 = vmatpush1.msra.mxu0 0.0
    %2094 = vmatprep.subr.mxu0 0.0
    %2095 = vmatpush1.msra.mxu0 0.0
    %2096 = vmatprep.subr.mxu0 0.0
    %2097 = vmatpush1.msra.mxu0 0.0
    %2098 = vmatprep.subr.mxu0 0.0
    %2099 = vmatpush1.msra.mxu0 0.0
    %2100 = vmatprep.subr.mxu0 0.0
    %2101 = vmatpush1.msra.mxu0 0.0
    %2102 = vmatprep.subr.mxu0 0.0
    %2103 = vmatpush1.msra.mxu0 0.0
    %2104 = vmatprep.subr.mxu0 0.0
    %2105 = vmatpush1.msra.mxu0 0.0
    %2106 = vmatprep.subr.mxu0 0.0
    %2107 = vmatpush1.msra.mxu0 0.0
    %2108 = vmatprep.subr.mxu0 0.0
    %2109 = vmatpush1.msra.mxu0 0.0
    %2110 = vmatprep.subr.mxu0 0.0
    %2111 = vmatpush1.msra.mxu0 0.0
    %2112 = vmatprep.subr.mxu0 0.0
    %2113 = vmatpush1.msra.mxu0 0.0
    %2114 = vmatprep.subr.mxu0 0.0
    %2115 = vmatpush1.msra.mxu0 0.0
    %2116 = vmatprep.subr.mxu0 0.0
    %2117 = vmatpush1.msra.mxu0 0.0
    %2118 = vmatprep.subr.mxu0 0.0
    %2119 = vmatpush1.msra.mxu0 0.0
    %2120 = vmatprep.subr.mxu0 0.0
    %2121 = vmatpush1.msra.mxu0 0.0
    %2122 = vmatprep.mubr.f32.mxu0 0.0
    %2123 = vmatmul.mubr.f32.gmra.mrb[0].mxu0 %v2053
    %v2124 = vpop.f32.mrb[0].mxu0
    %v2125 = vadd.f32 0.0, %v2124
    %v2126 = vpop.f32.mrb[0].mxu0
    %2127 = vdwg.mxu0
    %v2128 = vadd.f32 %v2047, %v2125
    %v2129 = vld [vmem:[#allocation2 + $0x30] sm:$0xf]
    %s2130 = scalar_lea.vmem %s3, 320
    %v2131 = vld [vmem:[%s2130] sm:$0xff]
    %v2132 = vld [vmem:[%s2130 + $0x8] sm:$0x3]
    %v2134 = vsel %vm517, %v2129, 0
    %v2137 = vsel %vm521, %v2132, 0
    %2139 = vmatprep.subr.mxu0 0.0
    %2140 = vmatpush1.msra.mxu0 %v2131
    %2141 = vmatprep.subr.mxu0 0.0
    %2142 = vmatpush1.msra.mxu0 %v2137
    %2143 = vmatprep.subr.mxu0 0.0
    %2144 = vmatpush1.msra.mxu0 0.0
    %2145 = vmatprep.subr.mxu0 0.0
    %2146 = vmatpush1.msra.mxu0 0.0
    %2147 = vmatprep.subr.mxu0 0.0
    %2148 = vmatpush1.msra.mxu0 0.0
    %2149 = vmatprep.subr.mxu0 0.0
    %2150 = vmatpush1.msra.mxu0 0.0
    %2151 = vmatprep.subr.mxu0 0.0
    %2152 = vmatpush1.msra.mxu0 0.0
    %2153 = vmatprep.subr.mxu0 0.0
    %2154 = vmatpush1.msra.mxu0 0.0
    %2155 = vmatprep.subr.mxu0 0.0
    %2156 = vmatpush1.msra.mxu0 0.0
    %2157 = vmatprep.subr.mxu0 0.0
    %2158 = vmatpush1.msra.mxu0 0.0
    %2159 = vmatprep.subr.mxu0 0.0
    %2160 = vmatpush1.msra.mxu0 0.0
    %2161 = vmatprep.subr.mxu0 0.0
    %2162 = vmatpush1.msra.mxu0 0.0
    %2163 = vmatprep.subr.mxu0 0.0
    %2164 = vmatpush1.msra.mxu0 0.0
    %2165 = vmatprep.subr.mxu0 0.0
    %2166 = vmatpush1.msra.mxu0 0.0
    %2167 = vmatprep.subr.mxu0 0.0
    %2168 = vmatpush1.msra.mxu0 0.0
    %2169 = vmatprep.subr.mxu0 0.0
    %2170 = vmatpush1.msra.mxu0 0.0
    %2171 = vmatprep.subr.mxu0 0.0
    %2172 = vmatpush1.msra.mxu0 0.0
    %2173 = vmatprep.subr.mxu0 0.0
    %2174 = vmatpush1.msra.mxu0 0.0
    %2175 = vmatprep.subr.mxu0 0.0
    %2176 = vmatpush1.msra.mxu0 0.0
    %2177 = vmatprep.subr.mxu0 0.0
    %2178 = vmatpush1.msra.mxu0 0.0
    %2179 = vmatprep.subr.mxu0 0.0
    %2180 = vmatpush1.msra.mxu0 0.0
    %2181 = vmatprep.subr.mxu0 0.0
    %2182 = vmatpush1.msra.mxu0 0.0
    %2183 = vmatprep.subr.mxu0 0.0
    %2184 = vmatpush1.msra.mxu0 0.0
    %2185 = vmatprep.subr.mxu0 0.0
    %2186 = vmatpush1.msra.mxu0 0.0
    %2187 = vmatprep.subr.mxu0 0.0
    %2188 = vmatpush1.msra.mxu0 0.0
    %2189 = vmatprep.subr.mxu0 0.0
    %2190 = vmatpush1.msra.mxu0 0.0
    %2191 = vmatprep.subr.mxu0 0.0
    %2192 = vmatpush1.msra.mxu0 0.0
    %2193 = vmatprep.subr.mxu0 0.0
    %2194 = vmatpush1.msra.mxu0 0.0
    %2195 = vmatprep.subr.mxu0 0.0
    %2196 = vmatpush1.msra.mxu0 0.0
    %2197 = vmatprep.subr.mxu0 0.0
    %2198 = vmatpush1.msra.mxu0 0.0
    %2199 = vmatprep.subr.mxu0 0.0
    %2200 = vmatpush1.msra.mxu0 0.0
    %2201 = vmatprep.subr.mxu0 0.0
    %2202 = vmatpush1.msra.mxu0 0.0
    %2203 = vmatprep.mubr.f32.mxu0 0.0
    %2204 = vmatmul.mubr.f32.gmra.mrb[0].mxu0 %v2134
    %v2205 = vpop.f32.mrb[0].mxu0
    %v2206 = vadd.f32 0.0, %v2205
    %v2207 = vpop.f32.mrb[0].mxu0
    %2208 = vdwg.mxu0
    %v2209 = vadd.f32 %v2128, %v2206
    %v2210 = vld [vmem:[#allocation2 + $0x32] sm:$0xf]
    %s2211 = scalar_lea.vmem %s3, 336
    %v2212 = vld [vmem:[%s2211] sm:$0xff]
    %v2213 = vld [vmem:[%s2211 + $0x8] sm:$0x3]
    %v2215 = vsel %vm517, %v2210, 0
    %v2218 = vsel %vm521, %v2213, 0
    %2220 = vmatprep.subr.mxu0 0.0
    %2221 = vmatpush1.msra.mxu0 %v2212
    %2222 = vmatprep.subr.mxu0 0.0
    %2223 = vmatpush1.msra.mxu0 %v2218
    %2224 = vmatprep.subr.mxu0 0.0
    %2225 = vmatpush1.msra.mxu0 0.0
    %2226 = vmatprep.subr.mxu0 0.0
    %2227 = vmatpush1.msra.mxu0 0.0
    %2228 = vmatprep.subr.mxu0 0.0
    %2229 = vmatpush1.msra.mxu0 0.0
    %2230 = vmatprep.subr.mxu0 0.0
    %2231 = vmatpush1.msra.mxu0 0.0
    %2232 = vmatprep.subr.mxu0 0.0
    %2233 = vmatpush1.msra.mxu0 0.0
    %2234 = vmatprep.subr.mxu0 0.0
    %2235 = vmatpush1.msra.mxu0 0.0
    %2236 = vmatprep.subr.mxu0 0.0
    %2237 = vmatpush1.msra.mxu0 0.0
    %2238 = vmatprep.subr.mxu0 0.0
    %2239 = vmatpush1.msra.mxu0 0.0
    %2240 = vmatprep.subr.mxu0 0.0
    %2241 = vmatpush1.msra.mxu0 0.0
    %2242 = vmatprep.subr.mxu0 0.0
    %2243 = vmatpush1.msra.mxu0 0.0
    %2244 = vmatprep.subr.mxu0 0.0
    %2245 = vmatpush1.msra.mxu0 0.0
    %2246 = vmatprep.subr.mxu0 0.0
    %2247 = vmatpush1.msra.mxu0 0.0
    %2248 = vmatprep.subr.mxu0 0.0
    %2249 = vmatpush1.msra.mxu0 0.0
    %2250 = vmatprep.subr.mxu0 0.0
    %2251 = vmatpush1.msra.mxu0 0.0
    %2252 = vmatprep.subr.mxu0 0.0
    %2253 = vmatpush1.msra.mxu0 0.0
    %2254 = vmatprep.subr.mxu0 0.0
    %2255 = vmatpush1.msra.mxu0 0.0
    %2256 = vmatprep.subr.mxu0 0.0
    %2257 = vmatpush1.msra.mxu0 0.0
    %2258 = vmatprep.subr.mxu0 0.0
    %2259 = vmatpush1.msra.mxu0 0.0
    %2260 = vmatprep.subr.mxu0 0.0
    %2261 = vmatpush1.msra.mxu0 0.0
    %2262 = vmatprep.subr.mxu0 0.0
    %2263 = vmatpush1.msra.mxu0 0.0
    %2264 = vmatprep.subr.mxu0 0.0
    %2265 = vmatpush1.msra.mxu0 0.0
    %2266 = vmatprep.subr.mxu0 0.0
    %2267 = vmatpush1.msra.mxu0 0.0
    %2268 = vmatprep.subr.mxu0 0.0
    %2269 = vmatpush1.msra.mxu0 0.0
    %2270 = vmatprep.subr.mxu0 0.0
    %2271 = vmatpush1.msra.mxu0 0.0
    %2272 = vmatprep.subr.mxu0 0.0
    %2273 = vmatpush1.msra.mxu0 0.0
    %2274 = vmatprep.subr.mxu0 0.0
    %2275 = vmatpush1.msra.mxu0 0.0
    %2276 = vmatprep.subr.mxu0 0.0
    %2277 = vmatpush1.msra.mxu0 0.0
    %2278 = vmatprep.subr.mxu0 0.0
    %2279 = vmatpush1.msra.mxu0 0.0
    %2280 = vmatprep.subr.mxu0 0.0
    %2281 = vmatpush1.msra.mxu0 0.0
    %2282 = vmatprep.subr.mxu0 0.0
    %2283 = vmatpush1.msra.mxu0 0.0
    %2284 = vmatprep.mubr.f32.mxu0 0.0
    %2285 = vmatmul.mubr.f32.gmra.mrb[0].mxu0 %v2215
    %v2286 = vpop.f32.mrb[0].mxu0
    %v2287 = vadd.f32 0.0, %v2286
    %v2288 = vpop.f32.mrb[0].mxu0
    %2289 = vdwg.mxu0
    %v2290 = vadd.f32 %v2209, %v2287
    %v2291 = vld [vmem:[#allocation2 + $0x34] sm:$0xf]
    %s2292 = scalar_lea.vmem %s3, 352
    %v2293 = vld [vmem:[%s2292] sm:$0xff]
    %v2294 = vld [vmem:[%s2292 + $0x8] sm:$0x3]
    %v2296 = vsel %vm517, %v2291, 0
    %v2299 = vsel %vm521, %v2294, 0
    %2301 = vmatprep.subr.mxu0 0.0
    %2302 = vmatpush1.msra.mxu0 %v2293
    %2303 = vmatprep.subr.mxu0 0.0
    %2304 = vmatpush1.msra.mxu0 %v2299
    %2305 = vmatprep.subr.mxu0 0.0
    %2306 = vmatpush1.msra.mxu0 0.0
    %2307 = vmatprep.subr.mxu0 0.0
    %2308 = vmatpush1.msra.mxu0 0.0
    %2309 = vmatprep.subr.mxu0 0.0
    %2310 = vmatpush1.msra.mxu0 0.0
    %2311 = vmatprep.subr.mxu0 0.0
    %2312 = vmatpush1.msra.mxu0 0.0
    %2313 = vmatprep.subr.mxu0 0.0
    %2314 = vmatpush1.msra.mxu0 0.0
    %2315 = vmatprep.subr.mxu0 0.0
    %2316 = vmatpush1.msra.mxu0 0.0
    %2317 = vmatprep.subr.mxu0 0.0
    %2318 = vmatpush1.msra.mxu0 0.0
    %2319 = vmatprep.subr.mxu0 0.0
    %2320 = vmatpush1.msra.mxu0 0.0
    %2321 = vmatprep.subr.mxu0 0.0
    %2322 = vmatpush1.msra.mxu0 0.0
    %2323 = vmatprep.subr.mxu0 0.0
    %2324 = vmatpush1.msra.mxu0 0.0
    %2325 = vmatprep.subr.mxu0 0.0
    %2326 = vmatpush1.msra.mxu0 0.0
    %2327 = vmatprep.subr.mxu0 0.0
    %2328 = vmatpush1.msra.mxu0 0.0
    %2329 = vmatprep.subr.mxu0 0.0
    %2330 = vmatpush1.msra.mxu0 0.0
    %2331 = vmatprep.subr.mxu0 0.0
    %2332 = vmatpush1.msra.mxu0 0.0
    %2333 = vmatprep.subr.mxu0 0.0
    %2334 = vmatpush1.msra.mxu0 0.0
    %2335 = vmatprep.subr.mxu0 0.0
    %2336 = vmatpush1.msra.mxu0 0.0
    %2337 = vmatprep.subr.mxu0 0.0
    %2338 = vmatpush1.msra.mxu0 0.0
    %2339 = vmatprep.subr.mxu0 0.0
    %2340 = vmatpush1.msra.mxu0 0.0
    %2341 = vmatprep.subr.mxu0 0.0
    %2342 = vmatpush1.msra.mxu0 0.0
    %2343 = vmatprep.subr.mxu0 0.0
    %2344 = vmatpush1.msra.mxu0 0.0
    %2345 = vmatprep.subr.mxu0 0.0
    %2346 = vmatpush1.msra.mxu0 0.0
    %2347 = vmatprep.subr.mxu0 0.0
    %2348 = vmatpush1.msra.mxu0 0.0
    %2349 = vmatprep.subr.mxu0 0.0
    %2350 = vmatpush1.msra.mxu0 0.0
    %2351 = vmatprep.subr.mxu0 0.0
    %2352 = vmatpush1.msra.mxu0 0.0
    %2353 = vmatprep.subr.mxu0 0.0
    %2354 = vmatpush1.msra.mxu0 0.0
    %2355 = vmatprep.subr.mxu0 0.0
    %2356 = vmatpush1.msra.mxu0 0.0
    %2357 = vmatprep.subr.mxu0 0.0
    %2358 = vmatpush1.msra.mxu0 0.0
    %2359 = vmatprep.subr.mxu0 0.0
    %2360 = vmatpush1.msra.mxu0 0.0
    %2361 = vmatprep.subr.mxu0 0.0
    %2362 = vmatpush1.msra.mxu0 0.0
    %2363 = vmatprep.subr.mxu0 0.0
    %2364 = vmatpush1.msra.mxu0 0.0
    %2365 = vmatprep.mubr.f32.mxu0 0.0
    %2366 = vmatmul.mubr.f32.gmra.mrb[0].mxu0 %v2296
    %v2367 = vpop.f32.mrb[0].mxu0
    %v2368 = vadd.f32 0.0, %v2367
    %v2369 = vpop.f32.mrb[0].mxu0
    %2370 = vdwg.mxu0
    %v2371 = vadd.f32 %v2290, %v2368
    %v2372 = vld [vmem:[#allocation2 + $0x36] sm:$0xf]
    %s2373 = scalar_lea.vmem %s3, 368
    %v2374 = vld [vmem:[%s2373] sm:$0xff]
    %v2375 = vld [vmem:[%s2373 + $0x8] sm:$0x3]
    %v2377 = vsel %vm517, %v2372, 0
    %v2380 = vsel %vm521, %v2375, 0
    %2382 = vmatprep.subr.mxu0 0.0
    %2383 = vmatpush1.msra.mxu0 %v2374
    %2384 = vmatprep.subr.mxu0 0.0
    %2385 = vmatpush1.msra.mxu0 %v2380
    %2386 = vmatprep.subr.mxu0 0.0
    %2387 = vmatpush1.msra.mxu0 0.0
    %2388 = vmatprep.subr.mxu0 0.0
    %2389 = vmatpush1.msra.mxu0 0.0
    %2390 = vmatprep.subr.mxu0 0.0
    %2391 = vmatpush1.msra.mxu0 0.0
    %2392 = vmatprep.subr.mxu0 0.0
    %2393 = vmatpush1.msra.mxu0 0.0
    %2394 = vmatprep.subr.mxu0 0.0
    %2395 = vmatpush1.msra.mxu0 0.0
    %2396 = vmatprep.subr.mxu0 0.0
    %2397 = vmatpush1.msra.mxu0 0.0
    %2398 = vmatprep.subr.mxu0 0.0
    %2399 = vmatpush1.msra.mxu0 0.0
    %2400 = vmatprep.subr.mxu0 0.0
    %2401 = vmatpush1.msra.mxu0 0.0
    %2402 = vmatprep.subr.mxu0 0.0
    %2403 = vmatpush1.msra.mxu0 0.0
    %2404 = vmatprep.subr.mxu0 0.0
    %2405 = vmatpush1.msra.mxu0 0.0
    %2406 = vmatprep.subr.mxu0 0.0
    %2407 = vmatpush1.msra.mxu0 0.0
    %2408 = vmatprep.subr.mxu0 0.0
    %2409 = vmatpush1.msra.mxu0 0.0
    %2410 = vmatprep.subr.mxu0 0.0
    %2411 = vmatpush1.msra.mxu0 0.0
    %2412 = vmatprep.subr.mxu0 0.0
    %2413 = vmatpush1.msra.mxu0 0.0
    %2414 = vmatprep.subr.mxu0 0.0
    %2415 = vmatpush1.msra.mxu0 0.0
    %2416 = vmatprep.subr.mxu0 0.0
    %2417 = vmatpush1.msra.mxu0 0.0
    %2418 = vmatprep.subr.mxu0 0.0
    %2419 = vmatpush1.msra.mxu0 0.0
    %2420 = vmatprep.subr.mxu0 0.0
    %2421 = vmatpush1.msra.mxu0 0.0
    %2422 = vmatprep.subr.mxu0 0.0
    %2423 = vmatpush1.msra.mxu0 0.0
    %2424 = vmatprep.subr.mxu0 0.0
    %2425 = vmatpush1.msra.mxu0 0.0
    %2426 = vmatprep.subr.mxu0 0.0
    %2427 = vmatpush1.msra.mxu0 0.0
    %2428 = vmatprep.subr.mxu0 0.0
    %2429 = vmatpush1.msra.mxu0 0.0
    %2430 = vmatprep.subr.mxu0 0.0
    %2431 = vmatpush1.msra.mxu0 0.0
    %2432 = vmatprep.subr.mxu0 0.0
    %2433 = vmatpush1.msra.mxu0 0.0
    %2434 = vmatprep.subr.mxu0 0.0
    %2435 = vmatpush1.msra.mxu0 0.0
    %2436 = vmatprep.subr.mxu0 0.0
    %2437 = vmatpush1.msra.mxu0 0.0
    %2438 = vmatprep.subr.mxu0 0.0
    %2439 = vmatpush1.msra.mxu0 0.0
    %2440 = vmatprep.subr.mxu0 0.0
    %2441 = vmatpush1.msra.mxu0 0.0
    %2442 = vmatprep.subr.mxu0 0.0
    %2443 = vmatpush1.msra.mxu0 0.0
    %2444 = vmatprep.subr.mxu0 0.0
    %2445 = vmatpush1.msra.mxu0 0.0
    %2446 = vmatprep.mubr.f32.mxu0 0.0
    %2447 = vmatmul.mubr.f32.gmra.mrb[0].mxu0 %v2377
    %v2448 = vpop.f32.mrb[0].mxu0
    %v2449 = vadd.f32 0.0, %v2448
    %v2450 = vpop.f32.mrb[0].mxu0
    %2451 = vdwg.mxu0
    %v2452 = vadd.f32 %v2371, %v2449
    %v2453 = vld [vmem:[#allocation2 + $0x38] sm:$0xf]
    %s2454 = scalar_lea.vmem %s3, 384
    %v2455 = vld [vmem:[%s2454] sm:$0xff]
    %v2456 = vld [vmem:[%s2454 + $0x8] sm:$0x3]
    %v2458 = vsel %vm517, %v2453, 0
    %v2461 = vsel %vm521, %v2456, 0
    %2463 = vmatprep.subr.mxu0 0.0
    %2464 = vmatpush1.msra.mxu0 %v2455
    %2465 = vmatprep.subr.mxu0 0.0
    %2466 = vmatpush1.msra.mxu0 %v2461
    %2467 = vmatprep.subr.mxu0 0.0
    %2468 = vmatpush1.msra.mxu0 0.0
    %2469 = vmatprep.subr.mxu0 0.0
    %2470 = vmatpush1.msra.mxu0 0.0
    %2471 = vmatprep.subr.mxu0 0.0
    %2472 = vmatpush1.msra.mxu0 0.0
    %2473 = vmatprep.subr.mxu0 0.0
    %2474 = vmatpush1.msra.mxu0 0.0
    %2475 = vmatprep.subr.mxu0 0.0
    %2476 = vmatpush1.msra.mxu0 0.0
    %2477 = vmatprep.subr.mxu0 0.0
    %2478 = vmatpush1.msra.mxu0 0.0
    %2479 = vmatprep.subr.mxu0 0.0
    %2480 = vmatpush1.msra.mxu0 0.0
    %2481 = vmatprep.subr.mxu0 0.0
    %2482 = vmatpush1.msra.mxu0 0.0
    %2483 = vmatprep.subr.mxu0 0.0
    %2484 = vmatpush1.msra.mxu0 0.0
    %2485 = vmatprep.subr.mxu0 0.0
    %2486 = vmatpush1.msra.mxu0 0.0
    %2487 = vmatprep.subr.mxu0 0.0
    %2488 = vmatpush1.msra.mxu0 0.0
    %2489 = vmatprep.subr.mxu0 0.0
    %2490 = vmatpush1.msra.mxu0 0.0
    %2491 = vmatprep.subr.mxu0 0.0
    %2492 = vmatpush1.msra.mxu0 0.0
    %2493 = vmatprep.subr.mxu0 0.0
    %2494 = vmatpush1.msra.mxu0 0.0
    %2495 = vmatprep.subr.mxu0 0.0
    %2496 = vmatpush1.msra.mxu0 0.0
    %2497 = vmatprep.subr.mxu0 0.0
    %2498 = vmatpush1.msra.mxu0 0.0
    %2499 = vmatprep.subr.mxu0 0.0
    %2500 = vmatpush1.msra.mxu0 0.0
    %2501 = vmatprep.subr.mxu0 0.0
    %2502 = vmatpush1.msra.mxu0 0.0
    %2503 = vmatprep.subr.mxu0 0.0
    %2504 = vmatpush1.msra.mxu0 0.0
    %2505 = vmatprep.subr.mxu0 0.0
    %2506 = vmatpush1.msra.mxu0 0.0
    %2507 = vmatprep.subr.mxu0 0.0
    %2508 = vmatpush1.msra.mxu0 0.0
    %2509 = vmatprep.subr.mxu0 0.0
    %2510 = vmatpush1.msra.mxu0 0.0
    %2511 = vmatprep.subr.mxu0 0.0
    %2512 = vmatpush1.msra.mxu0 0.0
    %2513 = vmatprep.subr.mxu0 0.0
    %2514 = vmatpush1.msra.mxu0 0.0
    %2515 = vmatprep.subr.mxu0 0.0
    %2516 = vmatpush1.msra.mxu0 0.0
    %2517 = vmatprep.subr.mxu0 0.0
    %2518 = vmatpush1.msra.mxu0 0.0
    %2519 = vmatprep.subr.mxu0 0.0
    %2520 = vmatpush1.msra.mxu0 0.0
    %2521 = vmatprep.subr.mxu0 0.0
    %2522 = vmatpush1.msra.mxu0 0.0
    %2523 = vmatprep.subr.mxu0 0.0
    %2524 = vmatpush1.msra.mxu0 0.0
    %2525 = vmatprep.subr.mxu0 0.0
    %2526 = vmatpush1.msra.mxu0 0.0
    %2527 = vmatprep.mubr.f32.mxu0 0.0
    %2528 = vmatmul.mubr.f32.gmra.mrb[0].mxu0 %v2458
    %v2529 = vpop.f32.mrb[0].mxu0
    %v2530 = vadd.f32 0.0, %v2529
    %v2531 = vpop.f32.mrb[0].mxu0
    %2532 = vdwg.mxu0
    %v2533 = vadd.f32 %v2452, %v2530
    %v2534 = vld [vmem:[%s4] sm:$0x1]
    %v2536 = vlaneseq
    %v2537 = vshrl.u32 %v2536, 7
    %v2538 = vsub.s32 0, %v2537
    %v2539 = vrot.slane %v2534, %v2538
    %v2541 = vadd.f32 %v2533, %v2539
    %v2542 = vmax.f32 %v2541, 0.0
    %2543 = vst [vmem:[#allocation3] sm:$0xf] %v2542
    %v2544 = vld [vmem:[#allocation2 + $0xc] sm:$0xf]
    %v2545 = vld [vmem:[%s3] sm:$0xff]
    %v2546 = vld [vmem:[%s3 + $0x8] sm:$0x3]
    %v2547 = vld [vmem:[#allocation2 + $0xe] sm:$0xf]
    %v2548 = vld [vmem:[%s514] sm:$0xff]
    %v2549 = vld [vmem:[%s514 + $0x8] sm:$0x3]
    %v2551 = vsel %vm517, %v2547, 0
    %v2554 = vsel %vm521, %v2549, 0
    %2556 = vmatprep.subr.mxu0 0.0
    %2557 = vmatpush1.msra.mxu0 %v2548
    %2558 = vmatprep.subr.mxu0 0.0
    %2559 = vmatpush1.msra.mxu0 %v2554
    %2560 = vmatprep.subr.mxu0 0.0
    %2561 = vmatpush1.msra.mxu0 0.0
    %2562 = vmatprep.subr.mxu0 0.0
    %2563 = vmatpush1.msra.mxu0 0.0
    %2564 = vmatprep.subr.mxu0 0.0
    %2565 = vmatpush1.msra.mxu0 0.0
    %2566 = vmatprep.subr.mxu0 0.0
    %2567 = vmatpush1.msra.mxu0 0.0
    %2568 = vmatprep.subr.mxu0 0.0
    %2569 = vmatpush1.msra.mxu0 0.0
    %2570 = vmatprep.subr.mxu0 0.0
    %2571 = vmatpush1.msra.mxu0 0.0
    %2572 = vmatprep.subr.mxu0 0.0
    %2573 = vmatpush1.msra.mxu0 0.0
    %2574 = vmatprep.subr.mxu0 0.0
    %2575 = vmatpush1.msra.mxu0 0.0
    %2576 = vmatprep.subr.mxu0 0.0
    %2577 = vmatpush1.msra.mxu0 0.0
    %2578 = vmatprep.subr.mxu0 0.0
    %2579 = vmatpush1.msra.mxu0 0.0
    %2580 = vmatprep.subr.mxu0 0.0
    %2581 = vmatpush1.msra.mxu0 0.0
    %2582 = vmatprep.subr.mxu0 0.0
    %2583 = vmatpush1.msra.mxu0 0.0
    %2584 = vmatprep.subr.mxu0 0.0
    %2585 = vmatpush1.msra.mxu0 0.0
    %2586 = vmatprep.subr.mxu0 0.0
    %2587 = vmatpush1.msra.mxu0 0.0
    %2588 = vmatprep.subr.mxu0 0.0
    %2589 = vmatpush1.msra.mxu0 0.0
    %2590 = vmatprep.subr.mxu0 0.0
    %2591 = vmatpush1.msra.mxu0 0.0
    %2592 = vmatprep.subr.mxu0 0.0
    %2593 = vmatpush1.msra.mxu0 0.0
    %2594 = vmatprep.subr.mxu0 0.0
    %2595 = vmatpush1.msra.mxu0 0.0
    %2596 = vmatprep.subr.mxu0 0.0
    %2597 = vmatpush1.msra.mxu0 0.0
    %2598 = vmatprep.subr.mxu0 0.0
    %2599 = vmatpush1.msra.mxu0 0.0
    %2600 = vmatprep.subr.mxu0 0.0
    %2601 = vmatpush1.msra.mxu0 0.0
    %2602 = vmatprep.subr.mxu0 0.0
    %2603 = vmatpush1.msra.mxu0 0.0
    %2604 = vmatprep.subr.mxu0 0.0
    %2605 = vmatpush1.msra.mxu0 0.0
    %2606 = vmatprep.subr.mxu0 0.0
    %2607 = vmatpush1.msra.mxu0 0.0
    %2608 = vmatprep.subr.mxu0 0.0
    %2609 = vmatpush1.msra.mxu0 0.0
    %2610 = vmatprep.subr.mxu0 0.0
    %2611 = vmatpush1.msra.mxu0 0.0
    %2612 = vmatprep.subr.mxu0 0.0
    %2613 = vmatpush1.msra.mxu0 0.0
    %2614 = vmatprep.subr.mxu0 0.0
    %2615 = vmatpush1.msra.mxu0 0.0
    %2616 = vmatprep.subr.mxu0 0.0
    %2617 = vmatpush1.msra.mxu0 0.0
    %2618 = vmatprep.subr.mxu0 0.0
    %2619 = vmatpush1.msra.mxu0 0.0
    %2620 = vmatprep.mubr.f32.mxu0 0.0
    %2621 = vmatmul.mubr.f32.gmra.mrb[0].mxu0 %v2551
    %v2622 = vpop.f32.mrb[0].mxu0
    %v2623 = vadd.f32 0.0, %v2622
    %v2624 = vpop.f32.mrb[0].mxu0
    %2625 = vdwg.mxu0
    %v2627 = vsel %vm517, %v2544, 0
    %v2630 = vsel %vm521, %v2546, 0
    %2632 = vmatprep.subr.mxu0 0.0
    %2633 = vmatpush1.msra.mxu0 %v2545
    %2634 = vmatprep.subr.mxu0 0.0
    %2635 = vmatpush1.msra.mxu0 %v2630
    %2636 = vmatprep.subr.mxu0 0.0
    %2637 = vmatpush1.msra.mxu0 0.0
    %2638 = vmatprep.subr.mxu0 0.0
    %2639 = vmatpush1.msra.mxu0 0.0
    %2640 = vmatprep.subr.mxu0 0.0
    %2641 = vmatpush1.msra.mxu0 0.0
    %2642 = vmatprep.subr.mxu0 0.0
    %2643 = vmatpush1.msra.mxu0 0.0
    %2644 = vmatprep.subr.mxu0 0.0
    %2645 = vmatpush1.msra.mxu0 0.0
    %2646 = vmatprep.subr.mxu0 0.0
    %2647 = vmatpush1.msra.mxu0 0.0
    %2648 = vmatprep.subr.mxu0 0.0
    %2649 = vmatpush1.msra.mxu0 0.0
    %2650 = vmatprep.subr.mxu0 0.0
    %2651 = vmatpush1.msra.mxu0 0.0
    %2652 = vmatprep.subr.mxu0 0.0
    %2653 = vmatpush1.msra.mxu0 0.0
    %2654 = vmatprep.subr.mxu0 0.0
    %2655 = vmatpush1.msra.mxu0 0.0
    %2656 = vmatprep.subr.mxu0 0.0
    %2657 = vmatpush1.msra.mxu0 0.0
    %2658 = vmatprep.subr.mxu0 0.0
    %2659 = vmatpush1.msra.mxu0 0.0
    %2660 = vmatprep.subr.mxu0 0.0
    %2661 = vmatpush1.msra.mxu0 0.0
    %2662 = vmatprep.subr.mxu0 0.0
    %2663 = vmatpush1.msra.mxu0 0.0
    %2664 = vmatprep.subr.mxu0 0.0
    %2665 = vmatpush1.msra.mxu0 0.0
    %2666 = vmatprep.subr.mxu0 0.0
    %2667 = vmatpush1.msra.mxu0 0.0
    %2668 = vmatprep.subr.mxu0 0.0
    %2669 = vmatpush1.msra.mxu0 0.0
    %2670 = vmatprep.subr.mxu0 0.0
    %2671 = vmatpush1.msra.mxu0 0.0
    %2672 = vmatprep.subr.mxu0 0.0
    %2673 = vmatpush1.msra.mxu0 0.0
    %2674 = vmatprep.subr.mxu0 0.0
    %2675 = vmatpush1.msra.mxu0 0.0
    %2676 = vmatprep.subr.mxu0 0.0
    %2677 = vmatpush1.msra.mxu0 0.0
    %2678 = vmatprep.subr.mxu0 0.0
    %2679 = vmatpush1.msra.mxu0 0.0
    %2680 = vmatprep.subr.mxu0 0.0
    %2681 = vmatpush1.msra.mxu0 0.0
    %2682 = vmatprep.subr.mxu0 0.0
    %2683 = vmatpush1.msra.mxu0 0.0
    %2684 = vmatprep.subr.mxu0 0.0
    %2685 = vmatpush1.msra.mxu0 0.0
    %2686 = vmatprep.subr.mxu0 0.0
    %2687 = vmatpush1.msra.mxu0 0.0
    %2688 = vmatprep.subr.mxu0 0.0
    %2689 = vmatpush1.msra.mxu0 0.0
    %2690 = vmatprep.subr.mxu0 0.0
    %2691 = vmatpush1.msra.mxu0 0.0
    %2692 = vmatprep.subr.mxu0 0.0
    %2693 = vmatpush1.msra.mxu0 0.0
    %2694 = vmatprep.subr.mxu0 0.0
    %2695 = vmatpush1.msra.mxu0 0.0
    %2696 = vmatprep.mubr.f32.mxu0 0.0
    %2697 = vmatmul.mubr.f32.gmra.mrb[0].mxu0 %v2627
    %v2698 = vpop.f32.mrb[0].mxu0
    %v2699 = vadd.f32 %v2623, %v2698
    %v2700 = vpop.f32.mrb[0].mxu0
    %2701 = vdwg.mxu0
    %v2702 = vld [vmem:[#allocation2 + $0x10] sm:$0xf]
    %v2703 = vld [vmem:[%s672] sm:$0xff]
    %v2704 = vld [vmem:[%s672 + $0x8] sm:$0x3]
    %v2706 = vsel %vm517, %v2702, 0
    %v2709 = vsel %vm521, %v2704, 0
    %2711 = vmatprep.subr.mxu0 0.0
    %2712 = vmatpush1.msra.mxu0 %v2703
    %2713 = vmatprep.subr.mxu0 0.0
    %2714 = vmatpush1.msra.mxu0 %v2709
    %2715 = vmatprep.subr.mxu0 0.0
    %2716 = vmatpush1.msra.mxu0 0.0
    %2717 = vmatprep.subr.mxu0 0.0
    %2718 = vmatpush1.msra.mxu0 0.0
    %2719 = vmatprep.subr.mxu0 0.0
    %2720 = vmatpush1.msra.mxu0 0.0
    %2721 = vmatprep.subr.mxu0 0.0
    %2722 = vmatpush1.msra.mxu0 0.0
    %2723 = vmatprep.subr.mxu0 0.0
    %2724 = vmatpush1.msra.mxu0 0.0
    %2725 = vmatprep.subr.mxu0 0.0
    %2726 = vmatpush1.msra.mxu0 0.0
    %2727 = vmatprep.subr.mxu0 0.0
    %2728 = vmatpush1.msra.mxu0 0.0
    %2729 = vmatprep.subr.mxu0 0.0
    %2730 = vmatpush1.msra.mxu0 0.0
    %2731 = vmatprep.subr.mxu0 0.0
    %2732 = vmatpush1.msra.mxu0 0.0
    %2733 = vmatprep.subr.mxu0 0.0
    %2734 = vmatpush1.msra.mxu0 0.0
    %2735 = vmatprep.subr.mxu0 0.0
    %2736 = vmatpush1.msra.mxu0 0.0
    %2737 = vmatprep.subr.mxu0 0.0
    %2738 = vmatpush1.msra.mxu0 0.0
    %2739 = vmatprep.subr.mxu0 0.0
    %2740 = vmatpush1.msra.mxu0 0.0
    %2741 = vmatprep.subr.mxu0 0.0
    %2742 = vmatpush1.msra.mxu0 0.0
    %2743 = vmatprep.subr.mxu0 0.0
    %2744 = vmatpush1.msra.mxu0 0.0
    %2745 = vmatprep.subr.mxu0 0.0
    %2746 = vmatpush1.msra.mxu0 0.0
    %2747 = vmatprep.subr.mxu0 0.0
    %2748 = vmatpush1.msra.mxu0 0.0
    %2749 = vmatprep.subr.mxu0 0.0
    %2750 = vmatpush1.msra.mxu0 0.0
    %2751 = vmatprep.subr.mxu0 0.0
    %2752 = vmatpush1.msra.mxu0 0.0
    %2753 = vmatprep.subr.mxu0 0.0
    %2754 = vmatpush1.msra.mxu0 0.0
    %2755 = vmatprep.subr.mxu0 0.0
    %2756 = vmatpush1.msra.mxu0 0.0
    %2757 = vmatprep.subr.mxu0 0.0
    %2758 = vmatpush1.msra.mxu0 0.0
    %2759 = vmatprep.subr.mxu0 0.0
    %2760 = vmatpush1.msra.mxu0 0.0
    %2761 = vmatprep.subr.mxu0 0.0
    %2762 = vmatpush1.msra.mxu0 0.0
    %2763 = vmatprep.subr.mxu0 0.0
    %2764 = vmatpush1.msra.mxu0 0.0
    %2765 = vmatprep.subr.mxu0 0.0
    %2766 = vmatpush1.msra.mxu0 0.0
    %2767 = vmatprep.subr.mxu0 0.0
    %2768 = vmatpush1.msra.mxu0 0.0
    %2769 = vmatprep.subr.mxu0 0.0
    %2770 = vmatpush1.msra.mxu0 0.0
    %2771 = vmatprep.subr.mxu0 0.0
    %2772 = vmatpush1.msra.mxu0 0.0
    %2773 = vmatprep.subr.mxu0 0.0
    %2774 = vmatpush1.msra.mxu0 0.0
    %2775 = vmatprep.mubr.f32.mxu0 0.0
    %2776 = vmatmul.mubr.f32.gmra.mrb[0].mxu0 %v2706
    %v2777 = vpop.f32.mrb[0].mxu0
    %v2778 = vadd.f32 0.0, %v2777
    %v2779 = vpop.f32.mrb[0].mxu0
    %2780 = vdwg.mxu0
    %v2781 = vadd.f32 %v2699, %v2778
    %v2782 = vld [vmem:[#allocation2 + $0x12] sm:$0xf]
    %v2783 = vld [vmem:[%s753] sm:$0xff]
    %v2784 = vld [vmem:[%s753 + $0x8] sm:$0x3]
    %v2786 = vsel %vm517, %v2782, 0
    %v2789 = vsel %vm521, %v2784, 0
    %2791 = vmatprep.subr.mxu0 0.0
    %2792 = vmatpush1.msra.mxu0 %v2783
    %2793 = vmatprep.subr.mxu0 0.0
    %2794 = vmatpush1.msra.mxu0 %v2789
    %2795 = vmatprep.subr.mxu0 0.0
    %2796 = vmatpush1.msra.mxu0 0.0
    %2797 = vmatprep.subr.mxu0 0.0
    %2798 = vmatpush1.msra.mxu0 0.0
    %2799 = vmatprep.subr.mxu0 0.0
    %2800 = vmatpush1.msra.mxu0 0.0
    %2801 = vmatprep.subr.mxu0 0.0
    %2802 = vmatpush1.msra.mxu0 0.0
    %2803 = vmatprep.subr.mxu0 0.0
    %2804 = vmatpush1.msra.mxu0 0.0
    %2805 = vmatprep.subr.mxu0 0.0
    %2806 = vmatpush1.msra.mxu0 0.0
    %2807 = vmatprep.subr.mxu0 0.0
    %2808 = vmatpush1.msra.mxu0 0.0
    %2809 = vmatprep.subr.mxu0 0.0
    %2810 = vmatpush1.msra.mxu0 0.0
    %2811 = vmatprep.subr.mxu0 0.0
    %2812 = vmatpush1.msra.mxu0 0.0
    %2813 = vmatprep.subr.mxu0 0.0
    %2814 = vmatpush1.msra.mxu0 0.0
    %2815 = vmatprep.subr.mxu0 0.0
    %2816 = vmatpush1.msra.mxu0 0.0
    %2817 = vmatprep.subr.mxu0 0.0
    %2818 = vmatpush1.msra.mxu0 0.0
    %2819 = vmatprep.subr.mxu0 0.0
    %2820 = vmatpush1.msra.mxu0 0.0
    %2821 = vmatprep.subr.mxu0 0.0
    %2822 = vmatpush1.msra.mxu0 0.0
    %2823 = vmatprep.subr.mxu0 0.0
    %2824 = vmatpush1.msra.mxu0 0.0
    %2825 = vmatprep.subr.mxu0 0.0
    %2826 = vmatpush1.msra.mxu0 0.0
    %2827 = vmatprep.subr.mxu0 0.0
    %2828 = vmatpush1.msra.mxu0 0.0
    %2829 = vmatprep.subr.mxu0 0.0
    %2830 = vmatpush1.msra.mxu0 0.0
    %2831 = vmatprep.subr.mxu0 0.0
    %2832 = vmatpush1.msra.mxu0 0.0
    %2833 = vmatprep.subr.mxu0 0.0
    %2834 = vmatpush1.msra.mxu0 0.0
    %2835 = vmatprep.subr.mxu0 0.0
    %2836 = vmatpush1.msra.mxu0 0.0
    %2837 = vmatprep.subr.mxu0 0.0
    %2838 = vmatpush1.msra.mxu0 0.0
    %2839 = vmatprep.subr.mxu0 0.0
    %2840 = vmatpush1.msra.mxu0 0.0
    %2841 = vmatprep.subr.mxu0 0.0
    %2842 = vmatpush1.msra.mxu0 0.0
    %2843 = vmatprep.subr.mxu0 0.0
    %2844 = vmatpush1.msra.mxu0 0.0
    %2845 = vmatprep.subr.mxu0 0.0
    %2846 = vmatpush1.msra.mxu0 0.0
    %2847 = vmatprep.subr.mxu0 0.0
    %2848 = vmatpush1.msra.mxu0 0.0
    %2849 = vmatprep.subr.mxu0 0.0
    %2850 = vmatpush1.msra.mxu0 0.0
    %2851 = vmatprep.subr.mxu0 0.0
    %2852 = vmatpush1.msra.mxu0 0.0
    %2853 = vmatprep.subr.mxu0 0.0
    %2854 = vmatpush1.msra.mxu0 0.0
    %2855 = vmatprep.mubr.f32.mxu0 0.0
    %2856 = vmatmul.mubr.f32.gmra.mrb[0].mxu0 %v2786
    %v2857 = vpop.f32.mrb[0].mxu0
    %v2858 = vadd.f32 0.0, %v2857
    %v2859 = vpop.f32.mrb[0].mxu0
    %2860 = vdwg.mxu0
    %v2861 = vadd.f32 %v2781, %v2858
    %v2862 = vld [vmem:[#allocation2 + $0x14] sm:$0xf]
    %v2863 = vld [vmem:[%s834] sm:$0xff]
    %v2864 = vld [vmem:[%s834 + $0x8] sm:$0x3]
    %v2866 = vsel %vm517, %v2862, 0
    %v2869 = vsel %vm521, %v2864, 0
    %2871 = vmatprep.subr.mxu0 0.0
    %2872 = vmatpush1.msra.mxu0 %v2863
    %2873 = vmatprep.subr.mxu0 0.0
    %2874 = vmatpush1.msra.mxu0 %v2869
    %2875 = vmatprep.subr.mxu0 0.0
    %2876 = vmatpush1.msra.mxu0 0.0
    %2877 = vmatprep.subr.mxu0 0.0
    %2878 = vmatpush1.msra.mxu0 0.0
    %2879 = vmatprep.subr.mxu0 0.0
    %2880 = vmatpush1.msra.mxu0 0.0
    %2881 = vmatprep.subr.mxu0 0.0
    %2882 = vmatpush1.msra.mxu0 0.0
    %2883 = vmatprep.subr.mxu0 0.0
    %2884 = vmatpush1.msra.mxu0 0.0
    %2885 = vmatprep.subr.mxu0 0.0
    %2886 = vmatpush1.msra.mxu0 0.0
    %2887 = vmatprep.subr.mxu0 0.0
    %2888 = vmatpush1.msra.mxu0 0.0
    %2889 = vmatprep.subr.mxu0 0.0
    %2890 = vmatpush1.msra.mxu0 0.0
    %2891 = vmatprep.subr.mxu0 0.0
    %2892 = vmatpush1.msra.mxu0 0.0
    %2893 = vmatprep.subr.mxu0 0.0
    %2894 = vmatpush1.msra.mxu0 0.0
    %2895 = vmatprep.subr.mxu0 0.0
    %2896 = vmatpush1.msra.mxu0 0.0
    %2897 = vmatprep.subr.mxu0 0.0
    %2898 = vmatpush1.msra.mxu0 0.0
    %2899 = vmatprep.subr.mxu0 0.0
    %2900 = vmatpush1.msra.mxu0 0.0
    %2901 = vmatprep.subr.mxu0 0.0
    %2902 = vmatpush1.msra.mxu0 0.0
    %2903 = vmatprep.subr.mxu0 0.0
    %2904 = vmatpush1.msra.mxu0 0.0
    %2905 = vmatprep.subr.mxu0 0.0
    %2906 = vmatpush1.msra.mxu0 0.0
    %2907 = vmatprep.subr.mxu0 0.0
    %2908 = vmatpush1.msra.mxu0 0.0
    %2909 = vmatprep.subr.mxu0 0.0
    %2910 = vmatpush1.msra.mxu0 0.0
    %2911 = vmatprep.subr.mxu0 0.0
    %2912 = vmatpush1.msra.mxu0 0.0
    %2913 = vmatprep.subr.mxu0 0.0
    %2914 = vmatpush1.msra.mxu0 0.0
    %2915 = vmatprep.subr.mxu0 0.0
    %2916 = vmatpush1.msra.mxu0 0.0
    %2917 = vmatprep.subr.mxu0 0.0
    %2918 = vmatpush1.msra.mxu0 0.0
    %2919 = vmatprep.subr.mxu0 0.0
    %2920 = vmatpush1.msra.mxu0 0.0
    %2921 = vmatprep.subr.mxu0 0.0
    %2922 = vmatpush1.msra.mxu0 0.0
    %2923 = vmatprep.subr.mxu0 0.0
    %2924 = vmatpush1.msra.mxu0 0.0
    %2925 = vmatprep.subr.mxu0 0.0
    %2926 = vmatpush1.msra.mxu0 0.0
    %2927 = vmatprep.subr.mxu0 0.0
    %2928 = vmatpush1.msra.mxu0 0.0
    %2929 = vmatprep.subr.mxu0 0.0
    %2930 = vmatpush1.msra.mxu0 0.0
    %2931 = vmatprep.subr.mxu0 0.0
    %2932 = vmatpush1.msra.mxu0 0.0
    %2933 = vmatprep.subr.mxu0 0.0
    %2934 = vmatpush1.msra.mxu0 0.0
    %2935 = vmatprep.mubr.f32.mxu0 0.0
    %2936 = vmatmul.mubr.f32.gmra.mrb[0].mxu0 %v2866
    %v2937 = vpop.f32.mrb[0].mxu0
    %v2938 = vadd.f32 0.0, %v2937
    %v2939 = vpop.f32.mrb[0].mxu0
    %2940 = vdwg.mxu0
    %v2941 = vadd.f32 %v2861, %v2938
    %v2942 = vld [vmem:[#allocation2 + $0x18] sm:$0xf]
    %v2943 = vld [vmem:[%s915] sm:$0xff]
    %v2944 = vld [vmem:[%s915 + $0x8] sm:$0x3]
    %v2946 = vsel %vm517, %v2942, 0
    %v2949 = vsel %vm521, %v2944, 0
    %2951 = vmatprep.subr.mxu0 0.0
    %2952 = vmatpush1.msra.mxu0 %v2943
    %2953 = vmatprep.subr.mxu0 0.0
    %2954 = vmatpush1.msra.mxu0 %v2949
    %2955 = vmatprep.subr.mxu0 0.0
    %2956 = vmatpush1.msra.mxu0 0.0
    %2957 = vmatprep.subr.mxu0 0.0
    %2958 = vmatpush1.msra.mxu0 0.0
    %2959 = vmatprep.subr.mxu0 0.0
    %2960 = vmatpush1.msra.mxu0 0.0
    %2961 = vmatprep.subr.mxu0 0.0
    %2962 = vmatpush1.msra.mxu0 0.0
    %2963 = vmatprep.subr.mxu0 0.0
    %2964 = vmatpush1.msra.mxu0 0.0
    %2965 = vmatprep.subr.mxu0 0.0
    %2966 = vmatpush1.msra.mxu0 0.0
    %2967 = vmatprep.subr.mxu0 0.0
    %2968 = vmatpush1.msra.mxu0 0.0
    %2969 = vmatprep.subr.mxu0 0.0
    %2970 = vmatpush1.msra.mxu0 0.0
    %2971 = vmatprep.subr.mxu0 0.0
    %2972 = vmatpush1.msra.mxu0 0.0
    %2973 = vmatprep.subr.mxu0 0.0
    %2974 = vmatpush1.msra.mxu0 0.0
    %2975 = vmatprep.subr.mxu0 0.0
    %2976 = vmatpush1.msra.mxu0 0.0
    %2977 = vmatprep.subr.mxu0 0.0
    %2978 = vmatpush1.msra.mxu0 0.0
    %2979 = vmatprep.subr.mxu0 0.0
    %2980 = vmatpush1.msra.mxu0 0.0
    %2981 = vmatprep.subr.mxu0 0.0
    %2982 = vmatpush1.msra.mxu0 0.0
    %2983 = vmatprep.subr.mxu0 0.0
    %2984 = vmatpush1.msra.mxu0 0.0
    %2985 = vmatprep.subr.mxu0 0.0
    %2986 = vmatpush1.msra.mxu0 0.0
    %2987 = vmatprep.subr.mxu0 0.0
    %2988 = vmatpush1.msra.mxu0 0.0
    %2989 = vmatprep.subr.mxu0 0.0
    %2990 = vmatpush1.msra.mxu0 0.0
    %2991 = vmatprep.subr.mxu0 0.0
    %2992 = vmatpush1.msra.mxu0 0.0
    %2993 = vmatprep.subr.mxu0 0.0
    %2994 = vmatpush1.msra.mxu0 0.0
    %2995 = vmatprep.subr.mxu0 0.0
    %2996 = vmatpush1.msra.mxu0 0.0
    %2997 = vmatprep.subr.mxu0 0.0
    %2998 = vmatpush1.msra.mxu0 0.0
    %2999 = vmatprep.subr.mxu0 0.0
    %3000 = vmatpush1.msra.mxu0 0.0
    %3001 = vmatprep.subr.mxu0 0.0
    %3002 = vmatpush1.msra.mxu0 0.0
    %3003 = vmatprep.subr.mxu0 0.0
    %3004 = vmatpush1.msra.mxu0 0.0
    %3005 = vmatprep.subr.mxu0 0.0
    %3006 = vmatpush1.msra.mxu0 0.0
    %3007 = vmatprep.subr.mxu0 0.0
    %3008 = vmatpush1.msra.mxu0 0.0
    %3009 = vmatprep.subr.mxu0 0.0
    %3010 = vmatpush1.msra.mxu0 0.0
    %3011 = vmatprep.subr.mxu0 0.0
    %3012 = vmatpush1.msra.mxu0 0.0
    %3013 = vmatprep.subr.mxu0 0.0
    %3014 = vmatpush1.msra.mxu0 0.0
    %3015 = vmatprep.mubr.f32.mxu0 0.0
    %3016 = vmatmul.mubr.f32.gmra.mrb[0].mxu0 %v2946
    %v3017 = vpop.f32.mrb[0].mxu0
    %v3018 = vadd.f32 0.0, %v3017
    %v3019 = vpop.f32.mrb[0].mxu0
    %3020 = vdwg.mxu0
    %v3021 = vadd.f32 %v2941, %v3018
    %v3022 = vld [vmem:[#allocation2 + $0x1a] sm:$0xf]
    %v3023 = vld [vmem:[%s996] sm:$0xff]
    %v3024 = vld [vmem:[%s996 + $0x8] sm:$0x3]
    %v3026 = vsel %vm517, %v3022, 0
    %v3029 = vsel %vm521, %v3024, 0
    %3031 = vmatprep.subr.mxu0 0.0
    %3032 = vmatpush1.msra.mxu0 %v3023
    %3033 = vmatprep.subr.mxu0 0.0
    %3034 = vmatpush1.msra.mxu0 %v3029
    %3035 = vmatprep.subr.mxu0 0.0
    %3036 = vmatpush1.msra.mxu0 0.0
    %3037 = vmatprep.subr.mxu0 0.0
    %3038 = vmatpush1.msra.mxu0 0.0
    %3039 = vmatprep.subr.mxu0 0.0
    %3040 = vmatpush1.msra.mxu0 0.0
    %3041 = vmatprep.subr.mxu0 0.0
    %3042 = vmatpush1.msra.mxu0 0.0
    %3043 = vmatprep.subr.mxu0 0.0
    %3044 = vmatpush1.msra.mxu0 0.0
    %3045 = vmatprep.subr.mxu0 0.0
    %3046 = vmatpush1.msra.mxu0 0.0
    %3047 = vmatprep.subr.mxu0 0.0
    %3048 = vmatpush1.msra.mxu0 0.0
    %3049 = vmatprep.subr.mxu0 0.0
    %3050 = vmatpush1.msra.mxu0 0.0
    %3051 = vmatprep.subr.mxu0 0.0
    %3052 = vmatpush1.msra.mxu0 0.0
    %3053 = vmatprep.subr.mxu0 0.0
    %3054 = vmatpush1.msra.mxu0 0.0
    %3055 = vmatprep.subr.mxu0 0.0
    %3056 = vmatpush1.msra.mxu0 0.0
    %3057 = vmatprep.subr.mxu0 0.0
    %3058 = vmatpush1.msra.mxu0 0.0
    %3059 = vmatprep.subr.mxu0 0.0
    %3060 = vmatpush1.msra.mxu0 0.0
    %3061 = vmatprep.subr.mxu0 0.0
    %3062 = vmatpush1.msra.mxu0 0.0
    %3063 = vmatprep.subr.mxu0 0.0
    %3064 = vmatpush1.msra.mxu0 0.0
    %3065 = vmatprep.subr.mxu0 0.0
    %3066 = vmatpush1.msra.mxu0 0.0
    %3067 = vmatprep.subr.mxu0 0.0
    %3068 = vmatpush1.msra.mxu0 0.0
    %3069 = vmatprep.subr.mxu0 0.0
    %3070 = vmatpush1.msra.mxu0 0.0
    %3071 = vmatprep.subr.mxu0 0.0
    %3072 = vmatpush1.msra.mxu0 0.0
    %3073 = vmatprep.subr.mxu0 0.0
    %3074 = vmatpush1.msra.mxu0 0.0
    %3075 = vmatprep.subr.mxu0 0.0
    %3076 = vmatpush1.msra.mxu0 0.0
    %3077 = vmatprep.subr.mxu0 0.0
    %3078 = vmatpush1.msra.mxu0 0.0
    %3079 = vmatprep.subr.mxu0 0.0
    %3080 = vmatpush1.msra.mxu0 0.0
    %3081 = vmatprep.subr.mxu0 0.0
    %3082 = vmatpush1.msra.mxu0 0.0
    %3083 = vmatprep.subr.mxu0 0.0
    %3084 = vmatpush1.msra.mxu0 0.0
    %3085 = vmatprep.subr.mxu0 0.0
    %3086 = vmatpush1.msra.mxu0 0.0
    %3087 = vmatprep.subr.mxu0 0.0
    %3088 = vmatpush1.msra.mxu0 0.0
    %3089 = vmatprep.subr.mxu0 0.0
    %3090 = vmatpush1.msra.mxu0 0.0
    %3091 = vmatprep.subr.mxu0 0.0
    %3092 = vmatpush1.msra.mxu0 0.0
    %3093 = vmatprep.subr.mxu0 0.0
    %3094 = vmatpush1.msra.mxu0 0.0
    %3095 = vmatprep.mubr.f32.mxu0 0.0
    %3096 = vmatmul.mubr.f32.gmra.mrb[0].mxu0 %v3026
    %v3097 = vpop.f32.mrb[0].mxu0
    %v3098 = vadd.f32 0.0, %v3097
    %v3099 = vpop.f32.mrb[0].mxu0
    %3100 = vdwg.mxu0
    %v3101 = vadd.f32 %v3021, %v3098
    %v3102 = vld [vmem:[#allocation2 + $0x1c] sm:$0xf]
    %v3103 = vld [vmem:[%s1077] sm:$0xff]
    %v3104 = vld [vmem:[%s1077 + $0x8] sm:$0x3]
    %v3106 = vsel %vm517, %v3102, 0
    %v3109 = vsel %vm521, %v3104, 0
    %3111 = vmatprep.subr.mxu0 0.0
    %3112 = vmatpush1.msra.mxu0 %v3103
    %3113 = vmatprep.subr.mxu0 0.0
    %3114 = vmatpush1.msra.mxu0 %v3109
    %3115 = vmatprep.subr.mxu0 0.0
    %3116 = vmatpush1.msra.mxu0 0.0
    %3117 = vmatprep.subr.mxu0 0.0
    %3118 = vmatpush1.msra.mxu0 0.0
    %3119 = vmatprep.subr.mxu0 0.0
    %3120 = vmatpush1.msra.mxu0 0.0
    %3121 = vmatprep.subr.mxu0 0.0
    %3122 = vmatpush1.msra.mxu0 0.0
    %3123 = vmatprep.subr.mxu0 0.0
    %3124 = vmatpush1.msra.mxu0 0.0
    %3125 = vmatprep.subr.mxu0 0.0
    %3126 = vmatpush1.msra.mxu0 0.0
    %3127 = vmatprep.subr.mxu0 0.0
    %3128 = vmatpush1.msra.mxu0 0.0
    %3129 = vmatprep.subr.mxu0 0.0
    %3130 = vmatpush1.msra.mxu0 0.0
    %3131 = vmatprep.subr.mxu0 0.0
    %3132 = vmatpush1.msra.mxu0 0.0
    %3133 = vmatprep.subr.mxu0 0.0
    %3134 = vmatpush1.msra.mxu0 0.0
    %3135 = vmatprep.subr.mxu0 0.0
    %3136 = vmatpush1.msra.mxu0 0.0
    %3137 = vmatprep.subr.mxu0 0.0
    %3138 = vmatpush1.msra.mxu0 0.0
    %3139 = vmatprep.subr.mxu0 0.0
    %3140 = vmatpush1.msra.mxu0 0.0
    %3141 = vmatprep.subr.mxu0 0.0
    %3142 = vmatpush1.msra.mxu0 0.0
    %3143 = vmatprep.subr.mxu0 0.0
    %3144 = vmatpush1.msra.mxu0 0.0
    %3145 = vmatprep.subr.mxu0 0.0
    %3146 = vmatpush1.msra.mxu0 0.0
    %3147 = vmatprep.subr.mxu0 0.0
    %3148 = vmatpush1.msra.mxu0 0.0
    %3149 = vmatprep.subr.mxu0 0.0
    %3150 = vmatpush1.msra.mxu0 0.0
    %3151 = vmatprep.subr.mxu0 0.0
    %3152 = vmatpush1.msra.mxu0 0.0
    %3153 = vmatprep.subr.mxu0 0.0
    %3154 = vmatpush1.msra.mxu0 0.0
    %3155 = vmatprep.subr.mxu0 0.0
    %3156 = vmatpush1.msra.mxu0 0.0
    %3157 = vmatprep.subr.mxu0 0.0
    %3158 = vmatpush1.msra.mxu0 0.0
    %3159 = vmatprep.subr.mxu0 0.0
    %3160 = vmatpush1.msra.mxu0 0.0
    %3161 = vmatprep.subr.mxu0 0.0
    %3162 = vmatpush1.msra.mxu0 0.0
    %3163 = vmatprep.subr.mxu0 0.0
    %3164 = vmatpush1.msra.mxu0 0.0
    %3165 = vmatprep.subr.mxu0 0.0
    %3166 = vmatpush1.msra.mxu0 0.0
    %3167 = vmatprep.subr.mxu0 0.0
    %3168 = vmatpush1.msra.mxu0 0.0
    %3169 = vmatprep.subr.mxu0 0.0
    %3170 = vmatpush1.msra.mxu0 0.0
    %3171 = vmatprep.subr.mxu0 0.0
    %3172 = vmatpush1.msra.mxu0 0.0
    %3173 = vmatprep.subr.mxu0 0.0
    %3174 = vmatpush1.msra.mxu0 0.0
    %3175 = vmatprep.mubr.f32.mxu0 0.0
    %3176 = vmatmul.mubr.f32.gmra.mrb[0].mxu0 %v3106
    %v3177 = vpop.f32.mrb[0].mxu0
    %v3178 = vadd.f32 0.0, %v3177
    %v3179 = vpop.f32.mrb[0].mxu0
    %3180 = vdwg.mxu0
    %v3181 = vadd.f32 %v3101, %v3178
    %v3182 = vld [vmem:[#allocation2 + $0x1e] sm:$0xf]
    %v3183 = vld [vmem:[%s1158] sm:$0xff]
    %v3184 = vld [vmem:[%s1158 + $0x8] sm:$0x3]
    %v3186 = vsel %vm517, %v3182, 0
    %v3189 = vsel %vm521, %v3184, 0
    %3191 = vmatprep.subr.mxu0 0.0
    %3192 = vmatpush1.msra.mxu0 %v3183
    %3193 = vmatprep.subr.mxu0 0.0
    %3194 = vmatpush1.msra.mxu0 %v3189
    %3195 = vmatprep.subr.mxu0 0.0
    %3196 = vmatpush1.msra.mxu0 0.0
    %3197 = vmatprep.subr.mxu0 0.0
    %3198 = vmatpush1.msra.mxu0 0.0
    %3199 = vmatprep.subr.mxu0 0.0
    %3200 = vmatpush1.msra.mxu0 0.0
    %3201 = vmatprep.subr.mxu0 0.0
    %3202 = vmatpush1.msra.mxu0 0.0
    %3203 = vmatprep.subr.mxu0 0.0
    %3204 = vmatpush1.msra.mxu0 0.0
    %3205 = vmatprep.subr.mxu0 0.0
    %3206 = vmatpush1.msra.mxu0 0.0
    %3207 = vmatprep.subr.mxu0 0.0
    %3208 = vmatpush1.msra.mxu0 0.0
    %3209 = vmatprep.subr.mxu0 0.0
    %3210 = vmatpush1.msra.mxu0 0.0
    %3211 = vmatprep.subr.mxu0 0.0
    %3212 = vmatpush1.msra.mxu0 0.0
    %3213 = vmatprep.subr.mxu0 0.0
    %3214 = vmatpush1.msra.mxu0 0.0
    %3215 = vmatprep.subr.mxu0 0.0
    %3216 = vmatpush1.msra.mxu0 0.0
    %3217 = vmatprep.subr.mxu0 0.0
    %3218 = vmatpush1.msra.mxu0 0.0
    %3219 = vmatprep.subr.mxu0 0.0
    %3220 = vmatpush1.msra.mxu0 0.0
    %3221 = vmatprep.subr.mxu0 0.0
    %3222 = vmatpush1.msra.mxu0 0.0
    %3223 = vmatprep.subr.mxu0 0.0
    %3224 = vmatpush1.msra.mxu0 0.0
    %3225 = vmatprep.subr.mxu0 0.0
    %3226 = vmatpush1.msra.mxu0 0.0
    %3227 = vmatprep.subr.mxu0 0.0
    %3228 = vmatpush1.msra.mxu0 0.0
    %3229 = vmatprep.subr.mxu0 0.0
    %3230 = vmatpush1.msra.mxu0 0.0
    %3231 = vmatprep.subr.mxu0 0.0
    %3232 = vmatpush1.msra.mxu0 0.0
    %3233 = vmatprep.subr.mxu0 0.0
    %3234 = vmatpush1.msra.mxu0 0.0
    %3235 = vmatprep.subr.mxu0 0.0
    %3236 = vmatpush1.msra.mxu0 0.0
    %3237 = vmatprep.subr.mxu0 0.0
    %3238 = vmatpush1.msra.mxu0 0.0
    %3239 = vmatprep.subr.mxu0 0.0
    %3240 = vmatpush1.msra.mxu0 0.0
    %3241 = vmatprep.subr.mxu0 0.0
    %3242 = vmatpush1.msra.mxu0 0.0
    %3243 = vmatprep.subr.mxu0 0.0
    %3244 = vmatpush1.msra.mxu0 0.0
    %3245 = vmatprep.subr.mxu0 0.0
    %3246 = vmatpush1.msra.mxu0 0.0
    %3247 = vmatprep.subr.mxu0 0.0
    %3248 = vmatpush1.msra.mxu0 0.0
    %3249 = vmatprep.subr.mxu0 0.0
    %3250 = vmatpush1.msra.mxu0 0.0
    %3251 = vmatprep.subr.mxu0 0.0
    %3252 = vmatpush1.msra.mxu0 0.0
    %3253 = vmatprep.subr.mxu0 0.0
    %3254 = vmatpush1.msra.mxu0 0.0
    %3255 = vmatprep.mubr.f32.mxu0 0.0
    %3256 = vmatmul.mubr.f32.gmra.mrb[0].mxu0 %v3186
    %v3257 = vpop.f32.mrb[0].mxu0
    %v3258 = vadd.f32 0.0, %v3257
    %v3259 = vpop.f32.mrb[0].mxu0
    %3260 = vdwg.mxu0
    %v3261 = vadd.f32 %v3181, %v3258
    %v3262 = vld [vmem:[#allocation2 + $0x20] sm:$0xf]
    %v3263 = vld [vmem:[%s1239] sm:$0xff]
    %v3264 = vld [vmem:[%s1239 + $0x8] sm:$0x3]
    %v3266 = vsel %vm517, %v3262, 0
    %v3269 = vsel %vm521, %v3264, 0
    %3271 = vmatprep.subr.mxu0 0.0
    %3272 = vmatpush1.msra.mxu0 %v3263
    %3273 = vmatprep.subr.mxu0 0.0
    %3274 = vmatpush1.msra.mxu0 %v3269
    %3275 = vmatprep.subr.mxu0 0.0
    %3276 = vmatpush1.msra.mxu0 0.0
    %3277 = vmatprep.subr.mxu0 0.0
    %3278 = vmatpush1.msra.mxu0 0.0
    %3279 = vmatprep.subr.mxu0 0.0
    %3280 = vmatpush1.msra.mxu0 0.0
    %3281 = vmatprep.subr.mxu0 0.0
    %3282 = vmatpush1.msra.mxu0 0.0
    %3283 = vmatprep.subr.mxu0 0.0
    %3284 = vmatpush1.msra.mxu0 0.0
    %3285 = vmatprep.subr.mxu0 0.0
    %3286 = vmatpush1.msra.mxu0 0.0
    %3287 = vmatprep.subr.mxu0 0.0
    %3288 = vmatpush1.msra.mxu0 0.0
    %3289 = vmatprep.subr.mxu0 0.0
    %3290 = vmatpush1.msra.mxu0 0.0
    %3291 = vmatprep.subr.mxu0 0.0
    %3292 = vmatpush1.msra.mxu0 0.0
    %3293 = vmatprep.subr.mxu0 0.0
    %3294 = vmatpush1.msra.mxu0 0.0
    %3295 = vmatprep.subr.mxu0 0.0
    %3296 = vmatpush1.msra.mxu0 0.0
    %3297 = vmatprep.subr.mxu0 0.0
    %3298 = vmatpush1.msra.mxu0 0.0
    %3299 = vmatprep.subr.mxu0 0.0
    %3300 = vmatpush1.msra.mxu0 0.0
    %3301 = vmatprep.subr.mxu0 0.0
    %3302 = vmatpush1.msra.mxu0 0.0
    %3303 = vmatprep.subr.mxu0 0.0
    %3304 = vmatpush1.msra.mxu0 0.0
    %3305 = vmatprep.subr.mxu0 0.0
    %3306 = vmatpush1.msra.mxu0 0.0
    %3307 = vmatprep.subr.mxu0 0.0
    %3308 = vmatpush1.msra.mxu0 0.0
    %3309 = vmatprep.subr.mxu0 0.0
    %3310 = vmatpush1.msra.mxu0 0.0
    %3311 = vmatprep.subr.mxu0 0.0
    %3312 = vmatpush1.msra.mxu0 0.0
    %3313 = vmatprep.subr.mxu0 0.0
    %3314 = vmatpush1.msra.mxu0 0.0
    %3315 = vmatprep.subr.mxu0 0.0
    %3316 = vmatpush1.msra.mxu0 0.0
    %3317 = vmatprep.subr.mxu0 0.0
    %3318 = vmatpush1.msra.mxu0 0.0
    %3319 = vmatprep.subr.mxu0 0.0
    %3320 = vmatpush1.msra.mxu0 0.0
    %3321 = vmatprep.subr.mxu0 0.0
    %3322 = vmatpush1.msra.mxu0 0.0
    %3323 = vmatprep.subr.mxu0 0.0
    %3324 = vmatpush1.msra.mxu0 0.0
    %3325 = vmatprep.subr.mxu0 0.0
    %3326 = vmatpush1.msra.mxu0 0.0
    %3327 = vmatprep.subr.mxu0 0.0
    %3328 = vmatpush1.msra.mxu0 0.0
    %3329 = vmatprep.subr.mxu0 0.0
    %3330 = vmatpush1.msra.mxu0 0.0
    %3331 = vmatprep.subr.mxu0 0.0
    %3332 = vmatpush1.msra.mxu0 0.0
    %3333 = vmatprep.subr.mxu0 0.0
    %3334 = vmatpush1.msra.mxu0 0.0
    %3335 = vmatprep.mubr.f32.mxu0 0.0
    %3336 = vmatmul.mubr.f32.gmra.mrb[0].mxu0 %v3266
    %v3337 = vpop.f32.mrb[0].mxu0
    %v3338 = vadd.f32 0.0, %v3337
    %v3339 = vpop.f32.mrb[0].mxu0
    %3340 = vdwg.mxu0
    %v3341 = vadd.f32 %v3261, %v3338
    %v3342 = vld [vmem:[#allocation2 + $0x24] sm:$0xf]
    %v3343 = vld [vmem:[%s1320] sm:$0xff]
    %v3344 = vld [vmem:[%s1320 + $0x8] sm:$0x3]
    %v3346 = vsel %vm517, %v3342, 0
    %v3349 = vsel %vm521, %v3344, 0
    %3351 = vmatprep.subr.mxu0 0.0
    %3352 = vmatpush1.msra.mxu0 %v3343
    %3353 = vmatprep.subr.mxu0 0.0
    %3354 = vmatpush1.msra.mxu0 %v3349
    %3355 = vmatprep.subr.mxu0 0.0
    %3356 = vmatpush1.msra.mxu0 0.0
    %3357 = vmatprep.subr.mxu0 0.0
    %3358 = vmatpush1.msra.mxu0 0.0
    %3359 = vmatprep.subr.mxu0 0.0
    %3360 = vmatpush1.msra.mxu0 0.0
    %3361 = vmatprep.subr.mxu0 0.0
    %3362 = vmatpush1.msra.mxu0 0.0
    %3363 = vmatprep.subr.mxu0 0.0
    %3364 = vmatpush1.msra.mxu0 0.0
    %3365 = vmatprep.subr.mxu0 0.0
    %3366 = vmatpush1.msra.mxu0 0.0
    %3367 = vmatprep.subr.mxu0 0.0
    %3368 = vmatpush1.msra.mxu0 0.0
    %3369 = vmatprep.subr.mxu0 0.0
    %3370 = vmatpush1.msra.mxu0 0.0
    %3371 = vmatprep.subr.mxu0 0.0
    %3372 = vmatpush1.msra.mxu0 0.0
    %3373 = vmatprep.subr.mxu0 0.0
    %3374 = vmatpush1.msra.mxu0 0.0
    %3375 = vmatprep.subr.mxu0 0.0
    %3376 = vmatpush1.msra.mxu0 0.0
    %3377 = vmatprep.subr.mxu0 0.0
    %3378 = vmatpush1.msra.mxu0 0.0
    %3379 = vmatprep.subr.mxu0 0.0
    %3380 = vmatpush1.msra.mxu0 0.0
    %3381 = vmatprep.subr.mxu0 0.0
    %3382 = vmatpush1.msra.mxu0 0.0
    %3383 = vmatprep.subr.mxu0 0.0
    %3384 = vmatpush1.msra.mxu0 0.0
    %3385 = vmatprep.subr.mxu0 0.0
    %3386 = vmatpush1.msra.mxu0 0.0
    %3387 = vmatprep.subr.mxu0 0.0
    %3388 = vmatpush1.msra.mxu0 0.0
    %3389 = vmatprep.subr.mxu0 0.0
    %3390 = vmatpush1.msra.mxu0 0.0
    %3391 = vmatprep.subr.mxu0 0.0
    %3392 = vmatpush1.msra.mxu0 0.0
    %3393 = vmatprep.subr.mxu0 0.0
    %3394 = vmatpush1.msra.mxu0 0.0
    %3395 = vmatprep.subr.mxu0 0.0
    %3396 = vmatpush1.msra.mxu0 0.0
    %3397 = vmatprep.subr.mxu0 0.0
    %3398 = vmatpush1.msra.mxu0 0.0
    %3399 = vmatprep.subr.mxu0 0.0
    %3400 = vmatpush1.msra.mxu0 0.0
    %3401 = vmatprep.subr.mxu0 0.0
    %3402 = vmatpush1.msra.mxu0 0.0
    %3403 = vmatprep.subr.mxu0 0.0
    %3404 = vmatpush1.msra.mxu0 0.0
    %3405 = vmatprep.subr.mxu0 0.0
    %3406 = vmatpush1.msra.mxu0 0.0
    %3407 = vmatprep.subr.mxu0 0.0
    %3408 = vmatpush1.msra.mxu0 0.0
    %3409 = vmatprep.subr.mxu0 0.0
    %3410 = vmatpush1.msra.mxu0 0.0
    %3411 = vmatprep.subr.mxu0 0.0
    %3412 = vmatpush1.msra.mxu0 0.0
    %3413 = vmatprep.subr.mxu0 0.0
    %3414 = vmatpush1.msra.mxu0 0.0
    %3415 = vmatprep.mubr.f32.mxu0 0.0
    %3416 = vmatmul.mubr.f32.gmra.mrb[0].mxu0 %v3346
    %v3417 = vpop.f32.mrb[0].mxu0
    %v3418 = vadd.f32 0.0, %v3417
    %v3419 = vpop.f32.mrb[0].mxu0
    %3420 = vdwg.mxu0
    %v3421 = vadd.f32 %v3341, %v3418
    %v3422 = vld [vmem:[#allocation2 + $0x26] sm:$0xf]
    %v3423 = vld [vmem:[%s1401] sm:$0xff]
    %v3424 = vld [vmem:[%s1401 + $0x8] sm:$0x3]
    %v3426 = vsel %vm517, %v3422, 0
    %v3429 = vsel %vm521, %v3424, 0
    %3431 = vmatprep.subr.mxu0 0.0
    %3432 = vmatpush1.msra.mxu0 %v3423
    %3433 = vmatprep.subr.mxu0 0.0
    %3434 = vmatpush1.msra.mxu0 %v3429
    %3435 = vmatprep.subr.mxu0 0.0
    %3436 = vmatpush1.msra.mxu0 0.0
    %3437 = vmatprep.subr.mxu0 0.0
    %3438 = vmatpush1.msra.mxu0 0.0
    %3439 = vmatprep.subr.mxu0 0.0
    %3440 = vmatpush1.msra.mxu0 0.0
    %3441 = vmatprep.subr.mxu0 0.0
    %3442 = vmatpush1.msra.mxu0 0.0
    %3443 = vmatprep.subr.mxu0 0.0
    %3444 = vmatpush1.msra.mxu0 0.0
    %3445 = vmatprep.subr.mxu0 0.0
    %3446 = vmatpush1.msra.mxu0 0.0
    %3447 = vmatprep.subr.mxu0 0.0
    %3448 = vmatpush1.msra.mxu0 0.0
    %3449 = vmatprep.subr.mxu0 0.0
    %3450 = vmatpush1.msra.mxu0 0.0
    %3451 = vmatprep.subr.mxu0 0.0
    %3452 = vmatpush1.msra.mxu0 0.0
    %3453 = vmatprep.subr.mxu0 0.0
    %3454 = vmatpush1.msra.mxu0 0.0
    %3455 = vmatprep.subr.mxu0 0.0
    %3456 = vmatpush1.msra.mxu0 0.0
    %3457 = vmatprep.subr.mxu0 0.0
    %3458 = vmatpush1.msra.mxu0 0.0
    %3459 = vmatprep.subr.mxu0 0.0
    %3460 = vmatpush1.msra.mxu0 0.0
    %3461 = vmatprep.subr.mxu0 0.0
    %3462 = vmatpush1.msra.mxu0 0.0
    %3463 = vmatprep.subr.mxu0 0.0
    %3464 = vmatpush1.msra.mxu0 0.0
    %3465 = vmatprep.subr.mxu0 0.0
    %3466 = vmatpush1.msra.mxu0 0.0
    %3467 = vmatprep.subr.mxu0 0.0
    %3468 = vmatpush1.msra.mxu0 0.0
    %3469 = vmatprep.subr.mxu0 0.0
    %3470 = vmatpush1.msra.mxu0 0.0
    %3471 = vmatprep.subr.mxu0 0.0
    %3472 = vmatpush1.msra.mxu0 0.0
    %3473 = vmatprep.subr.mxu0 0.0
    %3474 = vmatpush1.msra.mxu0 0.0
    %3475 = vmatprep.subr.mxu0 0.0
    %3476 = vmatpush1.msra.mxu0 0.0
    %3477 = vmatprep.subr.mxu0 0.0
    %3478 = vmatpush1.msra.mxu0 0.0
    %3479 = vmatprep.subr.mxu0 0.0
    %3480 = vmatpush1.msra.mxu0 0.0
    %3481 = vmatprep.subr.mxu0 0.0
    %3482 = vmatpush1.msra.mxu0 0.0
    %3483 = vmatprep.subr.mxu0 0.0
    %3484 = vmatpush1.msra.mxu0 0.0
    %3485 = vmatprep.subr.mxu0 0.0
    %3486 = vmatpush1.msra.mxu0 0.0
    %3487 = vmatprep.subr.mxu0 0.0
    %3488 = vmatpush1.msra.mxu0 0.0
    %3489 = vmatprep.subr.mxu0 0.0
    %3490 = vmatpush1.msra.mxu0 0.0
    %3491 = vmatprep.subr.mxu0 0.0
    %3492 = vmatpush1.msra.mxu0 0.0
    %3493 = vmatprep.subr.mxu0 0.0
    %3494 = vmatpush1.msra.mxu0 0.0
    %3495 = vmatprep.mubr.f32.mxu0 0.0
    %3496 = vmatmul.mubr.f32.gmra.mrb[0].mxu0 %v3426
    %v3497 = vpop.f32.mrb[0].mxu0
    %v3498 = vadd.f32 0.0, %v3497
    %v3499 = vpop.f32.mrb[0].mxu0
    %3500 = vdwg.mxu0
    %v3501 = vadd.f32 %v3421, %v3498
    %v3502 = vld [vmem:[#allocation2 + $0x28] sm:$0xf]
    %v3503 = vld [vmem:[%s1482] sm:$0xff]
    %v3504 = vld [vmem:[%s1482 + $0x8] sm:$0x3]
    %v3506 = vsel %vm517, %v3502, 0
    %v3509 = vsel %vm521, %v3504, 0
    %3511 = vmatprep.subr.mxu0 0.0
    %3512 = vmatpush1.msra.mxu0 %v3503
    %3513 = vmatprep.subr.mxu0 0.0
    %3514 = vmatpush1.msra.mxu0 %v3509
    %3515 = vmatprep.subr.mxu0 0.0
    %3516 = vmatpush1.msra.mxu0 0.0
    %3517 = vmatprep.subr.mxu0 0.0
    %3518 = vmatpush1.msra.mxu0 0.0
    %3519 = vmatprep.subr.mxu0 0.0
    %3520 = vmatpush1.msra.mxu0 0.0
    %3521 = vmatprep.subr.mxu0 0.0
    %3522 = vmatpush1.msra.mxu0 0.0
    %3523 = vmatprep.subr.mxu0 0.0
    %3524 = vmatpush1.msra.mxu0 0.0
    %3525 = vmatprep.subr.mxu0 0.0
    %3526 = vmatpush1.msra.mxu0 0.0
    %3527 = vmatprep.subr.mxu0 0.0
    %3528 = vmatpush1.msra.mxu0 0.0
    %3529 = vmatprep.subr.mxu0 0.0
    %3530 = vmatpush1.msra.mxu0 0.0
    %3531 = vmatprep.subr.mxu0 0.0
    %3532 = vmatpush1.msra.mxu0 0.0
    %3533 = vmatprep.subr.mxu0 0.0
    %3534 = vmatpush1.msra.mxu0 0.0
    %3535 = vmatprep.subr.mxu0 0.0
    %3536 = vmatpush1.msra.mxu0 0.0
    %3537 = vmatprep.subr.mxu0 0.0
    %3538 = vmatpush1.msra.mxu0 0.0
    %3539 = vmatprep.subr.mxu0 0.0
    %3540 = vmatpush1.msra.mxu0 0.0
    %3541 = vmatprep.subr.mxu0 0.0
    %3542 = vmatpush1.msra.mxu0 0.0
    %3543 = vmatprep.subr.mxu0 0.0
    %3544 = vmatpush1.msra.mxu0 0.0
    %3545 = vmatprep.subr.mxu0 0.0
    %3546 = vmatpush1.msra.mxu0 0.0
    %3547 = vmatprep.subr.mxu0 0.0
    %3548 = vmatpush1.msra.mxu0 0.0
    %3549 = vmatprep.subr.mxu0 0.0
    %3550 = vmatpush1.msra.mxu0 0.0
    %3551 = vmatprep.subr.mxu0 0.0
    %3552 = vmatpush1.msra.mxu0 0.0
    %3553 = vmatprep.subr.mxu0 0.0
    %3554 = vmatpush1.msra.mxu0 0.0
    %3555 = vmatprep.subr.mxu0 0.0
    %3556 = vmatpush1.msra.mxu0 0.0
    %3557 = vmatprep.subr.mxu0 0.0
    %3558 = vmatpush1.msra.mxu0 0.0
    %3559 = vmatprep.subr.mxu0 0.0
    %3560 = vmatpush1.msra.mxu0 0.0
    %3561 = vmatprep.subr.mxu0 0.0
    %3562 = vmatpush1.msra.mxu0 0.0
    %3563 = vmatprep.subr.mxu0 0.0
    %3564 = vmatpush1.msra.mxu0 0.0
    %3565 = vmatprep.subr.mxu0 0.0
    %3566 = vmatpush1.msra.mxu0 0.0
    %3567 = vmatprep.subr.mxu0 0.0
    %3568 = vmatpush1.msra.mxu0 0.0
    %3569 = vmatprep.subr.mxu0 0.0
    %3570 = vmatpush1.msra.mxu0 0.0
    %3571 = vmatprep.subr.mxu0 0.0
    %3572 = vmatpush1.msra.mxu0 0.0
    %3573 = vmatprep.subr.mxu0 0.0
    %3574 = vmatpush1.msra.mxu0 0.0
    %3575 = vmatprep.mubr.f32.mxu0 0.0
    %3576 = vmatmul.mubr.f32.gmra.mrb[0].mxu0 %v3506
    %v3577 = vpop.f32.mrb[0].mxu0
    %v3578 = vadd.f32 0.0, %v3577
    %v3579 = vpop.f32.mrb[0].mxu0
    %3580 = vdwg.mxu0
    %v3581 = vadd.f32 %v3501, %v3578
    %v3582 = vld [vmem:[#allocation2 + $0x2a] sm:$0xf]
    %v3583 = vld [vmem:[%s1563] sm:$0xff]
    %v3584 = vld [vmem:[%s1563 + $0x8] sm:$0x3]
    %v3586 = vsel %vm517, %v3582, 0
    %v3589 = vsel %vm521, %v3584, 0
    %3591 = vmatprep.subr.mxu0 0.0
    %3592 = vmatpush1.msra.mxu0 %v3583
    %3593 = vmatprep.subr.mxu0 0.0
    %3594 = vmatpush1.msra.mxu0 %v3589
    %3595 = vmatprep.subr.mxu0 0.0
    %3596 = vmatpush1.msra.mxu0 0.0
    %3597 = vmatprep.subr.mxu0 0.0
    %3598 = vmatpush1.msra.mxu0 0.0
    %3599 = vmatprep.subr.mxu0 0.0
    %3600 = vmatpush1.msra.mxu0 0.0
    %3601 = vmatprep.subr.mxu0 0.0
    %3602 = vmatpush1.msra.mxu0 0.0
    %3603 = vmatprep.subr.mxu0 0.0
    %3604 = vmatpush1.msra.mxu0 0.0
    %3605 = vmatprep.subr.mxu0 0.0
    %3606 = vmatpush1.msra.mxu0 0.0
    %3607 = vmatprep.subr.mxu0 0.0
    %3608 = vmatpush1.msra.mxu0 0.0
    %3609 = vmatprep.subr.mxu0 0.0
    %3610 = vmatpush1.msra.mxu0 0.0
    %3611 = vmatprep.subr.mxu0 0.0
    %3612 = vmatpush1.msra.mxu0 0.0
    %3613 = vmatprep.subr.mxu0 0.0
    %3614 = vmatpush1.msra.mxu0 0.0
    %3615 = vmatprep.subr.mxu0 0.0
    %3616 = vmatpush1.msra.mxu0 0.0
    %3617 = vmatprep.subr.mxu0 0.0
    %3618 = vmatpush1.msra.mxu0 0.0
    %3619 = vmatprep.subr.mxu0 0.0
    %3620 = vmatpush1.msra.mxu0 0.0
    %3621 = vmatprep.subr.mxu0 0.0
    %3622 = vmatpush1.msra.mxu0 0.0
    %3623 = vmatprep.subr.mxu0 0.0
    %3624 = vmatpush1.msra.mxu0 0.0
    %3625 = vmatprep.subr.mxu0 0.0
    %3626 = vmatpush1.msra.mxu0 0.0
    %3627 = vmatprep.subr.mxu0 0.0
    %3628 = vmatpush1.msra.mxu0 0.0
    %3629 = vmatprep.subr.mxu0 0.0
    %3630 = vmatpush1.msra.mxu0 0.0
    %3631 = vmatprep.subr.mxu0 0.0
    %3632 = vmatpush1.msra.mxu0 0.0
    %3633 = vmatprep.subr.mxu0 0.0
    %3634 = vmatpush1.msra.mxu0 0.0
    %3635 = vmatprep.subr.mxu0 0.0
    %3636 = vmatpush1.msra.mxu0 0.0
    %3637 = vmatprep.subr.mxu0 0.0
    %3638 = vmatpush1.msra.mxu0 0.0
    %3639 = vmatprep.subr.mxu0 0.0
    %3640 = vmatpush1.msra.mxu0 0.0
    %3641 = vmatprep.subr.mxu0 0.0
    %3642 = vmatpush1.msra.mxu0 0.0
    %3643 = vmatprep.subr.mxu0 0.0
    %3644 = vmatpush1.msra.mxu0 0.0
    %3645 = vmatprep.subr.mxu0 0.0
    %3646 = vmatpush1.msra.mxu0 0.0
    %3647 = vmatprep.subr.mxu0 0.0
    %3648 = vmatpush1.msra.mxu0 0.0
    %3649 = vmatprep.subr.mxu0 0.0
    %3650 = vmatpush1.msra.mxu0 0.0
    %3651 = vmatprep.subr.mxu0 0.0
    %3652 = vmatpush1.msra.mxu0 0.0
    %3653 = vmatprep.subr.mxu0 0.0
    %3654 = vmatpush1.msra.mxu0 0.0
    %3655 = vmatprep.mubr.f32.mxu0 0.0
    %3656 = vmatmul.mubr.f32.gmra.mrb[0].mxu0 %v3586
    %v3657 = vpop.f32.mrb[0].mxu0
    %v3658 = vadd.f32 0.0, %v3657
    %v3659 = vpop.f32.mrb[0].mxu0
    %3660 = vdwg.mxu0
    %v3661 = vadd.f32 %v3581, %v3658
    %v3662 = vld [vmem:[#allocation2 + $0x2c] sm:$0xf]
    %v3663 = vld [vmem:[%s1644] sm:$0xff]
    %v3664 = vld [vmem:[%s1644 + $0x8] sm:$0x3]
    %v3666 = vsel %vm517, %v3662, 0
    %v3669 = vsel %vm521, %v3664, 0
    %3671 = vmatprep.subr.mxu0 0.0
    %3672 = vmatpush1.msra.mxu0 %v3663
    %3673 = vmatprep.subr.mxu0 0.0
    %3674 = vmatpush1.msra.mxu0 %v3669
    %3675 = vmatprep.subr.mxu0 0.0
    %3676 = vmatpush1.msra.mxu0 0.0
    %3677 = vmatprep.subr.mxu0 0.0
    %3678 = vmatpush1.msra.mxu0 0.0
    %3679 = vmatprep.subr.mxu0 0.0
    %3680 = vmatpush1.msra.mxu0 0.0
    %3681 = vmatprep.subr.mxu0 0.0
    %3682 = vmatpush1.msra.mxu0 0.0
    %3683 = vmatprep.subr.mxu0 0.0
    %3684 = vmatpush1.msra.mxu0 0.0
    %3685 = vmatprep.subr.mxu0 0.0
    %3686 = vmatpush1.msra.mxu0 0.0
    %3687 = vmatprep.subr.mxu0 0.0
    %3688 = vmatpush1.msra.mxu0 0.0
    %3689 = vmatprep.subr.mxu0 0.0
    %3690 = vmatpush1.msra.mxu0 0.0
    %3691 = vmatprep.subr.mxu0 0.0
    %3692 = vmatpush1.msra.mxu0 0.0
    %3693 = vmatprep.subr.mxu0 0.0
    %3694 = vmatpush1.msra.mxu0 0.0
    %3695 = vmatprep.subr.mxu0 0.0
    %3696 = vmatpush1.msra.mxu0 0.0
    %3697 = vmatprep.subr.mxu0 0.0
    %3698 = vmatpush1.msra.mxu0 0.0
    %3699 = vmatprep.subr.mxu0 0.0
    %3700 = vmatpush1.msra.mxu0 0.0
    %3701 = vmatprep.subr.mxu0 0.0
    %3702 = vmatpush1.msra.mxu0 0.0
    %3703 = vmatprep.subr.mxu0 0.0
    %3704 = vmatpush1.msra.mxu0 0.0
    %3705 = vmatprep.subr.mxu0 0.0
    %3706 = vmatpush1.msra.mxu0 0.0
    %3707 = vmatprep.subr.mxu0 0.0
    %3708 = vmatpush1.msra.mxu0 0.0
    %3709 = vmatprep.subr.mxu0 0.0
    %3710 = vmatpush1.msra.mxu0 0.0
    %3711 = vmatprep.subr.mxu0 0.0
    %3712 = vmatpush1.msra.mxu0 0.0
    %3713 = vmatprep.subr.mxu0 0.0
    %3714 = vmatpush1.msra.mxu0 0.0
    %3715 = vmatprep.subr.mxu0 0.0
    %3716 = vmatpush1.msra.mxu0 0.0
    %3717 = vmatprep.subr.mxu0 0.0
    %3718 = vmatpush1.msra.mxu0 0.0
    %3719 = vmatprep.subr.mxu0 0.0
    %3720 = vmatpush1.msra.mxu0 0.0
    %3721 = vmatprep.subr.mxu0 0.0
    %3722 = vmatpush1.msra.mxu0 0.0
    %3723 = vmatprep.subr.mxu0 0.0
    %3724 = vmatpush1.msra.mxu0 0.0
    %3725 = vmatprep.subr.mxu0 0.0
    %3726 = vmatpush1.msra.mxu0 0.0
    %3727 = vmatprep.subr.mxu0 0.0
    %3728 = vmatpush1.msra.mxu0 0.0
    %3729 = vmatprep.subr.mxu0 0.0
    %3730 = vmatpush1.msra.mxu0 0.0
    %3731 = vmatprep.subr.mxu0 0.0
    %3732 = vmatpush1.msra.mxu0 0.0
    %3733 = vmatprep.subr.mxu0 0.0
    %3734 = vmatpush1.msra.mxu0 0.0
    %3735 = vmatprep.mubr.f32.mxu0 0.0
    %3736 = vmatmul.mubr.f32.gmra.mrb[0].mxu0 %v3666
    %v3737 = vpop.f32.mrb[0].mxu0
    %v3738 = vadd.f32 0.0, %v3737
    %v3739 = vpop.f32.mrb[0].mxu0
    %3740 = vdwg.mxu0
    %v3741 = vadd.f32 %v3661, %v3738
    %v3742 = vld [vmem:[#allocation2 + $0x30] sm:$0xf]
    %v3743 = vld [vmem:[%s1725] sm:$0xff]
    %v3744 = vld [vmem:[%s1725 + $0x8] sm:$0x3]
    %v3746 = vsel %vm517, %v3742, 0
    %v3749 = vsel %vm521, %v3744, 0
    %3751 = vmatprep.subr.mxu0 0.0
    %3752 = vmatpush1.msra.mxu0 %v3743
    %3753 = vmatprep.subr.mxu0 0.0
    %3754 = vmatpush1.msra.mxu0 %v3749
    %3755 = vmatprep.subr.mxu0 0.0
    %3756 = vmatpush1.msra.mxu0 0.0
    %3757 = vmatprep.subr.mxu0 0.0
    %3758 = vmatpush1.msra.mxu0 0.0
    %3759 = vmatprep.subr.mxu0 0.0
    %3760 = vmatpush1.msra.mxu0 0.0
    %3761 = vmatprep.subr.mxu0 0.0
    %3762 = vmatpush1.msra.mxu0 0.0
    %3763 = vmatprep.subr.mxu0 0.0
    %3764 = vmatpush1.msra.mxu0 0.0
    %3765 = vmatprep.subr.mxu0 0.0
    %3766 = vmatpush1.msra.mxu0 0.0
    %3767 = vmatprep.subr.mxu0 0.0
    %3768 = vmatpush1.msra.mxu0 0.0
    %3769 = vmatprep.subr.mxu0 0.0
    %3770 = vmatpush1.msra.mxu0 0.0
    %3771 = vmatprep.subr.mxu0 0.0
    %3772 = vmatpush1.msra.mxu0 0.0
    %3773 = vmatprep.subr.mxu0 0.0
    %3774 = vmatpush1.msra.mxu0 0.0
    %3775 = vmatprep.subr.mxu0 0.0
    %3776 = vmatpush1.msra.mxu0 0.0
    %3777 = vmatprep.subr.mxu0 0.0
    %3778 = vmatpush1.msra.mxu0 0.0
    %3779 = vmatprep.subr.mxu0 0.0
    %3780 = vmatpush1.msra.mxu0 0.0
    %3781 = vmatprep.subr.mxu0 0.0
    %3782 = vmatpush1.msra.mxu0 0.0
    %3783 = vmatprep.subr.mxu0 0.0
    %3784 = vmatpush1.msra.mxu0 0.0
    %3785 = vmatprep.subr.mxu0 0.0
    %3786 = vmatpush1.msra.mxu0 0.0
    %3787 = vmatprep.subr.mxu0 0.0
    %3788 = vmatpush1.msra.mxu0 0.0
    %3789 = vmatprep.subr.mxu0 0.0
    %3790 = vmatpush1.msra.mxu0 0.0
    %3791 = vmatprep.subr.mxu0 0.0
    %3792 = vmatpush1.msra.mxu0 0.0
    %3793 = vmatprep.subr.mxu0 0.0
    %3794 = vmatpush1.msra.mxu0 0.0
    %3795 = vmatprep.subr.mxu0 0.0
    %3796 = vmatpush1.msra.mxu0 0.0
    %3797 = vmatprep.subr.mxu0 0.0
    %3798 = vmatpush1.msra.mxu0 0.0
    %3799 = vmatprep.subr.mxu0 0.0
    %3800 = vmatpush1.msra.mxu0 0.0
    %3801 = vmatprep.subr.mxu0 0.0
    %3802 = vmatpush1.msra.mxu0 0.0
    %3803 = vmatprep.subr.mxu0 0.0
    %3804 = vmatpush1.msra.mxu0 0.0
    %3805 = vmatprep.subr.mxu0 0.0
    %3806 = vmatpush1.msra.mxu0 0.0
    %3807 = vmatprep.subr.mxu0 0.0
    %3808 = vmatpush1.msra.mxu0 0.0
    %3809 = vmatprep.subr.mxu0 0.0
    %3810 = vmatpush1.msra.mxu0 0.0
    %3811 = vmatprep.subr.mxu0 0.0
    %3812 = vmatpush1.msra.mxu0 0.0
    %3813 = vmatprep.subr.mxu0 0.0
    %3814 = vmatpush1.msra.mxu0 0.0
    %3815 = vmatprep.mubr.f32.mxu0 0.0
    %3816 = vmatmul.mubr.f32.gmra.mrb[0].mxu0 %v3746
    %v3817 = vpop.f32.mrb[0].mxu0
    %v3818 = vadd.f32 0.0, %v3817
    %v3819 = vpop.f32.mrb[0].mxu0
    %3820 = vdwg.mxu0
    %v3821 = vadd.f32 %v3741, %v3818
    %v3822 = vld [vmem:[#allocation2 + $0x32] sm:$0xf]
    %v3823 = vld [vmem:[%s1806] sm:$0xff]
    %v3824 = vld [vmem:[%s1806 + $0x8] sm:$0x3]
    %v3826 = vsel %vm517, %v3822, 0
    %v3829 = vsel %vm521, %v3824, 0
    %3831 = vmatprep.subr.mxu0 0.0
    %3832 = vmatpush1.msra.mxu0 %v3823
    %3833 = vmatprep.subr.mxu0 0.0
    %3834 = vmatpush1.msra.mxu0 %v3829
    %3835 = vmatprep.subr.mxu0 0.0
    %3836 = vmatpush1.msra.mxu0 0.0
    %3837 = vmatprep.subr.mxu0 0.0
    %3838 = vmatpush1.msra.mxu0 0.0
    %3839 = vmatprep.subr.mxu0 0.0
    %3840 = vmatpush1.msra.mxu0 0.0
    %3841 = vmatprep.subr.mxu0 0.0
    %3842 = vmatpush1.msra.mxu0 0.0
    %3843 = vmatprep.subr.mxu0 0.0
    %3844 = vmatpush1.msra.mxu0 0.0
    %3845 = vmatprep.subr.mxu0 0.0
    %3846 = vmatpush1.msra.mxu0 0.0
    %3847 = vmatprep.subr.mxu0 0.0
    %3848 = vmatpush1.msra.mxu0 0.0
    %3849 = vmatprep.subr.mxu0 0.0
    %3850 = vmatpush1.msra.mxu0 0.0
    %3851 = vmatprep.subr.mxu0 0.0
    %3852 = vmatpush1.msra.mxu0 0.0
    %3853 = vmatprep.subr.mxu0 0.0
    %3854 = vmatpush1.msra.mxu0 0.0
    %3855 = vmatprep.subr.mxu0 0.0
    %3856 = vmatpush1.msra.mxu0 0.0
    %3857 = vmatprep.subr.mxu0 0.0
    %3858 = vmatpush1.msra.mxu0 0.0
    %3859 = vmatprep.subr.mxu0 0.0
    %3860 = vmatpush1.msra.mxu0 0.0
    %3861 = vmatprep.subr.mxu0 0.0
    %3862 = vmatpush1.msra.mxu0 0.0
    %3863 = vmatprep.subr.mxu0 0.0
    %3864 = vmatpush1.msra.mxu0 0.0
    %3865 = vmatprep.subr.mxu0 0.0
    %3866 = vmatpush1.msra.mxu0 0.0
    %3867 = vmatprep.subr.mxu0 0.0
    %3868 = vmatpush1.msra.mxu0 0.0
    %3869 = vmatprep.subr.mxu0 0.0
    %3870 = vmatpush1.msra.mxu0 0.0
    %3871 = vmatprep.subr.mxu0 0.0
    %3872 = vmatpush1.msra.mxu0 0.0
    %3873 = vmatprep.subr.mxu0 0.0
    %3874 = vmatpush1.msra.mxu0 0.0
    %3875 = vmatprep.subr.mxu0 0.0
    %3876 = vmatpush1.msra.mxu0 0.0
    %3877 = vmatprep.subr.mxu0 0.0
    %3878 = vmatpush1.msra.mxu0 0.0
    %3879 = vmatprep.subr.mxu0 0.0
    %3880 = vmatpush1.msra.mxu0 0.0
    %3881 = vmatprep.subr.mxu0 0.0
    %3882 = vmatpush1.msra.mxu0 0.0
    %3883 = vmatprep.subr.mxu0 0.0
    %3884 = vmatpush1.msra.mxu0 0.0
    %3885 = vmatprep.subr.mxu0 0.0
    %3886 = vmatpush1.msra.mxu0 0.0
    %3887 = vmatprep.subr.mxu0 0.0
    %3888 = vmatpush1.msra.mxu0 0.0
    %3889 = vmatprep.subr.mxu0 0.0
    %3890 = vmatpush1.msra.mxu0 0.0
    %3891 = vmatprep.subr.mxu0 0.0
    %3892 = vmatpush1.msra.mxu0 0.0
    %3893 = vmatprep.subr.mxu0 0.0
    %3894 = vmatpush1.msra.mxu0 0.0
    %3895 = vmatprep.mubr.f32.mxu0 0.0
    %3896 = vmatmul.mubr.f32.gmra.mrb[0].mxu0 %v3826
    %v3897 = vpop.f32.mrb[0].mxu0
    %v3898 = vadd.f32 0.0, %v3897
    %v3899 = vpop.f32.mrb[0].mxu0
    %3900 = vdwg.mxu0
    %v3901 = vadd.f32 %v3821, %v3898
    %v3902 = vld [vmem:[#allocation2 + $0x34] sm:$0xf]
    %v3903 = vld [vmem:[%s1887] sm:$0xff]
    %v3904 = vld [vmem:[%s1887 + $0x8] sm:$0x3]
    %v3906 = vsel %vm517, %v3902, 0
    %v3909 = vsel %vm521, %v3904, 0
    %3911 = vmatprep.subr.mxu0 0.0
    %3912 = vmatpush1.msra.mxu0 %v3903
    %3913 = vmatprep.subr.mxu0 0.0
    %3914 = vmatpush1.msra.mxu0 %v3909
    %3915 = vmatprep.subr.mxu0 0.0
    %3916 = vmatpush1.msra.mxu0 0.0
    %3917 = vmatprep.subr.mxu0 0.0
    %3918 = vmatpush1.msra.mxu0 0.0
    %3919 = vmatprep.subr.mxu0 0.0
    %3920 = vmatpush1.msra.mxu0 0.0
    %3921 = vmatprep.subr.mxu0 0.0
    %3922 = vmatpush1.msra.mxu0 0.0
    %3923 = vmatprep.subr.mxu0 0.0
    %3924 = vmatpush1.msra.mxu0 0.0
    %3925 = vmatprep.subr.mxu0 0.0
    %3926 = vmatpush1.msra.mxu0 0.0
    %3927 = vmatprep.subr.mxu0 0.0
    %3928 = vmatpush1.msra.mxu0 0.0
    %3929 = vmatprep.subr.mxu0 0.0
    %3930 = vmatpush1.msra.mxu0 0.0
    %3931 = vmatprep.subr.mxu0 0.0
    %3932 = vmatpush1.msra.mxu0 0.0
    %3933 = vmatprep.subr.mxu0 0.0
    %3934 = vmatpush1.msra.mxu0 0.0
    %3935 = vmatprep.subr.mxu0 0.0
    %3936 = vmatpush1.msra.mxu0 0.0
    %3937 = vmatprep.subr.mxu0 0.0
    %3938 = vmatpush1.msra.mxu0 0.0
    %3939 = vmatprep.subr.mxu0 0.0
    %3940 = vmatpush1.msra.mxu0 0.0
    %3941 = vmatprep.subr.mxu0 0.0
    %3942 = vmatpush1.msra.mxu0 0.0
    %3943 = vmatprep.subr.mxu0 0.0
    %3944 = vmatpush1.msra.mxu0 0.0
    %3945 = vmatprep.subr.mxu0 0.0
    %3946 = vmatpush1.msra.mxu0 0.0
    %3947 = vmatprep.subr.mxu0 0.0
    %3948 = vmatpush1.msra.mxu0 0.0
    %3949 = vmatprep.subr.mxu0 0.0
    %3950 = vmatpush1.msra.mxu0 0.0
    %3951 = vmatprep.subr.mxu0 0.0
    %3952 = vmatpush1.msra.mxu0 0.0
    %3953 = vmatprep.subr.mxu0 0.0
    %3954 = vmatpush1.msra.mxu0 0.0
    %3955 = vmatprep.subr.mxu0 0.0
    %3956 = vmatpush1.msra.mxu0 0.0
    %3957 = vmatprep.subr.mxu0 0.0
    %3958 = vmatpush1.msra.mxu0 0.0
    %3959 = vmatprep.subr.mxu0 0.0
    %3960 = vmatpush1.msra.mxu0 0.0
    %3961 = vmatprep.subr.mxu0 0.0
    %3962 = vmatpush1.msra.mxu0 0.0
    %3963 = vmatprep.subr.mxu0 0.0
    %3964 = vmatpush1.msra.mxu0 0.0
    %3965 = vmatprep.subr.mxu0 0.0
    %3966 = vmatpush1.msra.mxu0 0.0
    %3967 = vmatprep.subr.mxu0 0.0
    %3968 = vmatpush1.msra.mxu0 0.0
    %3969 = vmatprep.subr.mxu0 0.0
    %3970 = vmatpush1.msra.mxu0 0.0
    %3971 = vmatprep.subr.mxu0 0.0
    %3972 = vmatpush1.msra.mxu0 0.0
    %3973 = vmatprep.subr.mxu0 0.0
    %3974 = vmatpush1.msra.mxu0 0.0
    %3975 = vmatprep.mubr.f32.mxu0 0.0
    %3976 = vmatmul.mubr.f32.gmra.mrb[0].mxu0 %v3906
    %v3977 = vpop.f32.mrb[0].mxu0
    %v3978 = vadd.f32 0.0, %v3977
    %v3979 = vpop.f32.mrb[0].mxu0
    %3980 = vdwg.mxu0
    %v3981 = vadd.f32 %v3901, %v3978
    %v3982 = vld [vmem:[#allocation2 + $0x36] sm:$0xf]
    %v3983 = vld [vmem:[%s1968] sm:$0xff]
    %v3984 = vld [vmem:[%s1968 + $0x8] sm:$0x3]
    %v3986 = vsel %vm517, %v3982, 0
    %v3989 = vsel %vm521, %v3984, 0
    %3991 = vmatprep.subr.mxu0 0.0
    %3992 = vmatpush1.msra.mxu0 %v3983
    %3993 = vmatprep.subr.mxu0 0.0
    %3994 = vmatpush1.msra.mxu0 %v3989
    %3995 = vmatprep.subr.mxu0 0.0
    %3996 = vmatpush1.msra.mxu0 0.0
    %3997 = vmatprep.subr.mxu0 0.0
    %3998 = vmatpush1.msra.mxu0 0.0
    %3999 = vmatprep.subr.mxu0 0.0
    %4000 = vmatpush1.msra.mxu0 0.0
    %4001 = vmatprep.subr.mxu0 0.0
    %4002 = vmatpush1.msra.mxu0 0.0
    %4003 = vmatprep.subr.mxu0 0.0
    %4004 = vmatpush1.msra.mxu0 0.0
    %4005 = vmatprep.subr.mxu0 0.0
    %4006 = vmatpush1.msra.mxu0 0.0
    %4007 = vmatprep.subr.mxu0 0.0
    %4008 = vmatpush1.msra.mxu0 0.0
    %4009 = vmatprep.subr.mxu0 0.0
    %4010 = vmatpush1.msra.mxu0 0.0
    %4011 = vmatprep.subr.mxu0 0.0
    %4012 = vmatpush1.msra.mxu0 0.0
    %4013 = vmatprep.subr.mxu0 0.0
    %4014 = vmatpush1.msra.mxu0 0.0
    %4015 = vmatprep.subr.mxu0 0.0
    %4016 = vmatpush1.msra.mxu0 0.0
    %4017 = vmatprep.subr.mxu0 0.0
    %4018 = vmatpush1.msra.mxu0 0.0
    %4019 = vmatprep.subr.mxu0 0.0
    %4020 = vmatpush1.msra.mxu0 0.0
    %4021 = vmatprep.subr.mxu0 0.0
    %4022 = vmatpush1.msra.mxu0 0.0
    %4023 = vmatprep.subr.mxu0 0.0
    %4024 = vmatpush1.msra.mxu0 0.0
    %4025 = vmatprep.subr.mxu0 0.0
    %4026 = vmatpush1.msra.mxu0 0.0
    %4027 = vmatprep.subr.mxu0 0.0
    %4028 = vmatpush1.msra.mxu0 0.0
    %4029 = vmatprep.subr.mxu0 0.0
    %4030 = vmatpush1.msra.mxu0 0.0
    %4031 = vmatprep.subr.mxu0 0.0
    %4032 = vmatpush1.msra.mxu0 0.0
    %4033 = vmatprep.subr.mxu0 0.0
    %4034 = vmatpush1.msra.mxu0 0.0
    %4035 = vmatprep.subr.mxu0 0.0
    %4036 = vmatpush1.msra.mxu0 0.0
    %4037 = vmatprep.subr.mxu0 0.0
    %4038 = vmatpush1.msra.mxu0 0.0
    %4039 = vmatprep.subr.mxu0 0.0
    %4040 = vmatpush1.msra.mxu0 0.0
    %4041 = vmatprep.subr.mxu0 0.0
    %4042 = vmatpush1.msra.mxu0 0.0
    %4043 = vmatprep.subr.mxu0 0.0
    %4044 = vmatpush1.msra.mxu0 0.0
    %4045 = vmatprep.subr.mxu0 0.0
    %4046 = vmatpush1.msra.mxu0 0.0
    %4047 = vmatprep.subr.mxu0 0.0
    %4048 = vmatpush1.msra.mxu0 0.0
    %4049 = vmatprep.subr.mxu0 0.0
    %4050 = vmatpush1.msra.mxu0 0.0
    %4051 = vmatprep.subr.mxu0 0.0
    %4052 = vmatpush1.msra.mxu0 0.0
    %4053 = vmatprep.subr.mxu0 0.0
    %4054 = vmatpush1.msra.mxu0 0.0
    %4055 = vmatprep.mubr.f32.mxu0 0.0
    %4056 = vmatmul.mubr.f32.gmra.mrb[0].mxu0 %v3986
    %v4057 = vpop.f32.mrb[0].mxu0
    %v4058 = vadd.f32 0.0, %v4057
    %v4059 = vpop.f32.mrb[0].mxu0
    %4060 = vdwg.mxu0
    %v4061 = vadd.f32 %v3981, %v4058
    %v4062 = vld [vmem:[#allocation2 + $0x38] sm:$0xf]
    %v4063 = vld [vmem:[%s2049] sm:$0xff]
    %v4064 = vld [vmem:[%s2049 + $0x8] sm:$0x3]
    %v4066 = vsel %vm517, %v4062, 0
    %v4069 = vsel %vm521, %v4064, 0
    %4071 = vmatprep.subr.mxu0 0.0
    %4072 = vmatpush1.msra.mxu0 %v4063
    %4073 = vmatprep.subr.mxu0 0.0
    %4074 = vmatpush1.msra.mxu0 %v4069
    %4075 = vmatprep.subr.mxu0 0.0
    %4076 = vmatpush1.msra.mxu0 0.0
    %4077 = vmatprep.subr.mxu0 0.0
    %4078 = vmatpush1.msra.mxu0 0.0
    %4079 = vmatprep.subr.mxu0 0.0
    %4080 = vmatpush1.msra.mxu0 0.0
    %4081 = vmatprep.subr.mxu0 0.0
    %4082 = vmatpush1.msra.mxu0 0.0
    %4083 = vmatprep.subr.mxu0 0.0
    %4084 = vmatpush1.msra.mxu0 0.0
    %4085 = vmatprep.subr.mxu0 0.0
    %4086 = vmatpush1.msra.mxu0 0.0
    %4087 = vmatprep.subr.mxu0 0.0
    %4088 = vmatpush1.msra.mxu0 0.0
    %4089 = vmatprep.subr.mxu0 0.0
    %4090 = vmatpush1.msra.mxu0 0.0
    %4091 = vmatprep.subr.mxu0 0.0
    %4092 = vmatpush1.msra.mxu0 0.0
    %4093 = vmatprep.subr.mxu0 0.0
    %4094 = vmatpush1.msra.mxu0 0.0
    %4095 = vmatprep.subr.mxu0 0.0
    %4096 = vmatpush1.msra.mxu0 0.0
    %4097 = vmatprep.subr.mxu0 0.0
    %4098 = vmatpush1.msra.mxu0 0.0
    %4099 = vmatprep.subr.mxu0 0.0
    %4100 = vmatpush1.msra.mxu0 0.0
    %4101 = vmatprep.subr.mxu0 0.0
    %4102 = vmatpush1.msra.mxu0 0.0
    %4103 = vmatprep.subr.mxu0 0.0
    %4104 = vmatpush1.msra.mxu0 0.0
    %4105 = vmatprep.subr.mxu0 0.0
    %4106 = vmatpush1.msra.mxu0 0.0
    %4107 = vmatprep.subr.mxu0 0.0
    %4108 = vmatpush1.msra.mxu0 0.0
    %4109 = vmatprep.subr.mxu0 0.0
    %4110 = vmatpush1.msra.mxu0 0.0
    %4111 = vmatprep.subr.mxu0 0.0
    %4112 = vmatpush1.msra.mxu0 0.0
    %4113 = vmatprep.subr.mxu0 0.0
    %4114 = vmatpush1.msra.mxu0 0.0
    %4115 = vmatprep.subr.mxu0 0.0
    %4116 = vmatpush1.msra.mxu0 0.0
    %4117 = vmatprep.subr.mxu0 0.0
    %4118 = vmatpush1.msra.mxu0 0.0
    %4119 = vmatprep.subr.mxu0 0.0
    %4120 = vmatpush1.msra.mxu0 0.0
    %4121 = vmatprep.subr.mxu0 0.0
    %4122 = vmatpush1.msra.mxu0 0.0
    %4123 = vmatprep.subr.mxu0 0.0
    %4124 = vmatpush1.msra.mxu0 0.0
    %4125 = vmatprep.subr.mxu0 0.0
    %4126 = vmatpush1.msra.mxu0 0.0
    %4127 = vmatprep.subr.mxu0 0.0
    %4128 = vmatpush1.msra.mxu0 0.0
    %4129 = vmatprep.subr.mxu0 0.0
    %4130 = vmatpush1.msra.mxu0 0.0
    %4131 = vmatprep.subr.mxu0 0.0
    %4132 = vmatpush1.msra.mxu0 0.0
    %4133 = vmatprep.subr.mxu0 0.0
    %4134 = vmatpush1.msra.mxu0 0.0
    %4135 = vmatprep.mubr.f32.mxu0 0.0
    %4136 = vmatmul.mubr.f32.gmra.mrb[0].mxu0 %v4066
    %v4137 = vpop.f32.mrb[0].mxu0
    %v4138 = vadd.f32 0.0, %v4137
    %v4139 = vpop.f32.mrb[0].mxu0
    %4140 = vdwg.mxu0
    %v4141 = vadd.f32 %v4061, %v4138
    %v4142 = vld [vmem:[#allocation2 + $0x3c] sm:$0xf]
    %v4143 = vld [vmem:[%s2130] sm:$0xff]
    %v4144 = vld [vmem:[%s2130 + $0x8] sm:$0x3]
    %v4146 = vsel %vm517, %v4142, 0
    %v4149 = vsel %vm521, %v4144, 0
    %4151 = vmatprep.subr.mxu0 0.0
    %4152 = vmatpush1.msra.mxu0 %v4143
    %4153 = vmatprep.subr.mxu0 0.0
    %4154 = vmatpush1.msra.mxu0 %v4149
    %4155 = vmatprep.subr.mxu0 0.0
    %4156 = vmatpush1.msra.mxu0 0.0
    %4157 = vmatprep.subr.mxu0 0.0
    %4158 = vmatpush1.msra.mxu0 0.0
    %4159 = vmatprep.subr.mxu0 0.0
    %4160 = vmatpush1.msra.mxu0 0.0
    %4161 = vmatprep.subr.mxu0 0.0
    %4162 = vmatpush1.msra.mxu0 0.0
    %4163 = vmatprep.subr.mxu0 0.0
    %4164 = vmatpush1.msra.mxu0 0.0
    %4165 = vmatprep.subr.mxu0 0.0
    %4166 = vmatpush1.msra.mxu0 0.0
    %4167 = vmatprep.subr.mxu0 0.0
    %4168 = vmatpush1.msra.mxu0 0.0
    %4169 = vmatprep.subr.mxu0 0.0
    %4170 = vmatpush1.msra.mxu0 0.0
    %4171 = vmatprep.subr.mxu0 0.0
    %4172 = vmatpush1.msra.mxu0 0.0
    %4173 = vmatprep.subr.mxu0 0.0
    %4174 = vmatpush1.msra.mxu0 0.0
    %4175 = vmatprep.subr.mxu0 0.0
    %4176 = vmatpush1.msra.mxu0 0.0
    %4177 = vmatprep.subr.mxu0 0.0
    %4178 = vmatpush1.msra.mxu0 0.0
    %4179 = vmatprep.subr.mxu0 0.0
    %4180 = vmatpush1.msra.mxu0 0.0
    %4181 = vmatprep.subr.mxu0 0.0
    %4182 = vmatpush1.msra.mxu0 0.0
    %4183 = vmatprep.subr.mxu0 0.0
    %4184 = vmatpush1.msra.mxu0 0.0
    %4185 = vmatprep.subr.mxu0 0.0
    %4186 = vmatpush1.msra.mxu0 0.0
    %4187 = vmatprep.subr.mxu0 0.0
    %4188 = vmatpush1.msra.mxu0 0.0
    %4189 = vmatprep.subr.mxu0 0.0
    %4190 = vmatpush1.msra.mxu0 0.0
    %4191 = vmatprep.subr.mxu0 0.0
    %4192 = vmatpush1.msra.mxu0 0.0
    %4193 = vmatprep.subr.mxu0 0.0
    %4194 = vmatpush1.msra.mxu0 0.0
    %4195 = vmatprep.subr.mxu0 0.0
    %4196 = vmatpush1.msra.mxu0 0.0
    %4197 = vmatprep.subr.mxu0 0.0
    %4198 = vmatpush1.msra.mxu0 0.0
    %4199 = vmatprep.subr.mxu0 0.0
    %4200 = vmatpush1.msra.mxu0 0.0
    %4201 = vmatprep.subr.mxu0 0.0
    %4202 = vmatpush1.msra.mxu0 0.0
    %4203 = vmatprep.subr.mxu0 0.0
    %4204 = vmatpush1.msra.mxu0 0.0
    %4205 = vmatprep.subr.mxu0 0.0
    %4206 = vmatpush1.msra.mxu0 0.0
    %4207 = vmatprep.subr.mxu0 0.0
    %4208 = vmatpush1.msra.mxu0 0.0
    %4209 = vmatprep.subr.mxu0 0.0
    %4210 = vmatpush1.msra.mxu0 0.0
    %4211 = vmatprep.subr.mxu0 0.0
    %4212 = vmatpush1.msra.mxu0 0.0
    %4213 = vmatprep.subr.mxu0 0.0
    %4214 = vmatpush1.msra.mxu0 0.0
    %4215 = vmatprep.mubr.f32.mxu0 0.0
    %4216 = vmatmul.mubr.f32.gmra.mrb[0].mxu0 %v4146
    %v4217 = vpop.f32.mrb[0].mxu0
    %v4218 = vadd.f32 0.0, %v4217
    %v4219 = vpop.f32.mrb[0].mxu0
    %4220 = vdwg.mxu0
    %v4221 = vadd.f32 %v4141, %v4218
    %v4222 = vld [vmem:[#allocation2 + $0x3e] sm:$0xf]
    %v4223 = vld [vmem:[%s2211] sm:$0xff]
    %v4224 = vld [vmem:[%s2211 + $0x8] sm:$0x3]
    %v4226 = vsel %vm517, %v4222, 0
    %v4229 = vsel %vm521, %v4224, 0
    %4231 = vmatprep.subr.mxu0 0.0
    %4232 = vmatpush1.msra.mxu0 %v4223
    %4233 = vmatprep.subr.mxu0 0.0
    %4234 = vmatpush1.msra.mxu0 %v4229
    %4235 = vmatprep.subr.mxu0 0.0
    %4236 = vmatpush1.msra.mxu0 0.0
    %4237 = vmatprep.subr.mxu0 0.0
    %4238 = vmatpush1.msra.mxu0 0.0
    %4239 = vmatprep.subr.mxu0 0.0
    %4240 = vmatpush1.msra.mxu0 0.0
    %4241 = vmatprep.subr.mxu0 0.0
    %4242 = vmatpush1.msra.mxu0 0.0
    %4243 = vmatprep.subr.mxu0 0.0
    %4244 = vmatpush1.msra.mxu0 0.0
    %4245 = vmatprep.subr.mxu0 0.0
    %4246 = vmatpush1.msra.mxu0 0.0
    %4247 = vmatprep.subr.mxu0 0.0
    %4248 = vmatpush1.msra.mxu0 0.0
    %4249 = vmatprep.subr.mxu0 0.0
    %4250 = vmatpush1.msra.mxu0 0.0
    %4251 = vmatprep.subr.mxu0 0.0
    %4252 = vmatpush1.msra.mxu0 0.0
    %4253 = vmatprep.subr.mxu0 0.0
    %4254 = vmatpush1.msra.mxu0 0.0
    %4255 = vmatprep.subr.mxu0 0.0
    %4256 = vmatpush1.msra.mxu0 0.0
    %4257 = vmatprep.subr.mxu0 0.0
    %4258 = vmatpush1.msra.mxu0 0.0
    %4259 = vmatprep.subr.mxu0 0.0
    %4260 = vmatpush1.msra.mxu0 0.0
    %4261 = vmatprep.subr.mxu0 0.0
    %4262 = vmatpush1.msra.mxu0 0.0
    %4263 = vmatprep.subr.mxu0 0.0
    %4264 = vmatpush1.msra.mxu0 0.0
    %4265 = vmatprep.subr.mxu0 0.0
    %4266 = vmatpush1.msra.mxu0 0.0
    %4267 = vmatprep.subr.mxu0 0.0
    %4268 = vmatpush1.msra.mxu0 0.0
    %4269 = vmatprep.subr.mxu0 0.0
    %4270 = vmatpush1.msra.mxu0 0.0
    %4271 = vmatprep.subr.mxu0 0.0
    %4272 = vmatpush1.msra.mxu0 0.0
    %4273 = vmatprep.subr.mxu0 0.0
    %4274 = vmatpush1.msra.mxu0 0.0
    %4275 = vmatprep.subr.mxu0 0.0
    %4276 = vmatpush1.msra.mxu0 0.0
    %4277 = vmatprep.subr.mxu0 0.0
    %4278 = vmatpush1.msra.mxu0 0.0
    %4279 = vmatprep.subr.mxu0 0.0
    %4280 = vmatpush1.msra.mxu0 0.0
    %4281 = vmatprep.subr.mxu0 0.0
    %4282 = vmatpush1.msra.mxu0 0.0
    %4283 = vmatprep.subr.mxu0 0.0
    %4284 = vmatpush1.msra.mxu0 0.0
    %4285 = vmatprep.subr.mxu0 0.0
    %4286 = vmatpush1.msra.mxu0 0.0
    %4287 = vmatprep.subr.mxu0 0.0
    %4288 = vmatpush1.msra.mxu0 0.0
    %4289 = vmatprep.subr.mxu0 0.0
    %4290 = vmatpush1.msra.mxu0 0.0
    %4291 = vmatprep.subr.mxu0 0.0
    %4292 = vmatpush1.msra.mxu0 0.0
    %4293 = vmatprep.subr.mxu0 0.0
    %4294 = vmatpush1.msra.mxu0 0.0
    %4295 = vmatprep.mubr.f32.mxu0 0.0
    %4296 = vmatmul.mubr.f32.gmra.mrb[0].mxu0 %v4226
    %v4297 = vpop.f32.mrb[0].mxu0
    %v4298 = vadd.f32 0.0, %v4297
    %v4299 = vpop.f32.mrb[0].mxu0
    %4300 = vdwg.mxu0
    %v4301 = vadd.f32 %v4221, %v4298
    %v4302 = vld [vmem:[#allocation2 + $0x40] sm:$0xf]
    %v4303 = vld [vmem:[%s2292] sm:$0xff]
    %v4304 = vld [vmem:[%s2292 + $0x8] sm:$0x3]
    %v4306 = vsel %vm517, %v4302, 0
    %v4309 = vsel %vm521, %v4304, 0
    %4311 = vmatprep.subr.mxu0 0.0
    %4312 = vmatpush1.msra.mxu0 %v4303
    %4313 = vmatprep.subr.mxu0 0.0
    %4314 = vmatpush1.msra.mxu0 %v4309
    %4315 = vmatprep.subr.mxu0 0.0
    %4316 = vmatpush1.msra.mxu0 0.0
    %4317 = vmatprep.subr.mxu0 0.0
    %4318 = vmatpush1.msra.mxu0 0.0
    %4319 = vmatprep.subr.mxu0 0.0
    %4320 = vmatpush1.msra.mxu0 0.0
    %4321 = vmatprep.subr.mxu0 0.0
    %4322 = vmatpush1.msra.mxu0 0.0
    %4323 = vmatprep.subr.mxu0 0.0
    %4324 = vmatpush1.msra.mxu0 0.0
    %4325 = vmatprep.subr.mxu0 0.0
    %4326 = vmatpush1.msra.mxu0 0.0
    %4327 = vmatprep.subr.mxu0 0.0
    %4328 = vmatpush1.msra.mxu0 0.0
    %4329 = vmatprep.subr.mxu0 0.0
    %4330 = vmatpush1.msra.mxu0 0.0
    %4331 = vmatprep.subr.mxu0 0.0
    %4332 = vmatpush1.msra.mxu0 0.0
    %4333 = vmatprep.subr.mxu0 0.0
    %4334 = vmatpush1.msra.mxu0 0.0
    %4335 = vmatprep.subr.mxu0 0.0
    %4336 = vmatpush1.msra.mxu0 0.0
    %4337 = vmatprep.subr.mxu0 0.0
    %4338 = vmatpush1.msra.mxu0 0.0
    %4339 = vmatprep.subr.mxu0 0.0
    %4340 = vmatpush1.msra.mxu0 0.0
    %4341 = vmatprep.subr.mxu0 0.0
    %4342 = vmatpush1.msra.mxu0 0.0
    %4343 = vmatprep.subr.mxu0 0.0
    %4344 = vmatpush1.msra.mxu0 0.0
    %4345 = vmatprep.subr.mxu0 0.0
    %4346 = vmatpush1.msra.mxu0 0.0
    %4347 = vmatprep.subr.mxu0 0.0
    %4348 = vmatpush1.msra.mxu0 0.0
    %4349 = vmatprep.subr.mxu0 0.0
    %4350 = vmatpush1.msra.mxu0 0.0
    %4351 = vmatprep.subr.mxu0 0.0
    %4352 = vmatpush1.msra.mxu0 0.0
    %4353 = vmatprep.subr.mxu0 0.0
    %4354 = vmatpush1.msra.mxu0 0.0
    %4355 = vmatprep.subr.mxu0 0.0
    %4356 = vmatpush1.msra.mxu0 0.0
    %4357 = vmatprep.subr.mxu0 0.0
    %4358 = vmatpush1.msra.mxu0 0.0
    %4359 = vmatprep.subr.mxu0 0.0
    %4360 = vmatpush1.msra.mxu0 0.0
    %4361 = vmatprep.subr.mxu0 0.0
    %4362 = vmatpush1.msra.mxu0 0.0
    %4363 = vmatprep.subr.mxu0 0.0
    %4364 = vmatpush1.msra.mxu0 0.0
    %4365 = vmatprep.subr.mxu0 0.0
    %4366 = vmatpush1.msra.mxu0 0.0
    %4367 = vmatprep.subr.mxu0 0.0
    %4368 = vmatpush1.msra.mxu0 0.0
    %4369 = vmatprep.subr.mxu0 0.0
    %4370 = vmatpush1.msra.mxu0 0.0
    %4371 = vmatprep.subr.mxu0 0.0
    %4372 = vmatpush1.msra.mxu0 0.0
    %4373 = vmatprep.subr.mxu0 0.0
    %4374 = vmatpush1.msra.mxu0 0.0
    %4375 = vmatprep.mubr.f32.mxu0 0.0
    %4376 = vmatmul.mubr.f32.gmra.mrb[0].mxu0 %v4306
    %v4377 = vpop.f32.mrb[0].mxu0
    %v4378 = vadd.f32 0.0, %v4377
    %v4379 = vpop.f32.mrb[0].mxu0
    %4380 = vdwg.mxu0
    %v4381 = vadd.f32 %v4301, %v4378
    %v4382 = vld [vmem:[#allocation2 + $0x42] sm:$0xf]
    %v4383 = vld [vmem:[%s2373] sm:$0xff]
    %v4384 = vld [vmem:[%s2373 + $0x8] sm:$0x3]
    %v4386 = vsel %vm517, %v4382, 0
    %v4389 = vsel %vm521, %v4384, 0
    %4391 = vmatprep.subr.mxu0 0.0
    %4392 = vmatpush1.msra.mxu0 %v4383
    %4393 = vmatprep.subr.mxu0 0.0
    %4394 = vmatpush1.msra.mxu0 %v4389
    %4395 = vmatprep.subr.mxu0 0.0
    %4396 = vmatpush1.msra.mxu0 0.0
    %4397 = vmatprep.subr.mxu0 0.0
    %4398 = vmatpush1.msra.mxu0 0.0
    %4399 = vmatprep.subr.mxu0 0.0
    %4400 = vmatpush1.msra.mxu0 0.0
    %4401 = vmatprep.subr.mxu0 0.0
    %4402 = vmatpush1.msra.mxu0 0.0
    %4403 = vmatprep.subr.mxu0 0.0
    %4404 = vmatpush1.msra.mxu0 0.0
    %4405 = vmatprep.subr.mxu0 0.0
    %4406 = vmatpush1.msra.mxu0 0.0
    %4407 = vmatprep.subr.mxu0 0.0
    %4408 = vmatpush1.msra.mxu0 0.0
    %4409 = vmatprep.subr.mxu0 0.0
    %4410 = vmatpush1.msra.mxu0 0.0
    %4411 = vmatprep.subr.mxu0 0.0
    %4412 = vmatpush1.msra.mxu0 0.0
    %4413 = vmatprep.subr.mxu0 0.0
    %4414 = vmatpush1.msra.mxu0 0.0
    %4415 = vmatprep.subr.mxu0 0.0
    %4416 = vmatpush1.msra.mxu0 0.0
    %4417 = vmatprep.subr.mxu0 0.0
    %4418 = vmatpush1.msra.mxu0 0.0
    %4419 = vmatprep.subr.mxu0 0.0
    %4420 = vmatpush1.msra.mxu0 0.0
    %4421 = vmatprep.subr.mxu0 0.0
    %4422 = vmatpush1.msra.mxu0 0.0
    %4423 = vmatprep.subr.mxu0 0.0
    %4424 = vmatpush1.msra.mxu0 0.0
    %4425 = vmatprep.subr.mxu0 0.0
    %4426 = vmatpush1.msra.mxu0 0.0
    %4427 = vmatprep.subr.mxu0 0.0
    %4428 = vmatpush1.msra.mxu0 0.0
    %4429 = vmatprep.subr.mxu0 0.0
    %4430 = vmatpush1.msra.mxu0 0.0
    %4431 = vmatprep.subr.mxu0 0.0
    %4432 = vmatpush1.msra.mxu0 0.0
    %4433 = vmatprep.subr.mxu0 0.0
    %4434 = vmatpush1.msra.mxu0 0.0
    %4435 = vmatprep.subr.mxu0 0.0
    %4436 = vmatpush1.msra.mxu0 0.0
    %4437 = vmatprep.subr.mxu0 0.0
    %4438 = vmatpush1.msra.mxu0 0.0
    %4439 = vmatprep.subr.mxu0 0.0
    %4440 = vmatpush1.msra.mxu0 0.0
    %4441 = vmatprep.subr.mxu0 0.0
    %4442 = vmatpush1.msra.mxu0 0.0
    %4443 = vmatprep.subr.mxu0 0.0
    %4444 = vmatpush1.msra.mxu0 0.0
    %4445 = vmatprep.subr.mxu0 0.0
    %4446 = vmatpush1.msra.mxu0 0.0
    %4447 = vmatprep.subr.mxu0 0.0
    %4448 = vmatpush1.msra.mxu0 0.0
    %4449 = vmatprep.subr.mxu0 0.0
    %4450 = vmatpush1.msra.mxu0 0.0
    %4451 = vmatprep.subr.mxu0 0.0
    %4452 = vmatpush1.msra.mxu0 0.0
    %4453 = vmatprep.subr.mxu0 0.0
    %4454 = vmatpush1.msra.mxu0 0.0
    %4455 = vmatprep.mubr.f32.mxu0 0.0
    %4456 = vmatmul.mubr.f32.gmra.mrb[0].mxu0 %v4386
    %v4457 = vpop.f32.mrb[0].mxu0
    %v4458 = vadd.f32 0.0, %v4457
    %v4459 = vpop.f32.mrb[0].mxu0
    %4460 = vdwg.mxu0
    %v4461 = vadd.f32 %v4381, %v4458
    %v4462 = vld [vmem:[#allocation2 + $0x44] sm:$0xf]
    %v4463 = vld [vmem:[%s2454] sm:$0xff]
    %v4464 = vld [vmem:[%s2454 + $0x8] sm:$0x3]
    %v4466 = vsel %vm517, %v4462, 0
    %v4469 = vsel %vm521, %v4464, 0
    %4471 = vmatprep.subr.mxu0 0.0
    %4472 = vmatpush1.msra.mxu0 %v4463
    %4473 = vmatprep.subr.mxu0 0.0
    %4474 = vmatpush1.msra.mxu0 %v4469
    %4475 = vmatprep.subr.mxu0 0.0
    %4476 = vmatpush1.msra.mxu0 0.0
    %4477 = vmatprep.subr.mxu0 0.0
    %4478 = vmatpush1.msra.mxu0 0.0
    %4479 = vmatprep.subr.mxu0 0.0
    %4480 = vmatpush1.msra.mxu0 0.0
    %4481 = vmatprep.subr.mxu0 0.0
    %4482 = vmatpush1.msra.mxu0 0.0
    %4483 = vmatprep.subr.mxu0 0.0
    %4484 = vmatpush1.msra.mxu0 0.0
    %4485 = vmatprep.subr.mxu0 0.0
    %4486 = vmatpush1.msra.mxu0 0.0
    %4487 = vmatprep.subr.mxu0 0.0
    %4488 = vmatpush1.msra.mxu0 0.0
    %4489 = vmatprep.subr.mxu0 0.0
    %4490 = vmatpush1.msra.mxu0 0.0
    %4491 = vmatprep.subr.mxu0 0.0
    %4492 = vmatpush1.msra.mxu0 0.0
    %4493 = vmatprep.subr.mxu0 0.0
    %4494 = vmatpush1.msra.mxu0 0.0
    %4495 = vmatprep.subr.mxu0 0.0
    %4496 = vmatpush1.msra.mxu0 0.0
    %4497 = vmatprep.subr.mxu0 0.0
    %4498 = vmatpush1.msra.mxu0 0.0
    %4499 = vmatprep.subr.mxu0 0.0
    %4500 = vmatpush1.msra.mxu0 0.0
    %4501 = vmatprep.subr.mxu0 0.0
    %4502 = vmatpush1.msra.mxu0 0.0
    %4503 = vmatprep.subr.mxu0 0.0
    %4504 = vmatpush1.msra.mxu0 0.0
    %4505 = vmatprep.subr.mxu0 0.0
    %4506 = vmatpush1.msra.mxu0 0.0
    %4507 = vmatprep.subr.mxu0 0.0
    %4508 = vmatpush1.msra.mxu0 0.0
    %4509 = vmatprep.subr.mxu0 0.0
    %4510 = vmatpush1.msra.mxu0 0.0
    %4511 = vmatprep.subr.mxu0 0.0
    %4512 = vmatpush1.msra.mxu0 0.0
    %4513 = vmatprep.subr.mxu0 0.0
    %4514 = vmatpush1.msra.mxu0 0.0
    %4515 = vmatprep.subr.mxu0 0.0
    %4516 = vmatpush1.msra.mxu0 0.0
    %4517 = vmatprep.subr.mxu0 0.0
    %4518 = vmatpush1.msra.mxu0 0.0
    %4519 = vmatprep.subr.mxu0 0.0
    %4520 = vmatpush1.msra.mxu0 0.0
    %4521 = vmatprep.subr.mxu0 0.0
    %4522 = vmatpush1.msra.mxu0 0.0
    %4523 = vmatprep.subr.mxu0 0.0
    %4524 = vmatpush1.msra.mxu0 0.0
    %4525 = vmatprep.subr.mxu0 0.0
    %4526 = vmatpush1.msra.mxu0 0.0
    %4527 = vmatprep.subr.mxu0 0.0
    %4528 = vmatpush1.msra.mxu0 0.0
    %4529 = vmatprep.subr.mxu0 0.0
    %4530 = vmatpush1.msra.mxu0 0.0
    %4531 = vmatprep.subr.mxu0 0.0
    %4532 = vmatpush1.msra.mxu0 0.0
    %4533 = vmatprep.subr.mxu0 0.0
    %4534 = vmatpush1.msra.mxu0 0.0
    %4535 = vmatprep.mubr.f32.mxu0 0.0
    %4536 = vmatmul.mubr.f32.gmra.mrb[0].mxu0 %v4466
    %v4537 = vpop.f32.mrb[0].mxu0
    %v4538 = vadd.f32 0.0, %v4537
    %v4539 = vpop.f32.mrb[0].mxu0
    %4540 = vdwg.mxu0
    %v4541 = vadd.f32 %v4461, %v4538
    %v4542 = vld [vmem:[%s4] sm:$0x1]
    %v4544 = vlaneseq
    %v4545 = vshrl.u32 %v4544, 7
    %v4546 = vsub.s32 0, %v4545
    %v4547 = vrot.slane %v4542, %v4546
    %v4549 = vadd.f32 %v4541, %v4547
    %v4550 = vmax.f32 %v4549, 0.0
    %4551 = vst [vmem:[#allocation3 + $0x4] sm:$0xf] %v4550
    %v4552 = vld [vmem:[%s6] sm:$0x1]
    %v4553 = vld [vmem:[#allocation3] sm:$0x1]
    %v4554 = vld [vmem:[%s5] sm:$0xff]
    %v4555 = vld [vmem:[%s5 + $0x8] sm:$0xff]
    %v4556 = vld [vmem:[%s5 + $0x10] sm:$0xf]
    %vm4557 = vcmask 162816
    %v4559 = vsel %vm4557, %v4553, 0
    %vm4561 = vcmask 1043456
    %v4563 = vsel %vm4561, %v4556, 0
    %4565 = vmatprep.subr.mxu0 0.0
    %4566 = vmatpush1.msra.mxu0 %v4554
    %4567 = vmatprep.subr.mxu0 0.0
    %4568 = vmatpush1.msra.mxu0 %v4555
    %4569 = vmatprep.subr.mxu0 0.0
    %4570 = vmatpush1.msra.mxu0 %v4563
    %4571 = vmatprep.subr.mxu0 0.0
    %4572 = vmatpush1.msra.mxu0 0.0
    %4573 = vmatprep.subr.mxu0 0.0
    %4574 = vmatpush1.msra.mxu0 0.0
    %4575 = vmatprep.subr.mxu0 0.0
    %4576 = vmatpush1.msra.mxu0 0.0
    %4577 = vmatprep.subr.mxu0 0.0
    %4578 = vmatpush1.msra.mxu0 0.0
    %4579 = vmatprep.subr.mxu0 0.0
    %4580 = vmatpush1.msra.mxu0 0.0
    %4581 = vmatprep.subr.mxu0 0.0
    %4582 = vmatpush1.msra.mxu0 0.0
    %4583 = vmatprep.subr.mxu0 0.0
    %4584 = vmatpush1.msra.mxu0 0.0
    %4585 = vmatprep.subr.mxu0 0.0
    %4586 = vmatpush1.msra.mxu0 0.0
    %4587 = vmatprep.subr.mxu0 0.0
    %4588 = vmatpush1.msra.mxu0 0.0
    %4589 = vmatprep.subr.mxu0 0.0
    %4590 = vmatpush1.msra.mxu0 0.0
    %4591 = vmatprep.subr.mxu0 0.0
    %4592 = vmatpush1.msra.mxu0 0.0
    %4593 = vmatprep.subr.mxu0 0.0
    %4594 = vmatpush1.msra.mxu0 0.0
    %4595 = vmatprep.subr.mxu0 0.0
    %4596 = vmatpush1.msra.mxu0 0.0
    %4597 = vmatprep.subr.mxu0 0.0
    %4598 = vmatpush1.msra.mxu0 0.0
    %4599 = vmatprep.subr.mxu0 0.0
    %4600 = vmatpush1.msra.mxu0 0.0
    %4601 = vmatprep.subr.mxu0 0.0
    %4602 = vmatpush1.msra.mxu0 0.0
    %4603 = vmatprep.subr.mxu0 0.0
    %4604 = vmatpush1.msra.mxu0 0.0
    %4605 = vmatprep.subr.mxu0 0.0
    %4606 = vmatpush1.msra.mxu0 0.0
    %4607 = vmatprep.subr.mxu0 0.0
    %4608 = vmatpush1.msra.mxu0 0.0
    %4609 = vmatprep.subr.mxu0 0.0
    %4610 = vmatpush1.msra.mxu0 0.0
    %4611 = vmatprep.subr.mxu0 0.0
    %4612 = vmatpush1.msra.mxu0 0.0
    %4613 = vmatprep.subr.mxu0 0.0
    %4614 = vmatpush1.msra.mxu0 0.0
    %4615 = vmatprep.subr.mxu0 0.0
    %4616 = vmatpush1.msra.mxu0 0.0
    %4617 = vmatprep.subr.mxu0 0.0
    %4618 = vmatpush1.msra.mxu0 0.0
    %4619 = vmatprep.subr.mxu0 0.0
    %4620 = vmatpush1.msra.mxu0 0.0
    %4621 = vmatprep.subr.mxu0 0.0
    %4622 = vmatpush1.msra.mxu0 0.0
    %4623 = vmatprep.subr.mxu0 0.0
    %4624 = vmatpush1.msra.mxu0 0.0
    %4625 = vmatprep.subr.mxu0 0.0
    %4626 = vmatpush1.msra.mxu0 0.0
    %4627 = vmatprep.subr.mxu0 0.0
    %4628 = vmatpush1.msra.mxu0 0.0
    %4629 = vmatprep.mubr.f32.mxu0 0.0
    %4630 = vmatmul.mubr.f32.gmra.mrb[0].mxu0 %v4559
    %v4631 = vpop.f32.mrb[0].mxu0
    %v4632 = vadd.f32 0.0, %v4631
    %v4633 = vpop.f32.mrb[0].mxu0
    %4634 = vdwg.mxu0
    %v4635 = vadd.f32 %v4552, %v4632
    %v4636 = vld [vmem:[#allocation3 + $0x1] sm:$0x1]
    %s4637 = scalar_lea.vmem %s5, 24
    %v4638 = vld [vmem:[%s4637] sm:$0xff]
    %v4639 = vld [vmem:[%s4637 + $0x8] sm:$0xff]
    %v4640 = vld [vmem:[%s4637 + $0x10] sm:$0xf]
    %v4642 = vsel %vm4557, %v4636, 0
    %v4645 = vsel %vm4561, %v4640, 0
    %4647 = vmatprep.subr.mxu0 0.0
    %4648 = vmatpush1.msra.mxu0 %v4638
    %4649 = vmatprep.subr.mxu0 0.0
    %4650 = vmatpush1.msra.mxu0 %v4639
    %4651 = vmatprep.subr.mxu0 0.0
    %4652 = vmatpush1.msra.mxu0 %v4645
    %4653 = vmatprep.subr.mxu0 0.0
    %4654 = vmatpush1.msra.mxu0 0.0
    %4655 = vmatprep.subr.mxu0 0.0
    %4656 = vmatpush1.msra.mxu0 0.0
    %4657 = vmatprep.subr.mxu0 0.0
    %4658 = vmatpush1.msra.mxu0 0.0
    %4659 = vmatprep.subr.mxu0 0.0
    %4660 = vmatpush1.msra.mxu0 0.0
    %4661 = vmatprep.subr.mxu0 0.0
    %4662 = vmatpush1.msra.mxu0 0.0
    %4663 = vmatprep.subr.mxu0 0.0
    %4664 = vmatpush1.msra.mxu0 0.0
    %4665 = vmatprep.subr.mxu0 0.0
    %4666 = vmatpush1.msra.mxu0 0.0
    %4667 = vmatprep.subr.mxu0 0.0
    %4668 = vmatpush1.msra.mxu0 0.0
    %4669 = vmatprep.subr.mxu0 0.0
    %4670 = vmatpush1.msra.mxu0 0.0
    %4671 = vmatprep.subr.mxu0 0.0
    %4672 = vmatpush1.msra.mxu0 0.0
    %4673 = vmatprep.subr.mxu0 0.0
    %4674 = vmatpush1.msra.mxu0 0.0
    %4675 = vmatprep.subr.mxu0 0.0
    %4676 = vmatpush1.msra.mxu0 0.0
    %4677 = vmatprep.subr.mxu0 0.0
    %4678 = vmatpush1.msra.mxu0 0.0
    %4679 = vmatprep.subr.mxu0 0.0
    %4680 = vmatpush1.msra.mxu0 0.0
    %4681 = vmatprep.subr.mxu0 0.0
    %4682 = vmatpush1.msra.mxu0 0.0
    %4683 = vmatprep.subr.mxu0 0.0
    %4684 = vmatpush1.msra.mxu0 0.0
    %4685 = vmatprep.subr.mxu0 0.0
    %4686 = vmatpush1.msra.mxu0 0.0
    %4687 = vmatprep.subr.mxu0 0.0
    %4688 = vmatpush1.msra.mxu0 0.0
    %4689 = vmatprep.subr.mxu0 0.0
    %4690 = vmatpush1.msra.mxu0 0.0
    %4691 = vmatprep.subr.mxu0 0.0
    %4692 = vmatpush1.msra.mxu0 0.0
    %4693 = vmatprep.subr.mxu0 0.0
    %4694 = vmatpush1.msra.mxu0 0.0
    %4695 = vmatprep.subr.mxu0 0.0
    %4696 = vmatpush1.msra.mxu0 0.0
    %4697 = vmatprep.subr.mxu0 0.0
    %4698 = vmatpush1.msra.mxu0 0.0
    %4699 = vmatprep.subr.mxu0 0.0
    %4700 = vmatpush1.msra.mxu0 0.0
    %4701 = vmatprep.subr.mxu0 0.0
    %4702 = vmatpush1.msra.mxu0 0.0
    %4703 = vmatprep.subr.mxu0 0.0
    %4704 = vmatpush1.msra.mxu0 0.0
    %4705 = vmatprep.subr.mxu0 0.0
    %4706 = vmatpush1.msra.mxu0 0.0
    %4707 = vmatprep.subr.mxu0 0.0
    %4708 = vmatpush1.msra.mxu0 0.0
    %4709 = vmatprep.subr.mxu0 0.0
    %4710 = vmatpush1.msra.mxu0 0.0
    %4711 = vmatprep.mubr.f32.mxu0 0.0
    %4712 = vmatmul.mubr.f32.gmra.mrb[0].mxu0 %v4642
    %v4713 = vpop.f32.mrb[0].mxu0
    %v4714 = vadd.f32 0.0, %v4713
    %v4715 = vpop.f32.mrb[0].mxu0
    %4716 = vdwg.mxu0
    %v4717 = vadd.f32 %v4635, %v4714
    %v4718 = vld [vmem:[#allocation3 + $0x2] sm:$0x1]
    %s4719 = scalar_lea.vmem %s5, 48
    %v4720 = vld [vmem:[%s4719] sm:$0xff]
    %v4721 = vld [vmem:[%s4719 + $0x8] sm:$0xff]
    %v4722 = vld [vmem:[%s4719 + $0x10] sm:$0xf]
    %v4724 = vsel %vm4557, %v4718, 0
    %v4727 = vsel %vm4561, %v4722, 0
    %4729 = vmatprep.subr.mxu0 0.0
    %4730 = vmatpush1.msra.mxu0 %v4720
    %4731 = vmatprep.subr.mxu0 0.0
    %4732 = vmatpush1.msra.mxu0 %v4721
    %4733 = vmatprep.subr.mxu0 0.0
    %4734 = vmatpush1.msra.mxu0 %v4727
    %4735 = vmatprep.subr.mxu0 0.0
    %4736 = vmatpush1.msra.mxu0 0.0
    %4737 = vmatprep.subr.mxu0 0.0
    %4738 = vmatpush1.msra.mxu0 0.0
    %4739 = vmatprep.subr.mxu0 0.0
    %4740 = vmatpush1.msra.mxu0 0.0
    %4741 = vmatprep.subr.mxu0 0.0
    %4742 = vmatpush1.msra.mxu0 0.0
    %4743 = vmatprep.subr.mxu0 0.0
    %4744 = vmatpush1.msra.mxu0 0.0
    %4745 = vmatprep.subr.mxu0 0.0
    %4746 = vmatpush1.msra.mxu0 0.0
    %4747 = vmatprep.subr.mxu0 0.0
    %4748 = vmatpush1.msra.mxu0 0.0
    %4749 = vmatprep.subr.mxu0 0.0
    %4750 = vmatpush1.msra.mxu0 0.0
    %4751 = vmatprep.subr.mxu0 0.0
    %4752 = vmatpush1.msra.mxu0 0.0
    %4753 = vmatprep.subr.mxu0 0.0
    %4754 = vmatpush1.msra.mxu0 0.0
    %4755 = vmatprep.subr.mxu0 0.0
    %4756 = vmatpush1.msra.mxu0 0.0
    %4757 = vmatprep.subr.mxu0 0.0
    %4758 = vmatpush1.msra.mxu0 0.0
    %4759 = vmatprep.subr.mxu0 0.0
    %4760 = vmatpush1.msra.mxu0 0.0
    %4761 = vmatprep.subr.mxu0 0.0
    %4762 = vmatpush1.msra.mxu0 0.0
    %4763 = vmatprep.subr.mxu0 0.0
    %4764 = vmatpush1.msra.mxu0 0.0
    %4765 = vmatprep.subr.mxu0 0.0
    %4766 = vmatpush1.msra.mxu0 0.0
    %4767 = vmatprep.subr.mxu0 0.0
    %4768 = vmatpush1.msra.mxu0 0.0
    %4769 = vmatprep.subr.mxu0 0.0
    %4770 = vmatpush1.msra.mxu0 0.0
    %4771 = vmatprep.subr.mxu0 0.0
    %4772 = vmatpush1.msra.mxu0 0.0
    %4773 = vmatprep.subr.mxu0 0.0
    %4774 = vmatpush1.msra.mxu0 0.0
    %4775 = vmatprep.subr.mxu0 0.0
    %4776 = vmatpush1.msra.mxu0 0.0
    %4777 = vmatprep.subr.mxu0 0.0
    %4778 = vmatpush1.msra.mxu0 0.0
    %4779 = vmatprep.subr.mxu0 0.0
    %4780 = vmatpush1.msra.mxu0 0.0
    %4781 = vmatprep.subr.mxu0 0.0
    %4782 = vmatpush1.msra.mxu0 0.0
    %4783 = vmatprep.subr.mxu0 0.0
    %4784 = vmatpush1.msra.mxu0 0.0
    %4785 = vmatprep.subr.mxu0 0.0
    %4786 = vmatpush1.msra.mxu0 0.0
    %4787 = vmatprep.subr.mxu0 0.0
    %4788 = vmatpush1.msra.mxu0 0.0
    %4789 = vmatprep.subr.mxu0 0.0
    %4790 = vmatpush1.msra.mxu0 0.0
    %4791 = vmatprep.subr.mxu0 0.0
    %4792 = vmatpush1.msra.mxu0 0.0
    %4793 = vmatprep.mubr.f32.mxu0 0.0
    %4794 = vmatmul.mubr.f32.gmra.mrb[0].mxu0 %v4724
    %v4795 = vpop.f32.mrb[0].mxu0
    %v4796 = vadd.f32 0.0, %v4795
    %v4797 = vpop.f32.mrb[0].mxu0
    %4798 = vdwg.mxu0
    %v4799 = vadd.f32 %v4717, %v4796
    %v4800 = vld [vmem:[#allocation3 + $0x3] sm:$0x1]
    %s4801 = scalar_lea.vmem %s5, 72
    %v4802 = vld [vmem:[%s4801] sm:$0xff]
    %v4803 = vld [vmem:[%s4801 + $0x8] sm:$0xff]
    %v4804 = vld [vmem:[%s4801 + $0x10] sm:$0xf]
    %v4806 = vsel %vm4557, %v4800, 0
    %v4809 = vsel %vm4561, %v4804, 0
    %4811 = vmatprep.subr.mxu0 0.0
    %4812 = vmatpush1.msra.mxu0 %v4802
    %4813 = vmatprep.subr.mxu0 0.0
    %4814 = vmatpush1.msra.mxu0 %v4803
    %4815 = vmatprep.subr.mxu0 0.0
    %4816 = vmatpush1.msra.mxu0 %v4809
    %4817 = vmatprep.subr.mxu0 0.0
    %4818 = vmatpush1.msra.mxu0 0.0
    %4819 = vmatprep.subr.mxu0 0.0
    %4820 = vmatpush1.msra.mxu0 0.0
    %4821 = vmatprep.subr.mxu0 0.0
    %4822 = vmatpush1.msra.mxu0 0.0
    %4823 = vmatprep.subr.mxu0 0.0
    %4824 = vmatpush1.msra.mxu0 0.0
    %4825 = vmatprep.subr.mxu0 0.0
    %4826 = vmatpush1.msra.mxu0 0.0
    %4827 = vmatprep.subr.mxu0 0.0
    %4828 = vmatpush1.msra.mxu0 0.0
    %4829 = vmatprep.subr.mxu0 0.0
    %4830 = vmatpush1.msra.mxu0 0.0
    %4831 = vmatprep.subr.mxu0 0.0
    %4832 = vmatpush1.msra.mxu0 0.0
    %4833 = vmatprep.subr.mxu0 0.0
    %4834 = vmatpush1.msra.mxu0 0.0
    %4835 = vmatprep.subr.mxu0 0.0
    %4836 = vmatpush1.msra.mxu0 0.0
    %4837 = vmatprep.subr.mxu0 0.0
    %4838 = vmatpush1.msra.mxu0 0.0
    %4839 = vmatprep.subr.mxu0 0.0
    %4840 = vmatpush1.msra.mxu0 0.0
    %4841 = vmatprep.subr.mxu0 0.0
    %4842 = vmatpush1.msra.mxu0 0.0
    %4843 = vmatprep.subr.mxu0 0.0
    %4844 = vmatpush1.msra.mxu0 0.0
    %4845 = vmatprep.subr.mxu0 0.0
    %4846 = vmatpush1.msra.mxu0 0.0
    %4847 = vmatprep.subr.mxu0 0.0
    %4848 = vmatpush1.msra.mxu0 0.0
    %4849 = vmatprep.subr.mxu0 0.0
    %4850 = vmatpush1.msra.mxu0 0.0
    %4851 = vmatprep.subr.mxu0 0.0
    %4852 = vmatpush1.msra.mxu0 0.0
    %4853 = vmatprep.subr.mxu0 0.0
    %4854 = vmatpush1.msra.mxu0 0.0
    %4855 = vmatprep.subr.mxu0 0.0
    %4856 = vmatpush1.msra.mxu0 0.0
    %4857 = vmatprep.subr.mxu0 0.0
    %4858 = vmatpush1.msra.mxu0 0.0
    %4859 = vmatprep.subr.mxu0 0.0
    %4860 = vmatpush1.msra.mxu0 0.0
    %4861 = vmatprep.subr.mxu0 0.0
    %4862 = vmatpush1.msra.mxu0 0.0
    %4863 = vmatprep.subr.mxu0 0.0
    %4864 = vmatpush1.msra.mxu0 0.0
    %4865 = vmatprep.subr.mxu0 0.0
    %4866 = vmatpush1.msra.mxu0 0.0
    %4867 = vmatprep.subr.mxu0 0.0
    %4868 = vmatpush1.msra.mxu0 0.0
    %4869 = vmatprep.subr.mxu0 0.0
    %4870 = vmatpush1.msra.mxu0 0.0
    %4871 = vmatprep.subr.mxu0 0.0
    %4872 = vmatpush1.msra.mxu0 0.0
    %4873 = vmatprep.subr.mxu0 0.0
    %4874 = vmatpush1.msra.mxu0 0.0
    %4875 = vmatprep.mubr.f32.mxu0 0.0
    %4876 = vmatmul.mubr.f32.gmra.mrb[0].mxu0 %v4806
    %v4877 = vpop.f32.mrb[0].mxu0
    %v4878 = vadd.f32 0.0, %v4877
    %v4879 = vpop.f32.mrb[0].mxu0
    %4880 = vdwg.mxu0
    %v4881 = vadd.f32 %v4799, %v4878
    %v4882 = vld [vmem:[#allocation3 + $0x4] sm:$0x1]
    %s4883 = scalar_lea.vmem %s5, 96
    %v4884 = vld [vmem:[%s4883] sm:$0xff]
    %v4885 = vld [vmem:[%s4883 + $0x8] sm:$0xff]
    %v4886 = vld [vmem:[%s4883 + $0x10] sm:$0xf]
    %v4888 = vsel %vm4557, %v4882, 0
    %v4891 = vsel %vm4561, %v4886, 0
    %4893 = vmatprep.subr.mxu0 0.0
    %4894 = vmatpush1.msra.mxu0 %v4884
    %4895 = vmatprep.subr.mxu0 0.0
    %4896 = vmatpush1.msra.mxu0 %v4885
    %4897 = vmatprep.subr.mxu0 0.0
    %4898 = vmatpush1.msra.mxu0 %v4891
    %4899 = vmatprep.subr.mxu0 0.0
    %4900 = vmatpush1.msra.mxu0 0.0
    %4901 = vmatprep.subr.mxu0 0.0
    %4902 = vmatpush1.msra.mxu0 0.0
    %4903 = vmatprep.subr.mxu0 0.0
    %4904 = vmatpush1.msra.mxu0 0.0
    %4905 = vmatprep.subr.mxu0 0.0
    %4906 = vmatpush1.msra.mxu0 0.0
    %4907 = vmatprep.subr.mxu0 0.0
    %4908 = vmatpush1.msra.mxu0 0.0
    %4909 = vmatprep.subr.mxu0 0.0
    %4910 = vmatpush1.msra.mxu0 0.0
    %4911 = vmatprep.subr.mxu0 0.0
    %4912 = vmatpush1.msra.mxu0 0.0
    %4913 = vmatprep.subr.mxu0 0.0
    %4914 = vmatpush1.msra.mxu0 0.0
    %4915 = vmatprep.subr.mxu0 0.0
    %4916 = vmatpush1.msra.mxu0 0.0
    %4917 = vmatprep.subr.mxu0 0.0
    %4918 = vmatpush1.msra.mxu0 0.0
    %4919 = vmatprep.subr.mxu0 0.0
    %4920 = vmatpush1.msra.mxu0 0.0
    %4921 = vmatprep.subr.mxu0 0.0
    %4922 = vmatpush1.msra.mxu0 0.0
    %4923 = vmatprep.subr.mxu0 0.0
    %4924 = vmatpush1.msra.mxu0 0.0
    %4925 = vmatprep.subr.mxu0 0.0
    %4926 = vmatpush1.msra.mxu0 0.0
    %4927 = vmatprep.subr.mxu0 0.0
    %4928 = vmatpush1.msra.mxu0 0.0
    %4929 = vmatprep.subr.mxu0 0.0
    %4930 = vmatpush1.msra.mxu0 0.0
    %4931 = vmatprep.subr.mxu0 0.0
    %4932 = vmatpush1.msra.mxu0 0.0
    %4933 = vmatprep.subr.mxu0 0.0
    %4934 = vmatpush1.msra.mxu0 0.0
    %4935 = vmatprep.subr.mxu0 0.0
    %4936 = vmatpush1.msra.mxu0 0.0
    %4937 = vmatprep.subr.mxu0 0.0
    %4938 = vmatpush1.msra.mxu0 0.0
    %4939 = vmatprep.subr.mxu0 0.0
    %4940 = vmatpush1.msra.mxu0 0.0
    %4941 = vmatprep.subr.mxu0 0.0
    %4942 = vmatpush1.msra.mxu0 0.0
    %4943 = vmatprep.subr.mxu0 0.0
    %4944 = vmatpush1.msra.mxu0 0.0
    %4945 = vmatprep.subr.mxu0 0.0
    %4946 = vmatpush1.msra.mxu0 0.0
    %4947 = vmatprep.subr.mxu0 0.0
    %4948 = vmatpush1.msra.mxu0 0.0
    %4949 = vmatprep.subr.mxu0 0.0
    %4950 = vmatpush1.msra.mxu0 0.0
    %4951 = vmatprep.subr.mxu0 0.0
    %4952 = vmatpush1.msra.mxu0 0.0
    %4953 = vmatprep.subr.mxu0 0.0
    %4954 = vmatpush1.msra.mxu0 0.0
    %4955 = vmatprep.subr.mxu0 0.0
    %4956 = vmatpush1.msra.mxu0 0.0
    %4957 = vmatprep.mubr.f32.mxu0 0.0
    %4958 = vmatmul.mubr.f32.gmra.mrb[0].mxu0 %v4888
    %v4959 = vpop.f32.mrb[0].mxu0
    %v4960 = vadd.f32 0.0, %v4959
    %v4961 = vpop.f32.mrb[0].mxu0
    %4962 = vdwg.mxu0
    %v4963 = vadd.f32 %v4881, %v4960
    %v4964 = vld [vmem:[#allocation3 + $0x5] sm:$0x1]
    %s4965 = scalar_lea.vmem %s5, 120
    %v4966 = vld [vmem:[%s4965] sm:$0xff]
    %v4967 = vld [vmem:[%s4965 + $0x8] sm:$0xff]
    %v4968 = vld [vmem:[%s4965 + $0x10] sm:$0xf]
    %v4970 = vsel %vm4557, %v4964, 0
    %v4973 = vsel %vm4561, %v4968, 0
    %4975 = vmatprep.subr.mxu0 0.0
    %4976 = vmatpush1.msra.mxu0 %v4966
    %4977 = vmatprep.subr.mxu0 0.0
    %4978 = vmatpush1.msra.mxu0 %v4967
    %4979 = vmatprep.subr.mxu0 0.0
    %4980 = vmatpush1.msra.mxu0 %v4973
    %4981 = vmatprep.subr.mxu0 0.0
    %4982 = vmatpush1.msra.mxu0 0.0
    %4983 = vmatprep.subr.mxu0 0.0
    %4984 = vmatpush1.msra.mxu0 0.0
    %4985 = vmatprep.subr.mxu0 0.0
    %4986 = vmatpush1.msra.mxu0 0.0
    %4987 = vmatprep.subr.mxu0 0.0
    %4988 = vmatpush1.msra.mxu0 0.0
    %4989 = vmatprep.subr.mxu0 0.0
    %4990 = vmatpush1.msra.mxu0 0.0
    %4991 = vmatprep.subr.mxu0 0.0
    %4992 = vmatpush1.msra.mxu0 0.0
    %4993 = vmatprep.subr.mxu0 0.0
    %4994 = vmatpush1.msra.mxu0 0.0
    %4995 = vmatprep.subr.mxu0 0.0
    %4996 = vmatpush1.msra.mxu0 0.0
    %4997 = vmatprep.subr.mxu0 0.0
    %4998 = vmatpush1.msra.mxu0 0.0
    %4999 = vmatprep.subr.mxu0 0.0
    %5000 = vmatpush1.msra.mxu0 0.0
    %5001 = vmatprep.subr.mxu0 0.0
    %5002 = vmatpush1.msra.mxu0 0.0
    %5003 = vmatprep.subr.mxu0 0.0
    %5004 = vmatpush1.msra.mxu0 0.0
    %5005 = vmatprep.subr.mxu0 0.0
    %5006 = vmatpush1.msra.mxu0 0.0
    %5007 = vmatprep.subr.mxu0 0.0
    %5008 = vmatpush1.msra.mxu0 0.0
    %5009 = vmatprep.subr.mxu0 0.0
    %5010 = vmatpush1.msra.mxu0 0.0
    %5011 = vmatprep.subr.mxu0 0.0
    %5012 = vmatpush1.msra.mxu0 0.0
    %5013 = vmatprep.subr.mxu0 0.0
    %5014 = vmatpush1.msra.mxu0 0.0
    %5015 = vmatprep.subr.mxu0 0.0
    %5016 = vmatpush1.msra.mxu0 0.0
    %5017 = vmatprep.subr.mxu0 0.0
    %5018 = vmatpush1.msra.mxu0 0.0
    %5019 = vmatprep.subr.mxu0 0.0
    %5020 = vmatpush1.msra.mxu0 0.0
    %5021 = vmatprep.subr.mxu0 0.0
    %5022 = vmatpush1.msra.mxu0 0.0
    %5023 = vmatprep.subr.mxu0 0.0
    %5024 = vmatpush1.msra.mxu0 0.0
    %5025 = vmatprep.subr.mxu0 0.0
    %5026 = vmatpush1.msra.mxu0 0.0
    %5027 = vmatprep.subr.mxu0 0.0
    %5028 = vmatpush1.msra.mxu0 0.0
    %5029 = vmatprep.subr.mxu0 0.0
    %5030 = vmatpush1.msra.mxu0 0.0
    %5031 = vmatprep.subr.mxu0 0.0
    %5032 = vmatpush1.msra.mxu0 0.0
    %5033 = vmatprep.subr.mxu0 0.0
    %5034 = vmatpush1.msra.mxu0 0.0
    %5035 = vmatprep.subr.mxu0 0.0
    %5036 = vmatpush1.msra.mxu0 0.0
    %5037 = vmatprep.subr.mxu0 0.0
    %5038 = vmatpush1.msra.mxu0 0.0
    %5039 = vmatprep.mubr.f32.mxu0 0.0
    %5040 = vmatmul.mubr.f32.gmra.mrb[0].mxu0 %v4970
    %v5041 = vpop.f32.mrb[0].mxu0
    %v5042 = vadd.f32 0.0, %v5041
    %v5043 = vpop.f32.mrb[0].mxu0
    %5044 = vdwg.mxu0
    %v5045 = vadd.f32 %v4963, %v5042
    %v5046 = vld [vmem:[#allocation3 + $0x6] sm:$0x1]
    %s5047 = scalar_lea.vmem %s5, 144
    %v5048 = vld [vmem:[%s5047] sm:$0xff]
    %v5049 = vld [vmem:[%s5047 + $0x8] sm:$0xff]
    %v5050 = vld [vmem:[%s5047 + $0x10] sm:$0xf]
    %v5052 = vsel %vm4557, %v5046, 0
    %v5055 = vsel %vm4561, %v5050, 0
    %5057 = vmatprep.subr.mxu0 0.0
    %5058 = vmatpush1.msra.mxu0 %v5048
    %5059 = vmatprep.subr.mxu0 0.0
    %5060 = vmatpush1.msra.mxu0 %v5049
    %5061 = vmatprep.subr.mxu0 0.0
    %5062 = vmatpush1.msra.mxu0 %v5055
    %5063 = vmatprep.subr.mxu0 0.0
    %5064 = vmatpush1.msra.mxu0 0.0
    %5065 = vmatprep.subr.mxu0 0.0
    %5066 = vmatpush1.msra.mxu0 0.0
    %5067 = vmatprep.subr.mxu0 0.0
    %5068 = vmatpush1.msra.mxu0 0.0
    %5069 = vmatprep.subr.mxu0 0.0
    %5070 = vmatpush1.msra.mxu0 0.0
    %5071 = vmatprep.subr.mxu0 0.0
    %5072 = vmatpush1.msra.mxu0 0.0
    %5073 = vmatprep.subr.mxu0 0.0
    %5074 = vmatpush1.msra.mxu0 0.0
    %5075 = vmatprep.subr.mxu0 0.0
    %5076 = vmatpush1.msra.mxu0 0.0
    %5077 = vmatprep.subr.mxu0 0.0
    %5078 = vmatpush1.msra.mxu0 0.0
    %5079 = vmatprep.subr.mxu0 0.0
    %5080 = vmatpush1.msra.mxu0 0.0
    %5081 = vmatprep.subr.mxu0 0.0
    %5082 = vmatpush1.msra.mxu0 0.0
    %5083 = vmatprep.subr.mxu0 0.0
    %5084 = vmatpush1.msra.mxu0 0.0
    %5085 = vmatprep.subr.mxu0 0.0
    %5086 = vmatpush1.msra.mxu0 0.0
    %5087 = vmatprep.subr.mxu0 0.0
    %5088 = vmatpush1.msra.mxu0 0.0
    %5089 = vmatprep.subr.mxu0 0.0
    %5090 = vmatpush1.msra.mxu0 0.0
    %5091 = vmatprep.subr.mxu0 0.0
    %5092 = vmatpush1.msra.mxu0 0.0
    %5093 = vmatprep.subr.mxu0 0.0
    %5094 = vmatpush1.msra.mxu0 0.0
    %5095 = vmatprep.subr.mxu0 0.0
    %5096 = vmatpush1.msra.mxu0 0.0
    %5097 = vmatprep.subr.mxu0 0.0
    %5098 = vmatpush1.msra.mxu0 0.0
    %5099 = vmatprep.subr.mxu0 0.0
    %5100 = vmatpush1.msra.mxu0 0.0
    %5101 = vmatprep.subr.mxu0 0.0
    %5102 = vmatpush1.msra.mxu0 0.0
    %5103 = vmatprep.subr.mxu0 0.0
    %5104 = vmatpush1.msra.mxu0 0.0
    %5105 = vmatprep.subr.mxu0 0.0
    %5106 = vmatpush1.msra.mxu0 0.0
    %5107 = vmatprep.subr.mxu0 0.0
    %5108 = vmatpush1.msra.mxu0 0.0
    %5109 = vmatprep.subr.mxu0 0.0
    %5110 = vmatpush1.msra.mxu0 0.0
    %5111 = vmatprep.subr.mxu0 0.0
    %5112 = vmatpush1.msra.mxu0 0.0
    %5113 = vmatprep.subr.mxu0 0.0
    %5114 = vmatpush1.msra.mxu0 0.0
    %5115 = vmatprep.subr.mxu0 0.0
    %5116 = vmatpush1.msra.mxu0 0.0
    %5117 = vmatprep.subr.mxu0 0.0
    %5118 = vmatpush1.msra.mxu0 0.0
    %5119 = vmatprep.subr.mxu0 0.0
    %5120 = vmatpush1.msra.mxu0 0.0
    %5121 = vmatprep.mubr.f32.mxu0 0.0
    %5122 = vmatmul.mubr.f32.gmra.mrb[0].mxu0 %v5052
    %v5123 = vpop.f32.mrb[0].mxu0
    %v5124 = vadd.f32 0.0, %v5123
    %v5125 = vpop.f32.mrb[0].mxu0
    %5126 = vdwg.mxu0
    %v5127 = vadd.f32 %v5045, %v5124
    %v5128 = vld [vmem:[#allocation3 + $0x7] sm:$0x1]
    %s5129 = scalar_lea.vmem %s5, 168
    %v5130 = vld [vmem:[%s5129] sm:$0xff]
    %v5131 = vld [vmem:[%s5129 + $0x8] sm:$0xff]
    %v5132 = vld [vmem:[%s5129 + $0x10] sm:$0xf]
    %v5134 = vsel %vm4557, %v5128, 0
    %v5137 = vsel %vm4561, %v5132, 0
    %5139 = vmatprep.subr.mxu0 0.0
    %5140 = vmatpush1.msra.mxu0 %v5130
    %5141 = vmatprep.subr.mxu0 0.0
    %5142 = vmatpush1.msra.mxu0 %v5131
    %5143 = vmatprep.subr.mxu0 0.0
    %5144 = vmatpush1.msra.mxu0 %v5137
    %5145 = vmatprep.subr.mxu0 0.0
    %5146 = vmatpush1.msra.mxu0 0.0
    %5147 = vmatprep.subr.mxu0 0.0
    %5148 = vmatpush1.msra.mxu0 0.0
    %5149 = vmatprep.subr.mxu0 0.0
    %5150 = vmatpush1.msra.mxu0 0.0
    %5151 = vmatprep.subr.mxu0 0.0
    %5152 = vmatpush1.msra.mxu0 0.0
    %5153 = vmatprep.subr.mxu0 0.0
    %5154 = vmatpush1.msra.mxu0 0.0
    %5155 = vmatprep.subr.mxu0 0.0
    %5156 = vmatpush1.msra.mxu0 0.0
    %5157 = vmatprep.subr.mxu0 0.0
    %5158 = vmatpush1.msra.mxu0 0.0
    %5159 = vmatprep.subr.mxu0 0.0
    %5160 = vmatpush1.msra.mxu0 0.0
    %5161 = vmatprep.subr.mxu0 0.0
    %5162 = vmatpush1.msra.mxu0 0.0
    %5163 = vmatprep.subr.mxu0 0.0
    %5164 = vmatpush1.msra.mxu0 0.0
    %5165 = vmatprep.subr.mxu0 0.0
    %5166 = vmatpush1.msra.mxu0 0.0
    %5167 = vmatprep.subr.mxu0 0.0
    %5168 = vmatpush1.msra.mxu0 0.0
    %5169 = vmatprep.subr.mxu0 0.0
    %5170 = vmatpush1.msra.mxu0 0.0
    %5171 = vmatprep.subr.mxu0 0.0
    %5172 = vmatpush1.msra.mxu0 0.0
    %5173 = vmatprep.subr.mxu0 0.0
    %5174 = vmatpush1.msra.mxu0 0.0
    %5175 = vmatprep.subr.mxu0 0.0
    %5176 = vmatpush1.msra.mxu0 0.0
    %5177 = vmatprep.subr.mxu0 0.0
    %5178 = vmatpush1.msra.mxu0 0.0
    %5179 = vmatprep.subr.mxu0 0.0
    %5180 = vmatpush1.msra.mxu0 0.0
    %5181 = vmatprep.subr.mxu0 0.0
    %5182 = vmatpush1.msra.mxu0 0.0
    %5183 = vmatprep.subr.mxu0 0.0
    %5184 = vmatpush1.msra.mxu0 0.0
    %5185 = vmatprep.subr.mxu0 0.0
    %5186 = vmatpush1.msra.mxu0 0.0
    %5187 = vmatprep.subr.mxu0 0.0
    %5188 = vmatpush1.msra.mxu0 0.0
    %5189 = vmatprep.subr.mxu0 0.0
    %5190 = vmatpush1.msra.mxu0 0.0
    %5191 = vmatprep.subr.mxu0 0.0
    %5192 = vmatpush1.msra.mxu0 0.0
    %5193 = vmatprep.subr.mxu0 0.0
    %5194 = vmatpush1.msra.mxu0 0.0
    %5195 = vmatprep.subr.mxu0 0.0
    %5196 = vmatpush1.msra.mxu0 0.0
    %5197 = vmatprep.subr.mxu0 0.0
    %5198 = vmatpush1.msra.mxu0 0.0
    %5199 = vmatprep.subr.mxu0 0.0
    %5200 = vmatpush1.msra.mxu0 0.0
    %5201 = vmatprep.subr.mxu0 0.0
    %5202 = vmatpush1.msra.mxu0 0.0
    %5203 = vmatprep.mubr.f32.mxu0 0.0
    %5204 = vmatmul.mubr.f32.gmra.mrb[0].mxu0 %v5134
    %v5205 = vpop.f32.mrb[0].mxu0
    %v5206 = vadd.f32 0.0, %v5205
    %v5207 = vpop.f32.mrb[0].mxu0
    %5208 = vdwg.mxu0
    %v5209 = vadd.f32 %v5127, %v5206
    %vm5210 = vcmask 73728
    %5211 = vst.msk [vmem:[#allocation4] sm:$0x1] %vm5210, %v5209
    // Predicated region
    $region30: #{forward.1} parent=1 // pred_check
      _
    $region31: #{forward.1} parent=1 // pred_check_branch
      %5213 = sbr.rel (0) target = $region33
    $region32: #{forward.1} parent=1 // pred_region
      %s5215 = ssub.s32 16, 16
      %5216 = vsyncadd [#allocation5], %s5215
      %s5218 = sshll.u32 [#allocation4], 4
      %s5219 = int_to_ptr.vmem [resolvable:$true] %s5218
      %5221 = dma.vmem_to_hbm [thread:$0]  %s5219, 16, %s7, [#allocation5]
    $region33: #{forward.1} parent=1 // pred_fallthru
      _
    // Predicated region
    $region34: #{forward.1} parent=1 // pred_check
      _
    $region35: #{forward.1} parent=1 // pred_check_branch
      %5223 = sbr.rel (0) target = $region37
    $region36: #{forward.1} parent=1 // pred_region
      %5224 = dma.done [#allocation5], 16
    $region37: #{forward.1} parent=1 // pred_fallthru
      _
    %5225 = vsyncpa [#allocation5], 1

</llo_original>
